<compile_context>
chip_gen: v5e
topology: v5e:2x2
jax: 0.10.0
libtpu: 0.0.40
codegen_flags: <defaults>
</compile_context>

<pallas_src>
import numpy as np

import jax
import jax.numpy as jnp
from jax.experimental import pallas as pl
from jax.experimental.pallas import tpu as pltpu

EPS = 1e-5                      # PyTorch BatchNorm2d default eps
MXU_DTYPE = jnp.bfloat16        # MXU operand dtype (accumulation stays f32)
FC1_OUT, FC2_OUT = 500, 196
FC1_PAD, FC2_PAD = 512, 256     # lane-dense padded FC widths
LANES = 128                     # packed W*C lane width at every stage


# ----------------------------- the fused kernel -----------------------------

def _resnet_kernel(x_ref, wb_ref,
                   s1616_ref, s168_ref, s88_ref, s84_ref, s44_ref,
                   p8_ref, pt8_ref, p16_ref, pt16_ref, p32_ref, pt32_ref,
                   bn_ref, avg_ref,
                   fc1w_ref, fc1b_ref, fc2w_ref, fc2b_ref,
                   o_ref):
    f32 = jnp.float32

    def conv3x3(x, k0, s_ref):
        """sum_dh S[dh] @ x @ WB[k0+dh]  (banded 3x3 conv in packed layout)."""
        rows = s_ref.shape[1]
        acc = jnp.zeros((rows, LANES), f32)
        for dh in range(3):
            sel = jnp.dot(s_ref[dh], x, preferred_element_type=f32)      # row select (f32 exact)
            acc = acc + jnp.dot(sel.astype(MXU_DTYPE), wb_ref[k0 + dh],
                                preferred_element_type=f32)
        return acc

    def conv1x1(x, k, s_row):
        sel = jnp.dot(s_row, x, preferred_element_type=f32)
        return jnp.dot(sel.astype(MXU_DTYPE), wb_ref[k],
                       preferred_element_type=f32)

    def bn(y, idx, c, p_ref, pt_ref, count):
        """Training-mode BN (biased var) over (rows, w-groups) per channel."""
        prm = bn_ref[idx]                                   # (2, 32)
        g = prm[0:1, :c]
        b = prm[1:2, :c]
        p = p_ref[...]                                      # (W*C, C)
        pt = pt_ref[...]                                    # (C, W*C)
        inv_n = 1.0 / count
        mean_c = jnp.dot(jnp.sum(y, axis=0, keepdims=True), p,
                         preferred_element_type=f32) * inv_n            # (1, C)
        mean_b = jnp.dot(mean_c, pt, preferred_element_type=f32)        # (1, W*C)
        d = y - mean_b
        var_c = jnp.dot(jnp.sum(d * d, axis=0, keepdims=True), p,
                        preferred_element_type=f32) * inv_n             # (1, C)
        scale_c = g * jax.lax.rsqrt(var_c + EPS)
        shift_c = b - mean_c * scale_c
        return (y * jnp.dot(scale_c, pt, preferred_element_type=f32)
                + jnp.dot(shift_c, pt, preferred_element_type=f32))

    def relu(v):
        return jnp.maximum(v, 0.0)

    x0 = x_ref[...]                                         # (32, 128) f32

    # ---- stem: conv 4->8 + BN + ReLU
    y = relu(bn(conv3x3(x0, 0, s1616_ref), 0, 8, p8_ref, pt8_ref, 512.0))

    # ---- stage1 block (8->8, stride 1, identity shortcut)
    t = relu(bn(conv3x3(y, 3, s1616_ref), 1, 8, p8_ref, pt8_ref, 512.0))
    t = bn(conv3x3(t, 6, s1616_ref), 2, 8, p8_ref, pt8_ref, 512.0)
    y = relu(t + y)                                         # (32, 128)

    # ---- stage2 block (8->16, stride 2, 1x1 shortcut)
    t = relu(bn(conv3x3(y, 9, s168_ref), 3, 16, p16_ref, pt16_ref, 128.0))
    t = bn(conv3x3(t, 12, s88_ref), 4, 16, p16_ref, pt16_ref, 128.0)
    s = bn(conv1x1(y, 21, s168_ref[1]), 5, 16, p16_ref, pt16_ref, 128.0)
    y = relu(t + s)                                         # (16, 128)

    # ---- stage3 block (16->32, stride 2, 1x1 shortcut)
    t = relu(bn(conv3x3(y, 15, s84_ref), 6, 32, p32_ref, pt32_ref, 32.0))
    t = bn(conv3x3(t, 18, s44_ref), 7, 32, p32_ref, pt32_ref, 32.0)
    s = bn(conv1x1(y, 22, s84_ref[1]), 8, 32, p32_ref, pt32_ref, 32.0)
    y = relu(t + s)                                         # (8, 128)

    # ---- head: adaptive avg-pool -> FC1 + ReLU -> FC2 + sigmoid
    pooled = jnp.dot(jnp.dot(avg_ref[...], y, preferred_element_type=f32),
                     p32_ref[...], preferred_element_type=f32) * (1.0 / 16.0)  # (N, 32)
    h = jnp.dot(pooled.astype(MXU_DTYPE), fc1w_ref[...],
                preferred_element_type=f32) + fc1b_ref[...]
    h = relu(h)
    o = jnp.dot(h.astype(MXU_DTYPE), fc2w_ref[...],
                preferred_element_type=f32) + fc2b_ref[...]
    o_ref[...] = jax.nn.sigmoid(o).astype(o_ref.dtype)


# ----------------------------- Pallas wrapper -----------------------------

def _fullspec(shape):
    """Single full-array block (grid=(1,)); full-extent blocks are always legal."""
    nd = len(shape)
    return pl.BlockSpec(shape, lambda i, _nd=nd: (0,) * _nd)


def resnet_forward(x_nchw, c):
    """Whole-network forward: one pallas_call."""
    N, CIN, H, W = x_nchw.shape
    # NCHW -> packed (N*H, W*Cin), lane-padded to 128 (pad matched by zero
    # rows in the stem's banded weight).
    xp = jnp.transpose(x_nchw, (0, 2, 3, 1)).astype(jnp.float32)
    xp = xp.reshape(N * H, W * CIN)
    xp = jnp.pad(xp, ((0, 0), (0, LANES - W * CIN)))

    args = (xp, c["wb"],
            c["s1616"], c["s168"], c["s88"], c["s84"], c["s44"],
            c["p8"], c["pt8"], c["p16"], c["pt16"], c["p32"], c["pt32"],
            c["bn"], c["avg"],
            c["fc1_w"], c["fc1_b"], c["fc2_w"], c["fc2_b"])

    out = pl.pallas_call(
        _resnet_kernel,
        out_shape=jax.ShapeDtypeStruct((N, FC2_PAD), jnp.float32),
        grid=(1,),
        in_specs=[_fullspec(a.shape) for a in args],
        out_specs=_fullspec((N, FC2_PAD)),
        compiler_params=pltpu.CompilerParams(
            dimension_semantics=("arbitrary",)),
    )(*args)
    return out[:, :FC2_OUT]


# ----------------------------- constant builders (numpy, one-time) -----------

def _band_3x3(w_oihw, w_in, w_out, stride):
    """(3, w_in*I, w_out*O) banded matrices folding horizontal taps/stride/pad."""
    w = np.asarray(w_oihw, np.float32)                      # (O, I, 3, 3)
    O, I = w.shape[0], w.shape[1]
    out = np.zeros((3, w_in * I, w_out * O), np.float32)
    for dh in range(3):
        for wo in range(w_out):
            for dw in range(3):
                wi = stride * wo + dw - 1
                if 0 <= wi < w_in:
                    out[dh, wi * I:(wi + 1) * I, wo * O:(wo + 1) * O] = w[:, :, dh, dw].T
    return out


def _band_1x1(w_oihw, w_in, w_out, stride):
    w = np.asarray(w_oihw, np.float32)[:, :, 0, 0]          # (O, I)
    O, I = w.shape
    out = np.zeros((w_in * I, w_out * O), np.float32)
    for wo in range(w_out):
        wi = stride * wo
        out[wi * I:(wi + 1) * I, wo * O:(wo + 1) * O] = w.T
    return out


def _shift_mats(n, h_in, h_out, stride):
    """(3, n*h_out, n*h_in) 0/1 row-selection matrices (vertical taps + pad)."""
    s = np.zeros((3, n * h_out, n * h_in), np.float32)
    for dh in range(3):
        for b in range(n):
            for ho in range(h_out):
                hi = stride * ho + dh - 1
                if 0 <= hi < h_in:
                    s[dh, b * h_out + ho, b * h_in + hi] = 1.0
    return s


def _pool_mats(w, c):
    """P: (w*c, c) per-channel sum over w-groups; PT: channel -> packed bcast."""
    p = np.zeros((w * c, c), np.float32)
    for i in range(w):
        p[i * c:(i + 1) * c, :] = np.eye(c, dtype=np.float32)
    return p, np.ascontiguousarray(p.T)


def build_constants(params):
    """Pack all weights / structural matrices into the fused-kernel operands."""
    b1 = params["stage1"][0]
    b2 = params["stage2"][0]
    b3 = params["stage3"][0]
    assert params["conv_w"].shape == (8, 4, 3, 3), "builder targets (2,4,16,16)/depth=8/base=8"

    N = 2
    # Banded conv weights: index layout
    #   0-2 stem | 3-5 b1.conv1 | 6-8 b1.conv2 | 9-11 b2.conv1 | 12-14 b2.conv2
    #   15-17 b3.conv1 | 18-20 b3.conv2 | 21 b2.shortcut | 22 b3.shortcut
    stem = _band_3x3(params["conv_w"], 16, 16, 1)           # (3, 64, 128)
    stem_p = np.zeros((3, LANES, LANES), np.float32)
    stem_p[:, :stem.shape[1], :] = stem
    wb = [stem_p,
          _band_3x3(b1["conv1_w"], 16, 16, 1),
          _band_3x3(b1["conv2_w"], 16, 16, 1),
          _band_3x3(b2["conv1_w"], 16, 8, 2),
          _band_3x3(b2["conv2_w"], 8, 8, 1),
          _band_3x3(b3["conv1_w"], 8, 4, 2),
          _band_3x3(b3["conv2_w"], 4, 4, 1)]
    wb = np.concatenate(wb, axis=0)                          # (21, 128, 128)
    wsc = np.stack([_band_1x1(b2["sc_w"], 16, 8, 2),
                    _band_1x1(b3["sc_w"], 8, 4, 2)], axis=0)  # (2, 128, 128)
    wb_all = np.concatenate([wb, wsc], axis=0)                # (23, 128, 128)

    # BN gamma/beta, packed: 0 stem | 1,2 b1 | 3,4,5 b2(+sc) | 6,7,8 b3(+sc)
    bn_all = np.zeros((9, 2, 32), np.float32)

    def put(i, g, b):
        g = np.asarray(g, np.float32)
        b = np.asarray(b, np.float32)
        bn_all[i, 0, :g.shape[0]] = g
        bn_all[i, 1, :b.shape[0]] = b

    put(0, params["bn_g"], params["bn_b"])
    put(1, b1["bn1_g"], b1["bn1_b"]);  put(2, b1["bn2_g"], b1["bn2_b"])
    put(3, b2["bn1_g"], b2["bn1_b"]);  put(4, b2["bn2_g"], b2["bn2_b"])
    put(5, b2["sc_g"], b2["sc_b"])
    put(6, b3["bn1_g"], b3["bn1_b"]);  put(7, b3["bn2_g"], b3["bn2_b"])
    put(8, b3["sc_g"], b3["sc_b"])

    # Row-shift matrices (shared across convs with the same H transition).
    s1616 = _shift_mats(N, 16, 16, 1)
    s168 = _shift_mats(N, 16, 8, 2)
    s88 = _shift_mats(N, 8, 8, 1)
    s84 = _shift_mats(N, 8, 4, 2)
    s44 = _shift_mats(N, 4, 4, 1)

    p8, pt8 = _pool_mats(16, 8)
    p16, pt16 = _pool_mats(8, 16)
    p32, pt32 = _pool_mats(4, 32)

    # Per-image row-sum matrix for the adaptive average pool (H3 = 4).
    avg = np.zeros((N, N * 4), np.float32)
    for n in range(N):
        avg[n, n * 4:(n + 1) * 4] = 1.0

    # FC params, padded & transposed for lane-dense matmuls/stores.
    fc1_wp = np.zeros((32, FC1_PAD), np.float32)
    fc1_wp[:, :FC1_OUT] = np.asarray(params["fc1_w"], np.float32).T
    fc1_bp = np.zeros((1, FC1_PAD), np.float32)
    fc1_bp[0, :FC1_OUT] = np.asarray(params["fc1_b"], np.float32)
    fc2_wp = np.zeros((FC1_PAD, FC2_PAD), np.float32)
    fc2_wp[:FC1_OUT, :FC2_OUT] = np.asarray(params["fc2_w"], np.float32).T
    fc2_bp = np.zeros((1, FC2_PAD), np.float32)
    fc2_bp[0, :FC2_OUT] = np.asarray(params["fc2_b"], np.float32)

    return {
        "wb": jnp.asarray(wb_all, MXU_DTYPE),
        "s1616": jnp.asarray(s1616), "s168": jnp.asarray(s168),
        "s88": jnp.asarray(s88), "s84": jnp.asarray(s84), "s44": jnp.asarray(s44),
        "p8": jnp.asarray(p8), "pt8": jnp.asarray(pt8),
        "p16": jnp.asarray(p16), "pt16": jnp.asarray(pt16),
        "p32": jnp.asarray(p32), "pt32": jnp.asarray(pt32),
        "bn": jnp.asarray(bn_all),
        "avg": jnp.asarray(avg),
        "fc1_w": jnp.asarray(fc1_wp, MXU_DTYPE), "fc1_b": jnp.asarray(fc1_bp),
        "fc2_w": jnp.asarray(fc2_wp, MXU_DTYPE), "fc2_b": jnp.asarray(fc2_bp),
    }


# ----------------------------- Parameters (torch-matching init) --------------

def conv_init(key, o, i, kh, kw):
    # kaiming_normal_(mode='fan_out'): std = sqrt(2 / (O * kh * kw))
    std = (2.0 / (o * kh * kw)) ** 0.5
    return std * jax.random.normal(key, (o, i, kh, kw), jnp.float32)


def linear_init(key, out_f, in_f):
    bound = 1.0 / (in_f ** 0.5)
    w = jax.random.uniform(key, (out_f, in_f), jnp.float32, -bound, bound)
    b = jnp.zeros((out_f,), jnp.float32)   # initialize_weights zeros Linear bias
    return w, b


def make_block_params(key, in_c, out_c, stride):
    k1, k2, k3 = jax.random.split(key, 3)
    p = {
        "stride": stride,
        "conv1_w": conv_init(k1, out_c, in_c, 3, 3),
        "bn1_g": jnp.ones((out_c,), jnp.float32), "bn1_b": jnp.zeros((out_c,), jnp.float32),
        "conv2_w": conv_init(k2, out_c, out_c, 3, 3),
        "bn2_g": jnp.ones((out_c,), jnp.float32), "bn2_b": jnp.zeros((out_c,), jnp.float32),
    }
    if in_c != out_c:
        p["sc_w"] = conv_init(k3, out_c, in_c, 1, 1)
        p["sc_g"] = jnp.ones((out_c,), jnp.float32)
        p["sc_b"] = jnp.zeros((out_c,), jnp.float32)
    return p


def init_params(key, input_shape=(2, 4, 16, 16), depth=8, base_channels=8):
    n_blocks = (depth - 2) // 6
    assert n_blocks * 6 + 2 == depth
    n_channels = [base_channels, base_channels * 2, base_channels * 4]
    keys = iter(jax.random.split(key, 16))
    params = {
        "conv_w": conv_init(next(keys), n_channels[0], input_shape[1], 3, 3),
        "bn_g": jnp.ones((n_channels[0],), jnp.float32),
        "bn_b": jnp.zeros((n_channels[0],), jnp.float32),
    }

    def make_stage(in_c, out_c, stride):
        blocks = []
        for idx in range(n_blocks):
            if idx == 0:
                blocks.append(make_block_params(next(keys), in_c, out_c, stride))
            else:
                blocks.append(make_block_params(next(keys), out_c, out_c, 1))
        return blocks

    params["stage1"] = make_stage(n_channels[0], n_channels[0], 1)
    params["stage2"] = make_stage(n_channels[0], n_channels[1], 2)
    params["stage3"] = make_stage(n_channels[1], n_channels[2], 2)

    feature_size = n_channels[2]  # after adaptive_avg_pool2d(output_size=1)
    params["fc1_w"], params["fc1_b"] = linear_init(next(keys), FC1_OUT, feature_size)
    params["fc2_w"], params["fc2_b"] = linear_init(next(keys), FC2_OUT, FC1_OUT)
    return params


# ----------------------------- Main -----------------------------

if __name__ == "__main__":
    key = jax.random.PRNGKey(0)
    k_param, k_x = jax.random.split(key)

    input_shape = (2, 4, 16, 16)   # (N, C, H, W)
    depth = 8                      # (8-2)//6 = 1 BasicBlock per stage
    base_channels = 8

    params = init_params(k_param, input_shape, depth, base_channels)
    consts = build_constants(params)          # one-time numpy packing (jit constants)
    x = jax.random.normal(k_x, input_shape, jnp.float32)

    fwd = jax.jit(lambda inp: resnet_forward(inp, consts))
    out = jax.block_until_ready(fwd(x))

    assert out.shape == (input_shape[0], FC2_OUT), out.shape
    assert bool(jnp.all(jnp.isfinite(out)))
    assert bool(jnp.all((out >= 0.0) & (out <= 1.0)))  # sigmoid range
    print("KERNEL_OK")
</pallas_src>

<mosaic_0001>
module attributes {stable_mosaic.version = 11 : i64} {
  func.func @_resnet_kernel(%arg0: i32, %arg1: memref<32x128xf32, #tpu.memory_space<vmem>>, %arg2: memref<23x128x128xbf16, #tpu.memory_space<vmem>>, %arg3: memref<3x32x32xf32, #tpu.memory_space<vmem>>, %arg4: memref<3x16x32xf32, #tpu.memory_space<vmem>>, %arg5: memref<3x16x16xf32, #tpu.memory_space<vmem>>, %arg6: memref<3x8x16xf32, #tpu.memory_space<vmem>>, %arg7: memref<3x8x8xf32, #tpu.memory_space<vmem>>, %arg8: memref<128x8xf32, #tpu.memory_space<vmem>>, %arg9: memref<8x128xf32, #tpu.memory_space<vmem>>, %arg10: memref<128x16xf32, #tpu.memory_space<vmem>>, %arg11: memref<16x128xf32, #tpu.memory_space<vmem>>, %arg12: memref<128x32xf32, #tpu.memory_space<vmem>>, %arg13: memref<32x128xf32, #tpu.memory_space<vmem>>, %arg14: memref<9x2x32xf32, #tpu.memory_space<vmem>>, %arg15: memref<2x8xf32, #tpu.memory_space<vmem>>, %arg16: memref<32x512xbf16, #tpu.memory_space<vmem>>, %arg17: memref<1x512xf32, #tpu.memory_space<vmem>>, %arg18: memref<512x256xbf16, #tpu.memory_space<vmem>>, %arg19: memref<1x256xf32, #tpu.memory_space<vmem>>, %arg20: memref<2x256xf32, #tpu.memory_space<vmem>>) attributes {dimension_semantics = [#tpu.dimension_semantics<arbitrary>], iteration_bounds = array<i64: 1>, scalar_prefetch = 0 : i64, scratch_operands = 0 : i64, tpu.core_type = #tpu.core_type<tc>, window_params = [{pipeline_mode = #tpu.pipeline_mode<synchronous>, transform_indices = @transform_0, window_bounds = array<i64: 32, 128>}, {pipeline_mode = #tpu.pipeline_mode<synchronous>, transform_indices = @transform_1, window_bounds = array<i64: 23, 128, 128>}, {pipeline_mode = #tpu.pipeline_mode<synchronous>, transform_indices = @transform_2, window_bounds = array<i64: 3, 32, 32>}, {pipeline_mode = #tpu.pipeline_mode<synchronous>, transform_indices = @transform_3, window_bounds = array<i64: 3, 16, 32>}, {pipeline_mode = #tpu.pipeline_mode<synchronous>, transform_indices = @transform_4, window_bounds = array<i64: 3, 16, 16>}, {pipeline_mode = #tpu.pipeline_mode<synchronous>, transform_indices = @transform_5, window_bounds = array<i64: 3, 8, 16>}, {pipeline_mode = #tpu.pipeline_mode<synchronous>, transform_indices = @transform_6, window_bounds = array<i64: 3, 8, 8>}, {pipeline_mode = #tpu.pipeline_mode<synchronous>, transform_indices = @transform_7, window_bounds = array<i64: 128, 8>}, {pipeline_mode = #tpu.pipeline_mode<synchronous>, transform_indices = @transform_8, window_bounds = array<i64: 8, 128>}, {pipeline_mode = #tpu.pipeline_mode<synchronous>, transform_indices = @transform_9, window_bounds = array<i64: 128, 16>}, {pipeline_mode = #tpu.pipeline_mode<synchronous>, transform_indices = @transform_10, window_bounds = array<i64: 16, 128>}, {pipeline_mode = #tpu.pipeline_mode<synchronous>, transform_indices = @transform_11, window_bounds = array<i64: 128, 32>}, {pipeline_mode = #tpu.pipeline_mode<synchronous>, transform_indices = @transform_12, window_bounds = array<i64: 32, 128>}, {pipeline_mode = #tpu.pipeline_mode<synchronous>, transform_indices = @transform_13, window_bounds = array<i64: 9, 2, 32>}, {pipeline_mode = #tpu.pipeline_mode<synchronous>, transform_indices = @transform_14, window_bounds = array<i64: 2, 8>}, {pipeline_mode = #tpu.pipeline_mode<synchronous>, transform_indices = @transform_15, window_bounds = array<i64: 32, 512>}, {pipeline_mode = #tpu.pipeline_mode<synchronous>, transform_indices = @transform_16, window_bounds = array<i64: 1, 512>}, {pipeline_mode = #tpu.pipeline_mode<synchronous>, transform_indices = @transform_17, window_bounds = array<i64: 512, 256>}, {pipeline_mode = #tpu.pipeline_mode<synchronous>, transform_indices = @transform_18, window_bounds = array<i64: 1, 256>}, {pipeline_mode = #tpu.pipeline_mode<synchronous>, transform_indices = @transform_19, window_bounds = array<i64: 2, 256>}]} {
    %c0 = arith.constant 0 : index
    %c0_0 = arith.constant 0 : index
    %0 = vector.load %arg1[%c0, %c0_0] : memref<32x128xf32, #tpu.memory_space<vmem>>, vector<32x128xf32>
    %cst = arith.constant 0.000000e+00 : f32
    %1 = vector.broadcast %cst : f32 to vector<32x128xf32>
    %c0_1 = arith.constant 0 : index
    %c0_2 = arith.constant 0 : index
    %c0_3 = arith.constant 0 : index
    %2 = vector.load %arg3[%c0_1, %c0_2, %c0_3] : memref<3x32x32xf32, #tpu.memory_space<vmem>>, vector<1x32x32xf32>
    %3 = vector.shape_cast %2 : vector<1x32x32xf32> to vector<32x32xf32>
    %cst_4 = arith.constant dense<0.000000e+00> : vector<32x128xf32>
    %4 = tpu.matmul %3, %0, %cst_4 {dimension_numbers = #tpu.dot_dimension_numbers<[1], [0], [0], [1], [0, 0, 1, 1], [], []>} : vector<32x32xf32>, vector<32x128xf32>, vector<32x128xf32> -> vector<32x128xf32>
    %5 = arith.truncf %4 : vector<32x128xf32> to vector<32x128xbf16>
    %c0_5 = arith.constant 0 : index
    %c0_6 = arith.constant 0 : index
    %c0_7 = arith.constant 0 : index
    %6 = vector.load %arg2[%c0_5, %c0_6, %c0_7] : memref<23x128x128xbf16, #tpu.memory_space<vmem>>, vector<1x128x128xbf16>
    %7 = vector.shape_cast %6 : vector<1x128x128xbf16> to vector<128x128xbf16>
    %cst_8 = arith.constant dense<0.000000e+00> : vector<32x128xf32>
    %8 = tpu.matmul %5, %7, %cst_8 {dimension_numbers = #tpu.dot_dimension_numbers<[1], [0], [0], [1], [0, 0, 1, 1], [], []>} : vector<32x128xbf16>, vector<128x128xbf16>, vector<32x128xf32> -> vector<32x128xf32>
    %9 = arith.addf %1, %8 : vector<32x128xf32>
    %c1 = arith.constant 1 : index
    %c0_9 = arith.constant 0 : index
    %c0_10 = arith.constant 0 : index
    %10 = vector.load %arg3[%c1, %c0_9, %c0_10] : memref<3x32x32xf32, #tpu.memory_space<vmem>>, vector<1x32x32xf32>
    %11 = vector.shape_cast %10 : vector<1x32x32xf32> to vector<32x32xf32>
    %cst_11 = arith.constant dense<0.000000e+00> : vector<32x128xf32>
    %12 = tpu.matmul %11, %0, %cst_11 {dimension_numbers = #tpu.dot_dimension_numbers<[1], [0], [0], [1], [0, 0, 1, 1], [], []>} : vector<32x32xf32>, vector<32x128xf32>, vector<32x128xf32> -> vector<32x128xf32>
    %13 = arith.truncf %12 : vector<32x128xf32> to vector<32x128xbf16>
    %c1_12 = arith.constant 1 : index
    %c0_13 = arith.constant 0 : index
    %c0_14 = arith.constant 0 : index
    %14 = vector.load %arg2[%c1_12, %c0_13, %c0_14] : memref<23x128x128xbf16, #tpu.memory_space<vmem>>, vector<1x128x128xbf16>
    %15 = vector.shape_cast %14 : vector<1x128x128xbf16> to vector<128x128xbf16>
    %cst_15 = arith.constant dense<0.000000e+00> : vector<32x128xf32>
    %16 = tpu.matmul %13, %15, %cst_15 {dimension_numbers = #tpu.dot_dimension_numbers<[1], [0], [0], [1], [0, 0, 1, 1], [], []>} : vector<32x128xbf16>, vector<128x128xbf16>, vector<32x128xf32> -> vector<32x128xf32>
    %17 = arith.addf %9, %16 : vector<32x128xf32>
    %c2 = arith.constant 2 : index
    %c0_16 = arith.constant 0 : index
    %c0_17 = arith.constant 0 : index
    %18 = vector.load %arg3[%c2, %c0_16, %c0_17] : memref<3x32x32xf32, #tpu.memory_space<vmem>>, vector<1x32x32xf32>
    %19 = vector.shape_cast %18 : vector<1x32x32xf32> to vector<32x32xf32>
    %cst_18 = arith.constant dense<0.000000e+00> : vector<32x128xf32>
    %20 = tpu.matmul %19, %0, %cst_18 {dimension_numbers = #tpu.dot_dimension_numbers<[1], [0], [0], [1], [0, 0, 1, 1], [], []>} : vector<32x32xf32>, vector<32x128xf32>, vector<32x128xf32> -> vector<32x128xf32>
    %21 = arith.truncf %20 : vector<32x128xf32> to vector<32x128xbf16>
    %c2_19 = arith.constant 2 : index
    %c0_20 = arith.constant 0 : index
    %c0_21 = arith.constant 0 : index
    %22 = vector.load %arg2[%c2_19, %c0_20, %c0_21] : memref<23x128x128xbf16, #tpu.memory_space<vmem>>, vector<1x128x128xbf16>
    %23 = vector.shape_cast %22 : vector<1x128x128xbf16> to vector<128x128xbf16>
    %cst_22 = arith.constant dense<0.000000e+00> : vector<32x128xf32>
    %24 = tpu.matmul %21, %23, %cst_22 {dimension_numbers = #tpu.dot_dimension_numbers<[1], [0], [0], [1], [0, 0, 1, 1], [], []>} : vector<32x128xbf16>, vector<128x128xbf16>, vector<32x128xf32> -> vector<32x128xf32>
    %25 = arith.addf %17, %24 : vector<32x128xf32>
    %c0_23 = arith.constant 0 : index
    %c0_24 = arith.constant 0 : index
    %c0_25 = arith.constant 0 : index
    %26 = vector.load %arg14[%c0_23, %c0_24, %c0_25] : memref<9x2x32xf32, #tpu.memory_space<vmem>>, vector<1x2x32xf32>
    %27 = vector.shape_cast %26 : vector<1x2x32xf32> to vector<2x32xf32>
    %28 = vector.extract_strided_slice %27 {offsets = [0, 0], sizes = [1, 8], strides = [1, 1]} : vector<2x32xf32> to vector<1x8xf32>
    %29 = vector.extract_strided_slice %27 {offsets = [1, 0], sizes = [1, 8], strides = [1, 1]} : vector<2x32xf32> to vector<1x8xf32>
    %c0_26 = arith.constant 0 : index
    %c0_27 = arith.constant 0 : index
    %30 = vector.load %arg8[%c0_26, %c0_27] : memref<128x8xf32, #tpu.memory_space<vmem>>, vector<128x8xf32>
    %c0_28 = arith.constant 0 : index
    %c0_29 = arith.constant 0 : index
    %31 = vector.load %arg9[%c0_28, %c0_29] : memref<8x128xf32, #tpu.memory_space<vmem>>, vector<8x128xf32>
    %cst_30 = arith.constant dense<0.000000e+00> : vector<128xf32>
    %32 = vector.multi_reduction <add>, %25, %cst_30 [0] : vector<32x128xf32> to vector<128xf32>
    %33 = vector.shape_cast %32 : vector<128xf32> to vector<1x128xf32>
    %cst_31 = arith.constant dense<0.000000e+00> : vector<1x8xf32>
    %34 = tpu.matmul %33, %30, %cst_31 {dimension_numbers = #tpu.dot_dimension_numbers<[1], [0], [0], [1], [0, 0, 1, 1], [], []>} : vector<1x128xf32>, vector<128x8xf32>, vector<1x8xf32> -> vector<1x8xf32>
    %cst_32 = arith.constant 0.001953125 : f32
    %35 = vector.broadcast %cst_32 : f32 to vector<1x8xf32>
    %36 = arith.mulf %34, %35 : vector<1x8xf32>
    %cst_33 = arith.constant dense<0.000000e+00> : vector<1x128xf32>
    %37 = tpu.matmul %36, %31, %cst_33 {dimension_numbers = #tpu.dot_dimension_numbers<[1], [0], [0], [1], [0, 0, 1, 1], [], []>} : vector<1x8xf32>, vector<8x128xf32>, vector<1x128xf32> -> vector<1x128xf32>
    %38 = vector.broadcast %37 : vector<1x128xf32> to vector<32x128xf32>
    %39 = arith.subf %25, %38 : vector<32x128xf32>
    %40 = arith.mulf %39, %39 : vector<32x128xf32>
    %cst_34 = arith.constant dense<0.000000e+00> : vector<128xf32>
    %41 = vector.multi_reduction <add>, %40, %cst_34 [0] : vector<32x128xf32> to vector<128xf32>
    %42 = vector.shape_cast %41 : vector<128xf32> to vector<1x128xf32>
    %cst_35 = arith.constant dense<0.000000e+00> : vector<1x8xf32>
    %43 = tpu.matmul %42, %30, %cst_35 {dimension_numbers = #tpu.dot_dimension_numbers<[1], [0], [0], [1], [0, 0, 1, 1], [], []>} : vector<1x128xf32>, vector<128x8xf32>, vector<1x8xf32> -> vector<1x8xf32>
    %cst_36 = arith.constant 0.001953125 : f32
    %44 = vector.broadcast %cst_36 : f32 to vector<1x8xf32>
    %45 = arith.mulf %43, %44 : vector<1x8xf32>
    %cst_37 = arith.constant 9.99999974E-6 : f32
    %46 = vector.broadcast %cst_37 : f32 to vector<1x8xf32>
    %47 = arith.addf %45, %46 : vector<1x8xf32>
    %48 = math.rsqrt %47 : vector<1x8xf32>
    %49 = arith.mulf %28, %48 : vector<1x8xf32>
    %50 = arith.mulf %36, %49 : vector<1x8xf32>
    %51 = arith.subf %29, %50 : vector<1x8xf32>
    %cst_38 = arith.constant dense<0.000000e+00> : vector<1x128xf32>
    %52 = tpu.matmul %49, %31, %cst_38 {dimension_numbers = #tpu.dot_dimension_numbers<[1], [0], [0], [1], [0, 0, 1, 1], [], []>} : vector<1x8xf32>, vector<8x128xf32>, vector<1x128xf32> -> vector<1x128xf32>
    %53 = vector.broadcast %52 : vector<1x128xf32> to vector<32x128xf32>
    %54 = arith.mulf %25, %53 : vector<32x128xf32>
    %cst_39 = arith.constant dense<0.000000e+00> : vector<1x128xf32>
    %55 = tpu.matmul %51, %31, %cst_39 {dimension_numbers = #tpu.dot_dimension_numbers<[1], [0], [0], [1], [0, 0, 1, 1], [], []>} : vector<1x8xf32>, vector<8x128xf32>, vector<1x128xf32> -> vector<1x128xf32>
    %56 = vector.broadcast %55 : vector<1x128xf32> to vector<32x128xf32>
    %57 = arith.addf %54, %56 : vector<32x128xf32>
    %cst_40 = arith.constant 0.000000e+00 : f32
    %58 = vector.broadcast %cst_40 : f32 to vector<32x128xf32>
    %59 = arith.maximumf %57, %58 : vector<32x128xf32>
    %cst_41 = arith.constant 0.000000e+00 : f32
    %60 = vector.broadcast %cst_41 : f32 to vector<32x128xf32>
    %c0_42 = arith.constant 0 : index
    %c0_43 = arith.constant 0 : index
    %c0_44 = arith.constant 0 : index
    %61 = vector.load %arg3[%c0_42, %c0_43, %c0_44] : memref<3x32x32xf32, #tpu.memory_space<vmem>>, vector<1x32x32xf32>
    %62 = vector.shape_cast %61 : vector<1x32x32xf32> to vector<32x32xf32>
    %cst_45 = arith.constant dense<0.000000e+00> : vector<32x128xf32>
    %63 = tpu.matmul %62, %59, %cst_45 {dimension_numbers = #tpu.dot_dimension_numbers<[1], [0], [0], [1], [0, 0, 1, 1], [], []>} : vector<32x32xf32>, vector<32x128xf32>, vector<32x128xf32> -> vector<32x128xf32>
    %64 = arith.truncf %63 : vector<32x128xf32> to vector<32x128xbf16>
    %c3 = arith.constant 3 : index
    %c0_46 = arith.constant 0 : index
    %c0_47 = arith.constant 0 : index
    %65 = vector.load %arg2[%c3, %c0_46, %c0_47] : memref<23x128x128xbf16, #tpu.memory_space<vmem>>, vector<1x128x128xbf16>
    %66 = vector.shape_cast %65 : vector<1x128x128xbf16> to vector<128x128xbf16>
    %cst_48 = arith.constant dense<0.000000e+00> : vector<32x128xf32>
    %67 = tpu.matmul %64, %66, %cst_48 {dimension_numbers = #tpu.dot_dimension_numbers<[1], [0], [0], [1], [0, 0, 1, 1], [], []>} : vector<32x128xbf16>, vector<128x128xbf16>, vector<32x128xf32> -> vector<32x128xf32>
    %68 = arith.addf %60, %67 : vector<32x128xf32>
    %c1_49 = arith.constant 1 : index
    %c0_50 = arith.constant 0 : index
    %c0_51 = arith.constant 0 : index
    %69 = vector.load %arg3[%c1_49, %c0_50, %c0_51] : memref<3x32x32xf32, #tpu.memory_space<vmem>>, vector<1x32x32xf32>
    %70 = vector.shape_cast %69 : vector<1x32x32xf32> to vector<32x32xf32>
    %cst_52 = arith.constant dense<0.000000e+00> : vector<32x128xf32>
    %71 = tpu.matmul %70, %59, %cst_52 {dimension_numbers = #tpu.dot_dimension_numbers<[1], [0], [0], [1], [0, 0, 1, 1], [], []>} : vector<32x32xf32>, vector<32x128xf32>, vector<32x128xf32> -> vector<32x128xf32>
    %72 = arith.truncf %71 : vector<32x128xf32> to vector<32x128xbf16>
    %c4 = arith.constant 4 : index
    %c0_53 = arith.constant 0 : index
    %c0_54 = arith.constant 0 : index
    %73 = vector.load %arg2[%c4, %c0_53, %c0_54] : memref<23x128x128xbf16, #tpu.memory_space<vmem>>, vector<1x128x128xbf16>
    %74 = vector.shape_cast %73 : vector<1x128x128xbf16> to vector<128x128xbf16>
    %cst_55 = arith.constant dense<0.000000e+00> : vector<32x128xf32>
    %75 = tpu.matmul %72, %74, %cst_55 {dimension_numbers = #tpu.dot_dimension_numbers<[1], [0], [0], [1], [0, 0, 1, 1], [], []>} : vector<32x128xbf16>, vector<128x128xbf16>, vector<32x128xf32> -> vector<32x128xf32>
    %76 = arith.addf %68, %75 : vector<32x128xf32>
    %c2_56 = arith.constant 2 : index
    %c0_57 = arith.constant 0 : index
    %c0_58 = arith.constant 0 : index
    %77 = vector.load %arg3[%c2_56, %c0_57, %c0_58] : memref<3x32x32xf32, #tpu.memory_space<vmem>>, vector<1x32x32xf32>
    %78 = vector.shape_cast %77 : vector<1x32x32xf32> to vector<32x32xf32>
    %cst_59 = arith.constant dense<0.000000e+00> : vector<32x128xf32>
    %79 = tpu.matmul %78, %59, %cst_59 {dimension_numbers = #tpu.dot_dimension_numbers<[1], [0], [0], [1], [0, 0, 1, 1], [], []>} : vector<32x32xf32>, vector<32x128xf32>, vector<32x128xf32> -> vector<32x128xf32>
    %80 = arith.truncf %79 : vector<32x128xf32> to vector<32x128xbf16>
    %c5 = arith.constant 5 : index
    %c0_60 = arith.constant 0 : index
    %c0_61 = arith.constant 0 : index
    %81 = vector.load %arg2[%c5, %c0_60, %c0_61] : memref<23x128x128xbf16, #tpu.memory_space<vmem>>, vector<1x128x128xbf16>
    %82 = vector.shape_cast %81 : vector<1x128x128xbf16> to vector<128x128xbf16>
    %cst_62 = arith.constant dense<0.000000e+00> : vector<32x128xf32>
    %83 = tpu.matmul %80, %82, %cst_62 {dimension_numbers = #tpu.dot_dimension_numbers<[1], [0], [0], [1], [0, 0, 1, 1], [], []>} : vector<32x128xbf16>, vector<128x128xbf16>, vector<32x128xf32> -> vector<32x128xf32>
    %84 = arith.addf %76, %83 : vector<32x128xf32>
    %c1_63 = arith.constant 1 : index
    %c0_64 = arith.constant 0 : index
    %c0_65 = arith.constant 0 : index
    %85 = vector.load %arg14[%c1_63, %c0_64, %c0_65] : memref<9x2x32xf32, #tpu.memory_space<vmem>>, vector<1x2x32xf32>
    %86 = vector.shape_cast %85 : vector<1x2x32xf32> to vector<2x32xf32>
    %87 = vector.extract_strided_slice %86 {offsets = [0, 0], sizes = [1, 8], strides = [1, 1]} : vector<2x32xf32> to vector<1x8xf32>
    %88 = vector.extract_strided_slice %86 {offsets = [1, 0], sizes = [1, 8], strides = [1, 1]} : vector<2x32xf32> to vector<1x8xf32>
    %c0_66 = arith.constant 0 : index
    %c0_67 = arith.constant 0 : index
    %89 = vector.load %arg8[%c0_66, %c0_67] : memref<128x8xf32, #tpu.memory_space<vmem>>, vector<128x8xf32>
    %c0_68 = arith.constant 0 : index
    %c0_69 = arith.constant 0 : index
    %90 = vector.load %arg9[%c0_68, %c0_69] : memref<8x128xf32, #tpu.memory_space<vmem>>, vector<8x128xf32>
    %cst_70 = arith.constant dense<0.000000e+00> : vector<128xf32>
    %91 = vector.multi_reduction <add>, %84, %cst_70 [0] : vector<32x128xf32> to vector<128xf32>
    %92 = vector.shape_cast %91 : vector<128xf32> to vector<1x128xf32>
    %cst_71 = arith.constant dense<0.000000e+00> : vector<1x8xf32>
    %93 = tpu.matmul %92, %89, %cst_71 {dimension_numbers = #tpu.dot_dimension_numbers<[1], [0], [0], [1], [0, 0, 1, 1], [], []>} : vector<1x128xf32>, vector<128x8xf32>, vector<1x8xf32> -> vector<1x8xf32>
    %cst_72 = arith.constant 0.001953125 : f32
    %94 = vector.broadcast %cst_72 : f32 to vector<1x8xf32>
    %95 = arith.mulf %93, %94 : vector<1x8xf32>
    %cst_73 = arith.constant dense<0.000000e+00> : vector<1x128xf32>
    %96 = tpu.matmul %95, %90, %cst_73 {dimension_numbers = #tpu.dot_dimension_numbers<[1], [0], [0], [1], [0, 0, 1, 1], [], []>} : vector<1x8xf32>, vector<8x128xf32>, vector<1x128xf32> -> vector<1x128xf32>
    %97 = vector.broadcast %96 : vector<1x128xf32> to vector<32x128xf32>
    %98 = arith.subf %84, %97 : vector<32x128xf32>
    %99 = arith.mulf %98, %98 : vector<32x128xf32>
    %cst_74 = arith.constant dense<0.000000e+00> : vector<128xf32>
    %100 = vector.multi_reduction <add>, %99, %cst_74 [0] : vector<32x128xf32> to vector<128xf32>
    %101 = vector.shape_cast %100 : vector<128xf32> to vector<1x128xf32>
    %cst_75 = arith.constant dense<0.000000e+00> : vector<1x8xf32>
    %102 = tpu.matmul %101, %89, %cst_75 {dimension_numbers = #tpu.dot_dimension_numbers<[1], [0], [0], [1], [0, 0, 1, 1], [], []>} : vector<1x128xf32>, vector<128x8xf32>, vector<1x8xf32> -> vector<1x8xf32>
    %cst_76 = arith.constant 0.001953125 : f32
    %103 = vector.broadcast %cst_76 : f32 to vector<1x8xf32>
    %104 = arith.mulf %102, %103 : vector<1x8xf32>
    %cst_77 = arith.constant 9.99999974E-6 : f32
    %105 = vector.broadcast %cst_77 : f32 to vector<1x8xf32>
    %106 = arith.addf %104, %105 : vector<1x8xf32>
    %107 = math.rsqrt %106 : vector<1x8xf32>
    %108 = arith.mulf %87, %107 : vector<1x8xf32>
    %109 = arith.mulf %95, %108 : vector<1x8xf32>
    %110 = arith.subf %88, %109 : vector<1x8xf32>
    %cst_78 = arith.constant dense<0.000000e+00> : vector<1x128xf32>
    %111 = tpu.matmul %108, %90, %cst_78 {dimension_numbers = #tpu.dot_dimension_numbers<[1], [0], [0], [1], [0, 0, 1, 1], [], []>} : vector<1x8xf32>, vector<8x128xf32>, vector<1x128xf32> -> vector<1x128xf32>
    %112 = vector.broadcast %111 : vector<1x128xf32> to vector<32x128xf32>
    %113 = arith.mulf %84, %112 : vector<32x128xf32>
    %cst_79 = arith.constant dense<0.000000e+00> : vector<1x128xf32>
    %114 = tpu.matmul %110, %90, %cst_79 {dimension_numbers = #tpu.dot_dimension_numbers<[1], [0], [0], [1], [0, 0, 1, 1], [], []>} : vector<1x8xf32>, vector<8x128xf32>, vector<1x128xf32> -> vector<1x128xf32>
    %115 = vector.broadcast %114 : vector<1x128xf32> to vector<32x128xf32>
    %116 = arith.addf %113, %115 : vector<32x128xf32>
    %cst_80 = arith.constant 0.000000e+00 : f32
    %117 = vector.broadcast %cst_80 : f32 to vector<32x128xf32>
    %118 = arith.maximumf %116, %117 : vector<32x128xf32>
    %cst_81 = arith.constant 0.000000e+00 : f32
    %119 = vector.broadcast %cst_81 : f32 to vector<32x128xf32>
    %c0_82 = arith.constant 0 : index
    %c0_83 = arith.constant 0 : index
    %c0_84 = arith.constant 0 : index
    %120 = vector.load %arg3[%c0_82, %c0_83, %c0_84] : memref<3x32x32xf32, #tpu.memory_space<vmem>>, vector<1x32x32xf32>
    %121 = vector.shape_cast %120 : vector<1x32x32xf32> to vector<32x32xf32>
    %cst_85 = arith.constant dense<0.000000e+00> : vector<32x128xf32>
    %122 = tpu.matmul %121, %118, %cst_85 {dimension_numbers = #tpu.dot_dimension_numbers<[1], [0], [0], [1], [0, 0, 1, 1], [], []>} : vector<32x32xf32>, vector<32x128xf32>, vector<32x128xf32> -> vector<32x128xf32>
    %123 = arith.truncf %122 : vector<32x128xf32> to vector<32x128xbf16>
    %c6 = arith.constant 6 : index
    %c0_86 = arith.constant 0 : index
    %c0_87 = arith.constant 0 : index
    %124 = vector.load %arg2[%c6, %c0_86, %c0_87] : memref<23x128x128xbf16, #tpu.memory_space<vmem>>, vector<1x128x128xbf16>
    %125 = vector.shape_cast %124 : vector<1x128x128xbf16> to vector<128x128xbf16>
    %cst_88 = arith.constant dense<0.000000e+00> : vector<32x128xf32>
    %126 = tpu.matmul %123, %125, %cst_88 {dimension_numbers = #tpu.dot_dimension_numbers<[1], [0], [0], [1], [0, 0, 1, 1], [], []>} : vector<32x128xbf16>, vector<128x128xbf16>, vector<32x128xf32> -> vector<32x128xf32>
    %127 = arith.addf %119, %126 : vector<32x128xf32>
    %c1_89 = arith.constant 1 : index
    %c0_90 = arith.constant 0 : index
    %c0_91 = arith.constant 0 : index
    %128 = vector.load %arg3[%c1_89, %c0_90, %c0_91] : memref<3x32x32xf32, #tpu.memory_space<vmem>>, vector<1x32x32xf32>
    %129 = vector.shape_cast %128 : vector<1x32x32xf32> to vector<32x32xf32>
    %cst_92 = arith.constant dense<0.000000e+00> : vector<32x128xf32>
    %130 = tpu.matmul %129, %118, %cst_92 {dimension_numbers = #tpu.dot_dimension_numbers<[1], [0], [0], [1], [0, 0, 1, 1], [], []>} : vector<32x32xf32>, vector<32x128xf32>, vector<32x128xf32> -> vector<32x128xf32>
    %131 = arith.truncf %130 : vector<32x128xf32> to vector<32x128xbf16>
    %c7 = arith.constant 7 : index
    %c0_93 = arith.constant 0 : index
    %c0_94 = arith.constant 0 : index
    %132 = vector.load %arg2[%c7, %c0_93, %c0_94] : memref<23x128x128xbf16, #tpu.memory_space<vmem>>, vector<1x128x128xbf16>
    %133 = vector.shape_cast %132 : vector<1x128x128xbf16> to vector<128x128xbf16>
    %cst_95 = arith.constant dense<0.000000e+00> : vector<32x128xf32>
    %134 = tpu.matmul %131, %133, %cst_95 {dimension_numbers = #tpu.dot_dimension_numbers<[1], [0], [0], [1], [0, 0, 1, 1], [], []>} : vector<32x128xbf16>, vector<128x128xbf16>, vector<32x128xf32> -> vector<32x128xf32>
    %135 = arith.addf %127, %134 : vector<32x128xf32>
    %c2_96 = arith.constant 2 : index
    %c0_97 = arith.constant 0 : index
    %c0_98 = arith.constant 0 : index
    %136 = vector.load %arg3[%c2_96, %c0_97, %c0_98] : memref<3x32x32xf32, #tpu.memory_space<vmem>>, vector<1x32x32xf32>
    %137 = vector.shape_cast %136 : vector<1x32x32xf32> to vector<32x32xf32>
    %cst_99 = arith.constant dense<0.000000e+00> : vector<32x128xf32>
    %138 = tpu.matmul %137, %118, %cst_99 {dimension_numbers = #tpu.dot_dimension_numbers<[1], [0], [0], [1], [0, 0, 1, 1], [], []>} : vector<32x32xf32>, vector<32x128xf32>, vector<32x128xf32> -> vector<32x128xf32>
    %139 = arith.truncf %138 : vector<32x128xf32> to vector<32x128xbf16>
    %c8 = arith.constant 8 : index
    %c0_100 = arith.constant 0 : index
    %c0_101 = arith.constant 0 : index
    %140 = vector.load %arg2[%c8, %c0_100, %c0_101] : memref<23x128x128xbf16, #tpu.memory_space<vmem>>, vector<1x128x128xbf16>
    %141 = vector.shape_cast %140 : vector<1x128x128xbf16> to vector<128x128xbf16>
    %cst_102 = arith.constant dense<0.000000e+00> : vector<32x128xf32>
    %142 = tpu.matmul %139, %141, %cst_102 {dimension_numbers = #tpu.dot_dimension_numbers<[1], [0], [0], [1], [0, 0, 1, 1], [], []>} : vector<32x128xbf16>, vector<128x128xbf16>, vector<32x128xf32> -> vector<32x128xf32>
    %143 = arith.addf %135, %142 : vector<32x128xf32>
    %c2_103 = arith.constant 2 : index
    %c0_104 = arith.constant 0 : index
    %c0_105 = arith.constant 0 : index
    %144 = vector.load %arg14[%c2_103, %c0_104, %c0_105] : memref<9x2x32xf32, #tpu.memory_space<vmem>>, vector<1x2x32xf32>
    %145 = vector.shape_cast %144 : vector<1x2x32xf32> to vector<2x32xf32>
    %146 = vector.extract_strided_slice %145 {offsets = [0, 0], sizes = [1, 8], strides = [1, 1]} : vector<2x32xf32> to vector<1x8xf32>
    %147 = vector.extract_strided_slice %145 {offsets = [1, 0], sizes = [1, 8], strides = [1, 1]} : vector<2x32xf32> to vector<1x8xf32>
    %c0_106 = arith.constant 0 : index
    %c0_107 = arith.constant 0 : index
    %148 = vector.load %arg8[%c0_106, %c0_107] : memref<128x8xf32, #tpu.memory_space<vmem>>, vector<128x8xf32>
    %c0_108 = arith.constant 0 : index
    %c0_109 = arith.constant 0 : index
    %149 = vector.load %arg9[%c0_108, %c0_109] : memref<8x128xf32, #tpu.memory_space<vmem>>, vector<8x128xf32>
    %cst_110 = arith.constant dense<0.000000e+00> : vector<128xf32>
    %150 = vector.multi_reduction <add>, %143, %cst_110 [0] : vector<32x128xf32> to vector<128xf32>
    %151 = vector.shape_cast %150 : vector<128xf32> to vector<1x128xf32>
    %cst_111 = arith.constant dense<0.000000e+00> : vector<1x8xf32>
    %152 = tpu.matmul %151, %148, %cst_111 {dimension_numbers = #tpu.dot_dimension_numbers<[1], [0], [0], [1], [0, 0, 1, 1], [], []>} : vector<1x128xf32>, vector<128x8xf32>, vector<1x8xf32> -> vector<1x8xf32>
    %cst_112 = arith.constant 0.001953125 : f32
    %153 = vector.broadcast %cst_112 : f32 to vector<1x8xf32>
    %154 = arith.mulf %152, %153 : vector<1x8xf32>
    %cst_113 = arith.constant dense<0.000000e+00> : vector<1x128xf32>
    %155 = tpu.matmul %154, %149, %cst_113 {dimension_numbers = #tpu.dot_dimension_numbers<[1], [0], [0], [1], [0, 0, 1, 1], [], []>} : vector<1x8xf32>, vector<8x128xf32>, vector<1x128xf32> -> vector<1x128xf32>
    %156 = vector.broadcast %155 : vector<1x128xf32> to vector<32x128xf32>
    %157 = arith.subf %143, %156 : vector<32x128xf32>
    %158 = arith.mulf %157, %157 : vector<32x128xf32>
    %cst_114 = arith.constant dense<0.000000e+00> : vector<128xf32>
    %159 = vector.multi_reduction <add>, %158, %cst_114 [0] : vector<32x128xf32> to vector<128xf32>
    %160 = vector.shape_cast %159 : vector<128xf32> to vector<1x128xf32>
    %cst_115 = arith.constant dense<0.000000e+00> : vector<1x8xf32>
    %161 = tpu.matmul %160, %148, %cst_115 {dimension_numbers = #tpu.dot_dimension_numbers<[1], [0], [0], [1], [0, 0, 1, 1], [], []>} : vector<1x128xf32>, vector<128x8xf32>, vector<1x8xf32> -> vector<1x8xf32>
    %cst_116 = arith.constant 0.001953125 : f32
    %162 = vector.broadcast %cst_116 : f32 to vector<1x8xf32>
    %163 = arith.mulf %161, %162 : vector<1x8xf32>
    %cst_117 = arith.constant 9.99999974E-6 : f32
    %164 = vector.broadcast %cst_117 : f32 to vector<1x8xf32>
    %165 = arith.addf %163, %164 : vector<1x8xf32>
    %166 = math.rsqrt %165 : vector<1x8xf32>
    %167 = arith.mulf %146, %166 : vector<1x8xf32>
    %168 = arith.mulf %154, %167 : vector<1x8xf32>
    %169 = arith.subf %147, %168 : vector<1x8xf32>
    %cst_118 = arith.constant dense<0.000000e+00> : vector<1x128xf32>
    %170 = tpu.matmul %167, %149, %cst_118 {dimension_numbers = #tpu.dot_dimension_numbers<[1], [0], [0], [1], [0, 0, 1, 1], [], []>} : vector<1x8xf32>, vector<8x128xf32>, vector<1x128xf32> -> vector<1x128xf32>
    %171 = vector.broadcast %170 : vector<1x128xf32> to vector<32x128xf32>
    %172 = arith.mulf %143, %171 : vector<32x128xf32>
    %cst_119 = arith.constant dense<0.000000e+00> : vector<1x128xf32>
    %173 = tpu.matmul %169, %149, %cst_119 {dimension_numbers = #tpu.dot_dimension_numbers<[1], [0], [0], [1], [0, 0, 1, 1], [], []>} : vector<1x8xf32>, vector<8x128xf32>, vector<1x128xf32> -> vector<1x128xf32>
    %174 = vector.broadcast %173 : vector<1x128xf32> to vector<32x128xf32>
    %175 = arith.addf %172, %174 : vector<32x128xf32>
    %176 = arith.addf %175, %59 : vector<32x128xf32>
    %cst_120 = arith.constant 0.000000e+00 : f32
    %177 = vector.broadcast %cst_120 : f32 to vector<32x128xf32>
    %178 = arith.maximumf %176, %177 : vector<32x128xf32>
    %cst_121 = arith.constant 0.000000e+00 : f32
    %179 = vector.broadcast %cst_121 : f32 to vector<16x128xf32>
    %c0_122 = arith.constant 0 : index
    %c0_123 = arith.constant 0 : index
    %c0_124 = arith.constant 0 : index
    %180 = vector.load %arg4[%c0_122, %c0_123, %c0_124] : memref<3x16x32xf32, #tpu.memory_space<vmem>>, vector<1x16x32xf32>
    %181 = vector.shape_cast %180 : vector<1x16x32xf32> to vector<16x32xf32>
    %cst_125 = arith.constant dense<0.000000e+00> : vector<16x128xf32>
    %182 = tpu.matmul %181, %178, %cst_125 {dimension_numbers = #tpu.dot_dimension_numbers<[1], [0], [0], [1], [0, 0, 1, 1], [], []>} : vector<16x32xf32>, vector<32x128xf32>, vector<16x128xf32> -> vector<16x128xf32>
    %183 = arith.truncf %182 : vector<16x128xf32> to vector<16x128xbf16>
    %c9 = arith.constant 9 : index
    %c0_126 = arith.constant 0 : index
    %c0_127 = arith.constant 0 : index
    %184 = vector.load %arg2[%c9, %c0_126, %c0_127] : memref<23x128x128xbf16, #tpu.memory_space<vmem>>, vector<1x128x128xbf16>
    %185 = vector.shape_cast %184 : vector<1x128x128xbf16> to vector<128x128xbf16>
    %cst_128 = arith.constant dense<0.000000e+00> : vector<16x128xf32>
    %186 = tpu.matmul %183, %185, %cst_128 {dimension_numbers = #tpu.dot_dimension_numbers<[1], [0], [0], [1], [0, 0, 1, 1], [], []>} : vector<16x128xbf16>, vector<128x128xbf16>, vector<16x128xf32> -> vector<16x128xf32>
    %187 = arith.addf %179, %186 : vector<16x128xf32>
    %c1_129 = arith.constant 1 : index
    %c0_130 = arith.constant 0 : index
    %c0_131 = arith.constant 0 : index
    %188 = vector.load %arg4[%c1_129, %c0_130, %c0_131] : memref<3x16x32xf32, #tpu.memory_space<vmem>>, vector<1x16x32xf32>
    %189 = vector.shape_cast %188 : vector<1x16x32xf32> to vector<16x32xf32>
    %cst_132 = arith.constant dense<0.000000e+00> : vector<16x128xf32>
    %190 = tpu.matmul %189, %178, %cst_132 {dimension_numbers = #tpu.dot_dimension_numbers<[1], [0], [0], [1], [0, 0, 1, 1], [], []>} : vector<16x32xf32>, vector<32x128xf32>, vector<16x128xf32> -> vector<16x128xf32>
    %191 = arith.truncf %190 : vector<16x128xf32> to vector<16x128xbf16>
    %c10 = arith.constant 10 : index
    %c0_133 = arith.constant 0 : index
    %c0_134 = arith.constant 0 : index
    %192 = vector.load %arg2[%c10, %c0_133, %c0_134] : memref<23x128x128xbf16, #tpu.memory_space<vmem>>, vector<1x128x128xbf16>
    %193 = vector.shape_cast %192 : vector<1x128x128xbf16> to vector<128x128xbf16>
    %cst_135 = arith.constant dense<0.000000e+00> : vector<16x128xf32>
    %194 = tpu.matmul %191, %193, %cst_135 {dimension_numbers = #tpu.dot_dimension_numbers<[1], [0], [0], [1], [0, 0, 1, 1], [], []>} : vector<16x128xbf16>, vector<128x128xbf16>, vector<16x128xf32> -> vector<16x128xf32>
    %195 = arith.addf %187, %194 : vector<16x128xf32>
    %c2_136 = arith.constant 2 : index
    %c0_137 = arith.constant 0 : index
    %c0_138 = arith.constant 0 : index
    %196 = vector.load %arg4[%c2_136, %c0_137, %c0_138] : memref<3x16x32xf32, #tpu.memory_space<vmem>>, vector<1x16x32xf32>
    %197 = vector.shape_cast %196 : vector<1x16x32xf32> to vector<16x32xf32>
    %cst_139 = arith.constant dense<0.000000e+00> : vector<16x128xf32>
    %198 = tpu.matmul %197, %178, %cst_139 {dimension_numbers = #tpu.dot_dimension_numbers<[1], [0], [0], [1], [0, 0, 1, 1], [], []>} : vector<16x32xf32>, vector<32x128xf32>, vector<16x128xf32> -> vector<16x128xf32>
    %199 = arith.truncf %198 : vector<16x128xf32> to vector<16x128xbf16>
    %c11 = arith.constant 11 : index
    %c0_140 = arith.constant 0 : index
    %c0_141 = arith.constant 0 : index
    %200 = vector.load %arg2[%c11, %c0_140, %c0_141] : memref<23x128x128xbf16, #tpu.memory_space<vmem>>, vector<1x128x128xbf16>
    %201 = vector.shape_cast %200 : vector<1x128x128xbf16> to vector<128x128xbf16>
    %cst_142 = arith.constant dense<0.000000e+00> : vector<16x128xf32>
    %202 = tpu.matmul %199, %201, %cst_142 {dimension_numbers = #tpu.dot_dimension_numbers<[1], [0], [0], [1], [0, 0, 1, 1], [], []>} : vector<16x128xbf16>, vector<128x128xbf16>, vector<16x128xf32> -> vector<16x128xf32>
    %203 = arith.addf %195, %202 : vector<16x128xf32>
    %c3_143 = arith.constant 3 : index
    %c0_144 = arith.constant 0 : index
    %c0_145 = arith.constant 0 : index
    %204 = vector.load %arg14[%c3_143, %c0_144, %c0_145] : memref<9x2x32xf32, #tpu.memory_space<vmem>>, vector<1x2x32xf32>
    %205 = vector.shape_cast %204 : vector<1x2x32xf32> to vector<2x32xf32>
    %206 = vector.extract_strided_slice %205 {offsets = [0, 0], sizes = [1, 16], strides = [1, 1]} : vector<2x32xf32> to vector<1x16xf32>
    %207 = vector.extract_strided_slice %205 {offsets = [1, 0], sizes = [1, 16], strides = [1, 1]} : vector<2x32xf32> to vector<1x16xf32>
    %c0_146 = arith.constant 0 : index
    %c0_147 = arith.constant 0 : index
    %208 = vector.load %arg10[%c0_146, %c0_147] : memref<128x16xf32, #tpu.memory_space<vmem>>, vector<128x16xf32>
    %c0_148 = arith.constant 0 : index
    %c0_149 = arith.constant 0 : index
    %209 = vector.load %arg11[%c0_148, %c0_149] : memref<16x128xf32, #tpu.memory_space<vmem>>, vector<16x128xf32>
    %cst_150 = arith.constant dense<0.000000e+00> : vector<128xf32>
    %210 = vector.multi_reduction <add>, %203, %cst_150 [0] : vector<16x128xf32> to vector<128xf32>
    %211 = vector.shape_cast %210 : vector<128xf32> to vector<1x128xf32>
    %cst_151 = arith.constant dense<0.000000e+00> : vector<1x16xf32>
    %212 = tpu.matmul %211, %208, %cst_151 {dimension_numbers = #tpu.dot_dimension_numbers<[1], [0], [0], [1], [0, 0, 1, 1], [], []>} : vector<1x128xf32>, vector<128x16xf32>, vector<1x16xf32> -> vector<1x16xf32>
    %cst_152 = arith.constant 7.812500e-03 : f32
    %213 = vector.broadcast %cst_152 : f32 to vector<1x16xf32>
    %214 = arith.mulf %212, %213 : vector<1x16xf32>
    %cst_153 = arith.constant dense<0.000000e+00> : vector<1x128xf32>
    %215 = tpu.matmul %214, %209, %cst_153 {dimension_numbers = #tpu.dot_dimension_numbers<[1], [0], [0], [1], [0, 0, 1, 1], [], []>} : vector<1x16xf32>, vector<16x128xf32>, vector<1x128xf32> -> vector<1x128xf32>
    %216 = vector.broadcast %215 : vector<1x128xf32> to vector<16x128xf32>
    %217 = arith.subf %203, %216 : vector<16x128xf32>
    %218 = arith.mulf %217, %217 : vector<16x128xf32>
    %cst_154 = arith.constant dense<0.000000e+00> : vector<128xf32>
    %219 = vector.multi_reduction <add>, %218, %cst_154 [0] : vector<16x128xf32> to vector<128xf32>
    %220 = vector.shape_cast %219 : vector<128xf32> to vector<1x128xf32>
    %cst_155 = arith.constant dense<0.000000e+00> : vector<1x16xf32>
    %221 = tpu.matmul %220, %208, %cst_155 {dimension_numbers = #tpu.dot_dimension_numbers<[1], [0], [0], [1], [0, 0, 1, 1], [], []>} : vector<1x128xf32>, vector<128x16xf32>, vector<1x16xf32> -> vector<1x16xf32>
    %cst_156 = arith.constant 7.812500e-03 : f32
    %222 = vector.broadcast %cst_156 : f32 to vector<1x16xf32>
    %223 = arith.mulf %221, %222 : vector<1x16xf32>
    %cst_157 = arith.constant 9.99999974E-6 : f32
    %224 = vector.broadcast %cst_157 : f32 to vector<1x16xf32>
    %225 = arith.addf %223, %224 : vector<1x16xf32>
    %226 = math.rsqrt %225 : vector<1x16xf32>
    %227 = arith.mulf %206, %226 : vector<1x16xf32>
    %228 = arith.mulf %214, %227 : vector<1x16xf32>
    %229 = arith.subf %207, %228 : vector<1x16xf32>
    %cst_158 = arith.constant dense<0.000000e+00> : vector<1x128xf32>
    %230 = tpu.matmul %227, %209, %cst_158 {dimension_numbers = #tpu.dot_dimension_numbers<[1], [0], [0], [1], [0, 0, 1, 1], [], []>} : vector<1x16xf32>, vector<16x128xf32>, vector<1x128xf32> -> vector<1x128xf32>
    %231 = vector.broadcast %230 : vector<1x128xf32> to vector<16x128xf32>
    %232 = arith.mulf %203, %231 : vector<16x128xf32>
    %cst_159 = arith.constant dense<0.000000e+00> : vector<1x128xf32>
    %233 = tpu.matmul %229, %209, %cst_159 {dimension_numbers = #tpu.dot_dimension_numbers<[1], [0], [0], [1], [0, 0, 1, 1], [], []>} : vector<1x16xf32>, vector<16x128xf32>, vector<1x128xf32> -> vector<1x128xf32>
    %234 = vector.broadcast %233 : vector<1x128xf32> to vector<16x128xf32>
    %235 = arith.addf %232, %234 : vector<16x128xf32>
    %cst_160 = arith.constant 0.000000e+00 : f32
    %236 = vector.broadcast %cst_160 : f32 to vector<16x128xf32>
    %237 = arith.maximumf %235, %236 : vector<16x128xf32>
    %cst_161 = arith.constant 0.000000e+00 : f32
    %238 = vector.broadcast %cst_161 : f32 to vector<16x128xf32>
    %c0_162 = arith.constant 0 : index
    %c0_163 = arith.constant 0 : index
    %c0_164 = arith.constant 0 : index
    %239 = vector.load %arg5[%c0_162, %c0_163, %c0_164] : memref<3x16x16xf32, #tpu.memory_space<vmem>>, vector<1x16x16xf32>
    %240 = vector.shape_cast %239 : vector<1x16x16xf32> to vector<16x16xf32>
    %cst_165 = arith.constant dense<0.000000e+00> : vector<16x128xf32>
    %241 = tpu.matmul %240, %237, %cst_165 {dimension_numbers = #tpu.dot_dimension_numbers<[1], [0], [0], [1], [0, 0, 1, 1], [], []>} : vector<16x16xf32>, vector<16x128xf32>, vector<16x128xf32> -> vector<16x128xf32>
    %242 = arith.truncf %241 : vector<16x128xf32> to vector<16x128xbf16>
    %c12 = arith.constant 12 : index
    %c0_166 = arith.constant 0 : index
    %c0_167 = arith.constant 0 : index
    %243 = vector.load %arg2[%c12, %c0_166, %c0_167] : memref<23x128x128xbf16, #tpu.memory_space<vmem>>, vector<1x128x128xbf16>
    %244 = vector.shape_cast %243 : vector<1x128x128xbf16> to vector<128x128xbf16>
    %cst_168 = arith.constant dense<0.000000e+00> : vector<16x128xf32>
    %245 = tpu.matmul %242, %244, %cst_168 {dimension_numbers = #tpu.dot_dimension_numbers<[1], [0], [0], [1], [0, 0, 1, 1], [], []>} : vector<16x128xbf16>, vector<128x128xbf16>, vector<16x128xf32> -> vector<16x128xf32>
    %246 = arith.addf %238, %245 : vector<16x128xf32>
    %c1_169 = arith.constant 1 : index
    %c0_170 = arith.constant 0 : index
    %c0_171 = arith.constant 0 : index
    %247 = vector.load %arg5[%c1_169, %c0_170, %c0_171] : memref<3x16x16xf32, #tpu.memory_space<vmem>>, vector<1x16x16xf32>
    %248 = vector.shape_cast %247 : vector<1x16x16xf32> to vector<16x16xf32>
    %cst_172 = arith.constant dense<0.000000e+00> : vector<16x128xf32>
    %249 = tpu.matmul %248, %237, %cst_172 {dimension_numbers = #tpu.dot_dimension_numbers<[1], [0], [0], [1], [0, 0, 1, 1], [], []>} : vector<16x16xf32>, vector<16x128xf32>, vector<16x128xf32> -> vector<16x128xf32>
    %250 = arith.truncf %249 : vector<16x128xf32> to vector<16x128xbf16>
    %c13 = arith.constant 13 : index
    %c0_173 = arith.constant 0 : index
    %c0_174 = arith.constant 0 : index
    %251 = vector.load %arg2[%c13, %c0_173, %c0_174] : memref<23x128x128xbf16, #tpu.memory_space<vmem>>, vector<1x128x128xbf16>
    %252 = vector.shape_cast %251 : vector<1x128x128xbf16> to vector<128x128xbf16>
    %cst_175 = arith.constant dense<0.000000e+00> : vector<16x128xf32>
    %253 = tpu.matmul %250, %252, %cst_175 {dimension_numbers = #tpu.dot_dimension_numbers<[1], [0], [0], [1], [0, 0, 1, 1], [], []>} : vector<16x128xbf16>, vector<128x128xbf16>, vector<16x128xf32> -> vector<16x128xf32>
    %254 = arith.addf %246, %253 : vector<16x128xf32>
    %c2_176 = arith.constant 2 : index
    %c0_177 = arith.constant 0 : index
    %c0_178 = arith.constant 0 : index
    %255 = vector.load %arg5[%c2_176, %c0_177, %c0_178] : memref<3x16x16xf32, #tpu.memory_space<vmem>>, vector<1x16x16xf32>
    %256 = vector.shape_cast %255 : vector<1x16x16xf32> to vector<16x16xf32>
    %cst_179 = arith.constant dense<0.000000e+00> : vector<16x128xf32>
    %257 = tpu.matmul %256, %237, %cst_179 {dimension_numbers = #tpu.dot_dimension_numbers<[1], [0], [0], [1], [0, 0, 1, 1], [], []>} : vector<16x16xf32>, vector<16x128xf32>, vector<16x128xf32> -> vector<16x128xf32>
    %258 = arith.truncf %257 : vector<16x128xf32> to vector<16x128xbf16>
    %c14 = arith.constant 14 : index
    %c0_180 = arith.constant 0 : index
    %c0_181 = arith.constant 0 : index
    %259 = vector.load %arg2[%c14, %c0_180, %c0_181] : memref<23x128x128xbf16, #tpu.memory_space<vmem>>, vector<1x128x128xbf16>
    %260 = vector.shape_cast %259 : vector<1x128x128xbf16> to vector<128x128xbf16>
    %cst_182 = arith.constant dense<0.000000e+00> : vector<16x128xf32>
    %261 = tpu.matmul %258, %260, %cst_182 {dimension_numbers = #tpu.dot_dimension_numbers<[1], [0], [0], [1], [0, 0, 1, 1], [], []>} : vector<16x128xbf16>, vector<128x128xbf16>, vector<16x128xf32> -> vector<16x128xf32>
    %262 = arith.addf %254, %261 : vector<16x128xf32>
    %c4_183 = arith.constant 4 : index
    %c0_184 = arith.constant 0 : index
    %c0_185 = arith.constant 0 : index
    %263 = vector.load %arg14[%c4_183, %c0_184, %c0_185] : memref<9x2x32xf32, #tpu.memory_space<vmem>>, vector<1x2x32xf32>
    %264 = vector.shape_cast %263 : vector<1x2x32xf32> to vector<2x32xf32>
    %265 = vector.extract_strided_slice %264 {offsets = [0, 0], sizes = [1, 16], strides = [1, 1]} : vector<2x32xf32> to vector<1x16xf32>
    %266 = vector.extract_strided_slice %264 {offsets = [1, 0], sizes = [1, 16], strides = [1, 1]} : vector<2x32xf32> to vector<1x16xf32>
    %c0_186 = arith.constant 0 : index
    %c0_187 = arith.constant 0 : index
    %267 = vector.load %arg10[%c0_186, %c0_187] : memref<128x16xf32, #tpu.memory_space<vmem>>, vector<128x16xf32>
    %c0_188 = arith.constant 0 : index
    %c0_189 = arith.constant 0 : index
    %268 = vector.load %arg11[%c0_188, %c0_189] : memref<16x128xf32, #tpu.memory_space<vmem>>, vector<16x128xf32>
    %cst_190 = arith.constant dense<0.000000e+00> : vector<128xf32>
    %269 = vector.multi_reduction <add>, %262, %cst_190 [0] : vector<16x128xf32> to vector<128xf32>
    %270 = vector.shape_cast %269 : vector<128xf32> to vector<1x128xf32>
    %cst_191 = arith.constant dense<0.000000e+00> : vector<1x16xf32>
    %271 = tpu.matmul %270, %267, %cst_191 {dimension_numbers = #tpu.dot_dimension_numbers<[1], [0], [0], [1], [0, 0, 1, 1], [], []>} : vector<1x128xf32>, vector<128x16xf32>, vector<1x16xf32> -> vector<1x16xf32>
    %cst_192 = arith.constant 7.812500e-03 : f32
    %272 = vector.broadcast %cst_192 : f32 to vector<1x16xf32>
    %273 = arith.mulf %271, %272 : vector<1x16xf32>
    %cst_193 = arith.constant dense<0.000000e+00> : vector<1x128xf32>
    %274 = tpu.matmul %273, %268, %cst_193 {dimension_numbers = #tpu.dot_dimension_numbers<[1], [0], [0], [1], [0, 0, 1, 1], [], []>} : vector<1x16xf32>, vector<16x128xf32>, vector<1x128xf32> -> vector<1x128xf32>
    %275 = vector.broadcast %274 : vector<1x128xf32> to vector<16x128xf32>
    %276 = arith.subf %262, %275 : vector<16x128xf32>
    %277 = arith.mulf %276, %276 : vector<16x128xf32>
    %cst_194 = arith.constant dense<0.000000e+00> : vector<128xf32>
    %278 = vector.multi_reduction <add>, %277, %cst_194 [0] : vector<16x128xf32> to vector<128xf32>
    %279 = vector.shape_cast %278 : vector<128xf32> to vector<1x128xf32>
    %cst_195 = arith.constant dense<0.000000e+00> : vector<1x16xf32>
    %280 = tpu.matmul %279, %267, %cst_195 {dimension_numbers = #tpu.dot_dimension_numbers<[1], [0], [0], [1], [0, 0, 1, 1], [], []>} : vector<1x128xf32>, vector<128x16xf32>, vector<1x16xf32> -> vector<1x16xf32>
    %cst_196 = arith.constant 7.812500e-03 : f32
    %281 = vector.broadcast %cst_196 : f32 to vector<1x16xf32>
    %282 = arith.mulf %280, %281 : vector<1x16xf32>
    %cst_197 = arith.constant 9.99999974E-6 : f32
    %283 = vector.broadcast %cst_197 : f32 to vector<1x16xf32>
    %284 = arith.addf %282, %283 : vector<1x16xf32>
    %285 = math.rsqrt %284 : vector<1x16xf32>
    %286 = arith.mulf %265, %285 : vector<1x16xf32>
    %287 = arith.mulf %273, %286 : vector<1x16xf32>
    %288 = arith.subf %266, %287 : vector<1x16xf32>
    %cst_198 = arith.constant dense<0.000000e+00> : vector<1x128xf32>
    %289 = tpu.matmul %286, %268, %cst_198 {dimension_numbers = #tpu.dot_dimension_numbers<[1], [0], [0], [1], [0, 0, 1, 1], [], []>} : vector<1x16xf32>, vector<16x128xf32>, vector<1x128xf32> -> vector<1x128xf32>
    %290 = vector.broadcast %289 : vector<1x128xf32> to vector<16x128xf32>
    %291 = arith.mulf %262, %290 : vector<16x128xf32>
    %cst_199 = arith.constant dense<0.000000e+00> : vector<1x128xf32>
    %292 = tpu.matmul %288, %268, %cst_199 {dimension_numbers = #tpu.dot_dimension_numbers<[1], [0], [0], [1], [0, 0, 1, 1], [], []>} : vector<1x16xf32>, vector<16x128xf32>, vector<1x128xf32> -> vector<1x128xf32>
    %293 = vector.broadcast %292 : vector<1x128xf32> to vector<16x128xf32>
    %294 = arith.addf %291, %293 : vector<16x128xf32>
    %c1_200 = arith.constant 1 : index
    %c0_201 = arith.constant 0 : index
    %c0_202 = arith.constant 0 : index
    %295 = vector.load %arg4[%c1_200, %c0_201, %c0_202] : memref<3x16x32xf32, #tpu.memory_space<vmem>>, vector<1x16x32xf32>
    %296 = vector.shape_cast %295 : vector<1x16x32xf32> to vector<16x32xf32>
    %cst_203 = arith.constant dense<0.000000e+00> : vector<16x128xf32>
    %297 = tpu.matmul %296, %178, %cst_203 {dimension_numbers = #tpu.dot_dimension_numbers<[1], [0], [0], [1], [0, 0, 1, 1], [], []>} : vector<16x32xf32>, vector<32x128xf32>, vector<16x128xf32> -> vector<16x128xf32>
    %298 = arith.truncf %297 : vector<16x128xf32> to vector<16x128xbf16>
    %c21 = arith.constant 21 : index
    %c0_204 = arith.constant 0 : index
    %c0_205 = arith.constant 0 : index
    %299 = vector.load %arg2[%c21, %c0_204, %c0_205] : memref<23x128x128xbf16, #tpu.memory_space<vmem>>, vector<1x128x128xbf16>
    %300 = vector.shape_cast %299 : vector<1x128x128xbf16> to vector<128x128xbf16>
    %cst_206 = arith.constant dense<0.000000e+00> : vector<16x128xf32>
    %301 = tpu.matmul %298, %300, %cst_206 {dimension_numbers = #tpu.dot_dimension_numbers<[1], [0], [0], [1], [0, 0, 1, 1], [], []>} : vector<16x128xbf16>, vector<128x128xbf16>, vector<16x128xf32> -> vector<16x128xf32>
    %c5_207 = arith.constant 5 : index
    %c0_208 = arith.constant 0 : index
    %c0_209 = arith.constant 0 : index
    %302 = vector.load %arg14[%c5_207, %c0_208, %c0_209] : memref<9x2x32xf32, #tpu.memory_space<vmem>>, vector<1x2x32xf32>
    %303 = vector.shape_cast %302 : vector<1x2x32xf32> to vector<2x32xf32>
    %304 = vector.extract_strided_slice %303 {offsets = [0, 0], sizes = [1, 16], strides = [1, 1]} : vector<2x32xf32> to vector<1x16xf32>
    %305 = vector.extract_strided_slice %303 {offsets = [1, 0], sizes = [1, 16], strides = [1, 1]} : vector<2x32xf32> to vector<1x16xf32>
    %c0_210 = arith.constant 0 : index
    %c0_211 = arith.constant 0 : index
    %306 = vector.load %arg10[%c0_210, %c0_211] : memref<128x16xf32, #tpu.memory_space<vmem>>, vector<128x16xf32>
    %c0_212 = arith.constant 0 : index
    %c0_213 = arith.constant 0 : index
    %307 = vector.load %arg11[%c0_212, %c0_213] : memref<16x128xf32, #tpu.memory_space<vmem>>, vector<16x128xf32>
    %cst_214 = arith.constant dense<0.000000e+00> : vector<128xf32>
    %308 = vector.multi_reduction <add>, %301, %cst_214 [0] : vector<16x128xf32> to vector<128xf32>
    %309 = vector.shape_cast %308 : vector<128xf32> to vector<1x128xf32>
    %cst_215 = arith.constant dense<0.000000e+00> : vector<1x16xf32>
    %310 = tpu.matmul %309, %306, %cst_215 {dimension_numbers = #tpu.dot_dimension_numbers<[1], [0], [0], [1], [0, 0, 1, 1], [], []>} : vector<1x128xf32>, vector<128x16xf32>, vector<1x16xf32> -> vector<1x16xf32>
    %cst_216 = arith.constant 7.812500e-03 : f32
    %311 = vector.broadcast %cst_216 : f32 to vector<1x16xf32>
    %312 = arith.mulf %310, %311 : vector<1x16xf32>
    %cst_217 = arith.constant dense<0.000000e+00> : vector<1x128xf32>
    %313 = tpu.matmul %312, %307, %cst_217 {dimension_numbers = #tpu.dot_dimension_numbers<[1], [0], [0], [1], [0, 0, 1, 1], [], []>} : vector<1x16xf32>, vector<16x128xf32>, vector<1x128xf32> -> vector<1x128xf32>
    %314 = vector.broadcast %313 : vector<1x128xf32> to vector<16x128xf32>
    %315 = arith.subf %301, %314 : vector<16x128xf32>
    %316 = arith.mulf %315, %315 : vector<16x128xf32>
    %cst_218 = arith.constant dense<0.000000e+00> : vector<128xf32>
    %317 = vector.multi_reduction <add>, %316, %cst_218 [0] : vector<16x128xf32> to vector<128xf32>
    %318 = vector.shape_cast %317 : vector<128xf32> to vector<1x128xf32>
    %cst_219 = arith.constant dense<0.000000e+00> : vector<1x16xf32>
    %319 = tpu.matmul %318, %306, %cst_219 {dimension_numbers = #tpu.dot_dimension_numbers<[1], [0], [0], [1], [0, 0, 1, 1], [], []>} : vector<1x128xf32>, vector<128x16xf32>, vector<1x16xf32> -> vector<1x16xf32>
    %cst_220 = arith.constant 7.812500e-03 : f32
    %320 = vector.broadcast %cst_220 : f32 to vector<1x16xf32>
    %321 = arith.mulf %319, %320 : vector<1x16xf32>
    %cst_221 = arith.constant 9.99999974E-6 : f32
    %322 = vector.broadcast %cst_221 : f32 to vector<1x16xf32>
    %323 = arith.addf %321, %322 : vector<1x16xf32>
    %324 = math.rsqrt %323 : vector<1x16xf32>
    %325 = arith.mulf %304, %324 : vector<1x16xf32>
    %326 = arith.mulf %312, %325 : vector<1x16xf32>
    %327 = arith.subf %305, %326 : vector<1x16xf32>
    %cst_222 = arith.constant dense<0.000000e+00> : vector<1x128xf32>
    %328 = tpu.matmul %325, %307, %cst_222 {dimension_numbers = #tpu.dot_dimension_numbers<[1], [0], [0], [1], [0, 0, 1, 1], [], []>} : vector<1x16xf32>, vector<16x128xf32>, vector<1x128xf32> -> vector<1x128xf32>
    %329 = vector.broadcast %328 : vector<1x128xf32> to vector<16x128xf32>
    %330 = arith.mulf %301, %329 : vector<16x128xf32>
    %cst_223 = arith.constant dense<0.000000e+00> : vector<1x128xf32>
    %331 = tpu.matmul %327, %307, %cst_223 {dimension_numbers = #tpu.dot_dimension_numbers<[1], [0], [0], [1], [0, 0, 1, 1], [], []>} : vector<1x16xf32>, vector<16x128xf32>, vector<1x128xf32> -> vector<1x128xf32>
    %332 = vector.broadcast %331 : vector<1x128xf32> to vector<16x128xf32>
    %333 = arith.addf %330, %332 : vector<16x128xf32>
    %334 = arith.addf %294, %333 : vector<16x128xf32>
    %cst_224 = arith.constant 0.000000e+00 : f32
    %335 = vector.broadcast %cst_224 : f32 to vector<16x128xf32>
    %336 = arith.maximumf %334, %335 : vector<16x128xf32>
    %cst_225 = arith.constant 0.000000e+00 : f32
    %337 = vector.broadcast %cst_225 : f32 to vector<8x128xf32>
    %c0_226 = arith.constant 0 : index
    %c0_227 = arith.constant 0 : index
    %c0_228 = arith.constant 0 : index
    %338 = vector.load %arg6[%c0_226, %c0_227, %c0_228] : memref<3x8x16xf32, #tpu.memory_space<vmem>>, vector<1x8x16xf32>
    %339 = vector.shape_cast %338 : vector<1x8x16xf32> to vector<8x16xf32>
    %cst_229 = arith.constant dense<0.000000e+00> : vector<8x128xf32>
    %340 = tpu.matmul %339, %336, %cst_229 {dimension_numbers = #tpu.dot_dimension_numbers<[1], [0], [0], [1], [0, 0, 1, 1], [], []>} : vector<8x16xf32>, vector<16x128xf32>, vector<8x128xf32> -> vector<8x128xf32>
    %341 = arith.truncf %340 : vector<8x128xf32> to vector<8x128xbf16>
    %c15 = arith.constant 15 : index
    %c0_230 = arith.constant 0 : index
    %c0_231 = arith.constant 0 : index
    %342 = vector.load %arg2[%c15, %c0_230, %c0_231] : memref<23x128x128xbf16, #tpu.memory_space<vmem>>, vector<1x128x128xbf16>
    %343 = vector.shape_cast %342 : vector<1x128x128xbf16> to vector<128x128xbf16>
    %cst_232 = arith.constant dense<0.000000e+00> : vector<8x128xf32>
    %344 = tpu.matmul %341, %343, %cst_232 {dimension_numbers = #tpu.dot_dimension_numbers<[1], [0], [0], [1], [0, 0, 1, 1], [], []>} : vector<8x128xbf16>, vector<128x128xbf16>, vector<8x128xf32> -> vector<8x128xf32>
    %345 = arith.addf %337, %344 : vector<8x128xf32>
    %c1_233 = arith.constant 1 : index
    %c0_234 = arith.constant 0 : index
    %c0_235 = arith.constant 0 : index
    %346 = vector.load %arg6[%c1_233, %c0_234, %c0_235] : memref<3x8x16xf32, #tpu.memory_space<vmem>>, vector<1x8x16xf32>
    %347 = vector.shape_cast %346 : vector<1x8x16xf32> to vector<8x16xf32>
    %cst_236 = arith.constant dense<0.000000e+00> : vector<8x128xf32>
    %348 = tpu.matmul %347, %336, %cst_236 {dimension_numbers = #tpu.dot_dimension_numbers<[1], [0], [0], [1], [0, 0, 1, 1], [], []>} : vector<8x16xf32>, vector<16x128xf32>, vector<8x128xf32> -> vector<8x128xf32>
    %349 = arith.truncf %348 : vector<8x128xf32> to vector<8x128xbf16>
    %c16 = arith.constant 16 : index
    %c0_237 = arith.constant 0 : index
    %c0_238 = arith.constant 0 : index
    %350 = vector.load %arg2[%c16, %c0_237, %c0_238] : memref<23x128x128xbf16, #tpu.memory_space<vmem>>, vector<1x128x128xbf16>
    %351 = vector.shape_cast %350 : vector<1x128x128xbf16> to vector<128x128xbf16>
    %cst_239 = arith.constant dense<0.000000e+00> : vector<8x128xf32>
    %352 = tpu.matmul %349, %351, %cst_239 {dimension_numbers = #tpu.dot_dimension_numbers<[1], [0], [0], [1], [0, 0, 1, 1], [], []>} : vector<8x128xbf16>, vector<128x128xbf16>, vector<8x128xf32> -> vector<8x128xf32>
    %353 = arith.addf %345, %352 : vector<8x128xf32>
    %c2_240 = arith.constant 2 : index
    %c0_241 = arith.constant 0 : index
    %c0_242 = arith.constant 0 : index
    %354 = vector.load %arg6[%c2_240, %c0_241, %c0_242] : memref<3x8x16xf32, #tpu.memory_space<vmem>>, vector<1x8x16xf32>
    %355 = vector.shape_cast %354 : vector<1x8x16xf32> to vector<8x16xf32>
    %cst_243 = arith.constant dense<0.000000e+00> : vector<8x128xf32>
    %356 = tpu.matmul %355, %336, %cst_243 {dimension_numbers = #tpu.dot_dimension_numbers<[1], [0], [0], [1], [0, 0, 1, 1], [], []>} : vector<8x16xf32>, vector<16x128xf32>, vector<8x128xf32> -> vector<8x128xf32>
    %357 = arith.truncf %356 : vector<8x128xf32> to vector<8x128xbf16>
    %c17 = arith.constant 17 : index
    %c0_244 = arith.constant 0 : index
    %c0_245 = arith.constant 0 : index
    %358 = vector.load %arg2[%c17, %c0_244, %c0_245] : memref<23x128x128xbf16, #tpu.memory_space<vmem>>, vector<1x128x128xbf16>
    %359 = vector.shape_cast %358 : vector<1x128x128xbf16> to vector<128x128xbf16>
    %cst_246 = arith.constant dense<0.000000e+00> : vector<8x128xf32>
    %360 = tpu.matmul %357, %359, %cst_246 {dimension_numbers = #tpu.dot_dimension_numbers<[1], [0], [0], [1], [0, 0, 1, 1], [], []>} : vector<8x128xbf16>, vector<128x128xbf16>, vector<8x128xf32> -> vector<8x128xf32>
    %361 = arith.addf %353, %360 : vector<8x128xf32>
    %c6_247 = arith.constant 6 : index
    %c0_248 = arith.constant 0 : index
    %c0_249 = arith.constant 0 : index
    %362 = vector.load %arg14[%c6_247, %c0_248, %c0_249] : memref<9x2x32xf32, #tpu.memory_space<vmem>>, vector<1x2x32xf32>
    %363 = vector.shape_cast %362 : vector<1x2x32xf32> to vector<2x32xf32>
    %364 = vector.extract_strided_slice %363 {offsets = [0, 0], sizes = [1, 32], strides = [1, 1]} : vector<2x32xf32> to vector<1x32xf32>
    %365 = vector.extract_strided_slice %363 {offsets = [1, 0], sizes = [1, 32], strides = [1, 1]} : vector<2x32xf32> to vector<1x32xf32>
    %c0_250 = arith.constant 0 : index
    %c0_251 = arith.constant 0 : index
    %366 = vector.load %arg12[%c0_250, %c0_251] : memref<128x32xf32, #tpu.memory_space<vmem>>, vector<128x32xf32>
    %c0_252 = arith.constant 0 : index
    %c0_253 = arith.constant 0 : index
    %367 = vector.load %arg13[%c0_252, %c0_253] : memref<32x128xf32, #tpu.memory_space<vmem>>, vector<32x128xf32>
    %cst_254 = arith.constant dense<0.000000e+00> : vector<128xf32>
    %368 = vector.multi_reduction <add>, %361, %cst_254 [0] : vector<8x128xf32> to vector<128xf32>
    %369 = vector.shape_cast %368 : vector<128xf32> to vector<1x128xf32>
    %cst_255 = arith.constant dense<0.000000e+00> : vector<1x32xf32>
    %370 = tpu.matmul %369, %366, %cst_255 {dimension_numbers = #tpu.dot_dimension_numbers<[1], [0], [0], [1], [0, 0, 1, 1], [], []>} : vector<1x128xf32>, vector<128x32xf32>, vector<1x32xf32> -> vector<1x32xf32>
    %cst_256 = arith.constant 3.125000e-02 : f32
    %371 = vector.broadcast %cst_256 : f32 to vector<1x32xf32>
    %372 = arith.mulf %370, %371 : vector<1x32xf32>
    %cst_257 = arith.constant dense<0.000000e+00> : vector<1x128xf32>
    %373 = tpu.matmul %372, %367, %cst_257 {dimension_numbers = #tpu.dot_dimension_numbers<[1], [0], [0], [1], [0, 0, 1, 1], [], []>} : vector<1x32xf32>, vector<32x128xf32>, vector<1x128xf32> -> vector<1x128xf32>
    %374 = vector.broadcast %373 : vector<1x128xf32> to vector<8x128xf32>
    %375 = arith.subf %361, %374 : vector<8x128xf32>
    %376 = arith.mulf %375, %375 : vector<8x128xf32>
    %cst_258 = arith.constant dense<0.000000e+00> : vector<128xf32>
    %377 = vector.multi_reduction <add>, %376, %cst_258 [0] : vector<8x128xf32> to vector<128xf32>
    %378 = vector.shape_cast %377 : vector<128xf32> to vector<1x128xf32>
    %cst_259 = arith.constant dense<0.000000e+00> : vector<1x32xf32>
    %379 = tpu.matmul %378, %366, %cst_259 {dimension_numbers = #tpu.dot_dimension_numbers<[1], [0], [0], [1], [0, 0, 1, 1], [], []>} : vector<1x128xf32>, vector<128x32xf32>, vector<1x32xf32> -> vector<1x32xf32>
    %cst_260 = arith.constant 3.125000e-02 : f32
    %380 = vector.broadcast %cst_260 : f32 to vector<1x32xf32>
    %381 = arith.mulf %379, %380 : vector<1x32xf32>
    %cst_261 = arith.constant 9.99999974E-6 : f32
    %382 = vector.broadcast %cst_261 : f32 to vector<1x32xf32>
    %383 = arith.addf %381, %382 : vector<1x32xf32>
    %384 = math.rsqrt %383 : vector<1x32xf32>
    %385 = arith.mulf %364, %384 : vector<1x32xf32>
    %386 = arith.mulf %372, %385 : vector<1x32xf32>
    %387 = arith.subf %365, %386 : vector<1x32xf32>
    %cst_262 = arith.constant dense<0.000000e+00> : vector<1x128xf32>
    %388 = tpu.matmul %385, %367, %cst_262 {dimension_numbers = #tpu.dot_dimension_numbers<[1], [0], [0], [1], [0, 0, 1, 1], [], []>} : vector<1x32xf32>, vector<32x128xf32>, vector<1x128xf32> -> vector<1x128xf32>
    %389 = vector.broadcast %388 : vector<1x128xf32> to vector<8x128xf32>
    %390 = arith.mulf %361, %389 : vector<8x128xf32>
    %cst_263 = arith.constant dense<0.000000e+00> : vector<1x128xf32>
    %391 = tpu.matmul %387, %367, %cst_263 {dimension_numbers = #tpu.dot_dimension_numbers<[1], [0], [0], [1], [0, 0, 1, 1], [], []>} : vector<1x32xf32>, vector<32x128xf32>, vector<1x128xf32> -> vector<1x128xf32>
    %392 = vector.broadcast %391 : vector<1x128xf32> to vector<8x128xf32>
    %393 = arith.addf %390, %392 : vector<8x128xf32>
    %cst_264 = arith.constant 0.000000e+00 : f32
    %394 = vector.broadcast %cst_264 : f32 to vector<8x128xf32>
    %395 = arith.maximumf %393, %394 : vector<8x128xf32>
    %cst_265 = arith.constant 0.000000e+00 : f32
    %396 = vector.broadcast %cst_265 : f32 to vector<8x128xf32>
    %c0_266 = arith.constant 0 : index
    %c0_267 = arith.constant 0 : index
    %c0_268 = arith.constant 0 : index
    %397 = vector.load %arg7[%c0_266, %c0_267, %c0_268] : memref<3x8x8xf32, #tpu.memory_space<vmem>>, vector<1x8x8xf32>
    %398 = vector.shape_cast %397 : vector<1x8x8xf32> to vector<8x8xf32>
    %cst_269 = arith.constant dense<0.000000e+00> : vector<8x128xf32>
    %399 = tpu.matmul %398, %395, %cst_269 {dimension_numbers = #tpu.dot_dimension_numbers<[1], [0], [0], [1], [0, 0, 1, 1], [], []>} : vector<8x8xf32>, vector<8x128xf32>, vector<8x128xf32> -> vector<8x128xf32>
    %400 = arith.truncf %399 : vector<8x128xf32> to vector<8x128xbf16>
    %c18 = arith.constant 18 : index
    %c0_270 = arith.constant 0 : index
    %c0_271 = arith.constant 0 : index
    %401 = vector.load %arg2[%c18, %c0_270, %c0_271] : memref<23x128x128xbf16, #tpu.memory_space<vmem>>, vector<1x128x128xbf16>
    %402 = vector.shape_cast %401 : vector<1x128x128xbf16> to vector<128x128xbf16>
    %cst_272 = arith.constant dense<0.000000e+00> : vector<8x128xf32>
    %403 = tpu.matmul %400, %402, %cst_272 {dimension_numbers = #tpu.dot_dimension_numbers<[1], [0], [0], [1], [0, 0, 1, 1], [], []>} : vector<8x128xbf16>, vector<128x128xbf16>, vector<8x128xf32> -> vector<8x128xf32>
    %404 = arith.addf %396, %403 : vector<8x128xf32>
    %c1_273 = arith.constant 1 : index
    %c0_274 = arith.constant 0 : index
    %c0_275 = arith.constant 0 : index
    %405 = vector.load %arg7[%c1_273, %c0_274, %c0_275] : memref<3x8x8xf32, #tpu.memory_space<vmem>>, vector<1x8x8xf32>
    %406 = vector.shape_cast %405 : vector<1x8x8xf32> to vector<8x8xf32>
    %cst_276 = arith.constant dense<0.000000e+00> : vector<8x128xf32>
    %407 = tpu.matmul %406, %395, %cst_276 {dimension_numbers = #tpu.dot_dimension_numbers<[1], [0], [0], [1], [0, 0, 1, 1], [], []>} : vector<8x8xf32>, vector<8x128xf32>, vector<8x128xf32> -> vector<8x128xf32>
    %408 = arith.truncf %407 : vector<8x128xf32> to vector<8x128xbf16>
    %c19 = arith.constant 19 : index
    %c0_277 = arith.constant 0 : index
    %c0_278 = arith.constant 0 : index
    %409 = vector.load %arg2[%c19, %c0_277, %c0_278] : memref<23x128x128xbf16, #tpu.memory_space<vmem>>, vector<1x128x128xbf16>
    %410 = vector.shape_cast %409 : vector<1x128x128xbf16> to vector<128x128xbf16>
    %cst_279 = arith.constant dense<0.000000e+00> : vector<8x128xf32>
    %411 = tpu.matmul %408, %410, %cst_279 {dimension_numbers = #tpu.dot_dimension_numbers<[1], [0], [0], [1], [0, 0, 1, 1], [], []>} : vector<8x128xbf16>, vector<128x128xbf16>, vector<8x128xf32> -> vector<8x128xf32>
    %412 = arith.addf %404, %411 : vector<8x128xf32>
    %c2_280 = arith.constant 2 : index
    %c0_281 = arith.constant 0 : index
    %c0_282 = arith.constant 0 : index
    %413 = vector.load %arg7[%c2_280, %c0_281, %c0_282] : memref<3x8x8xf32, #tpu.memory_space<vmem>>, vector<1x8x8xf32>
    %414 = vector.shape_cast %413 : vector<1x8x8xf32> to vector<8x8xf32>
    %cst_283 = arith.constant dense<0.000000e+00> : vector<8x128xf32>
    %415 = tpu.matmul %414, %395, %cst_283 {dimension_numbers = #tpu.dot_dimension_numbers<[1], [0], [0], [1], [0, 0, 1, 1], [], []>} : vector<8x8xf32>, vector<8x128xf32>, vector<8x128xf32> -> vector<8x128xf32>
    %416 = arith.truncf %415 : vector<8x128xf32> to vector<8x128xbf16>
    %c20 = arith.constant 20 : index
    %c0_284 = arith.constant 0 : index
    %c0_285 = arith.constant 0 : index
    %417 = vector.load %arg2[%c20, %c0_284, %c0_285] : memref<23x128x128xbf16, #tpu.memory_space<vmem>>, vector<1x128x128xbf16>
    %418 = vector.shape_cast %417 : vector<1x128x128xbf16> to vector<128x128xbf16>
    %cst_286 = arith.constant dense<0.000000e+00> : vector<8x128xf32>
    %419 = tpu.matmul %416, %418, %cst_286 {dimension_numbers = #tpu.dot_dimension_numbers<[1], [0], [0], [1], [0, 0, 1, 1], [], []>} : vector<8x128xbf16>, vector<128x128xbf16>, vector<8x128xf32> -> vector<8x128xf32>
    %420 = arith.addf %412, %419 : vector<8x128xf32>
    %c7_287 = arith.constant 7 : index
    %c0_288 = arith.constant 0 : index
    %c0_289 = arith.constant 0 : index
    %421 = vector.load %arg14[%c7_287, %c0_288, %c0_289] : memref<9x2x32xf32, #tpu.memory_space<vmem>>, vector<1x2x32xf32>
    %422 = vector.shape_cast %421 : vector<1x2x32xf32> to vector<2x32xf32>
    %423 = vector.extract_strided_slice %422 {offsets = [0, 0], sizes = [1, 32], strides = [1, 1]} : vector<2x32xf32> to vector<1x32xf32>
    %424 = vector.extract_strided_slice %422 {offsets = [1, 0], sizes = [1, 32], strides = [1, 1]} : vector<2x32xf32> to vector<1x32xf32>
    %c0_290 = arith.constant 0 : index
    %c0_291 = arith.constant 0 : index
    %425 = vector.load %arg12[%c0_290, %c0_291] : memref<128x32xf32, #tpu.memory_space<vmem>>, vector<128x32xf32>
    %c0_292 = arith.constant 0 : index
    %c0_293 = arith.constant 0 : index
    %426 = vector.load %arg13[%c0_292, %c0_293] : memref<32x128xf32, #tpu.memory_space<vmem>>, vector<32x128xf32>
    %cst_294 = arith.constant dense<0.000000e+00> : vector<128xf32>
    %427 = vector.multi_reduction <add>, %420, %cst_294 [0] : vector<8x128xf32> to vector<128xf32>
    %428 = vector.shape_cast %427 : vector<128xf32> to vector<1x128xf32>
    %cst_295 = arith.constant dense<0.000000e+00> : vector<1x32xf32>
    %429 = tpu.matmul %428, %425, %cst_295 {dimension_numbers = #tpu.dot_dimension_numbers<[1], [0], [0], [1], [0, 0, 1, 1], [], []>} : vector<1x128xf32>, vector<128x32xf32>, vector<1x32xf32> -> vector<1x32xf32>
    %cst_296 = arith.constant 3.125000e-02 : f32
    %430 = vector.broadcast %cst_296 : f32 to vector<1x32xf32>
    %431 = arith.mulf %429, %430 : vector<1x32xf32>
    %cst_297 = arith.constant dense<0.000000e+00> : vector<1x128xf32>
    %432 = tpu.matmul %431, %426, %cst_297 {dimension_numbers = #tpu.dot_dimension_numbers<[1], [0], [0], [1], [0, 0, 1, 1], [], []>} : vector<1x32xf32>, vector<32x128xf32>, vector<1x128xf32> -> vector<1x128xf32>
    %433 = vector.broadcast %432 : vector<1x128xf32> to vector<8x128xf32>
    %434 = arith.subf %420, %433 : vector<8x128xf32>
    %435 = arith.mulf %434, %434 : vector<8x128xf32>
    %cst_298 = arith.constant dense<0.000000e+00> : vector<128xf32>
    %436 = vector.multi_reduction <add>, %435, %cst_298 [0] : vector<8x128xf32> to vector<128xf32>
    %437 = vector.shape_cast %436 : vector<128xf32> to vector<1x128xf32>
    %cst_299 = arith.constant dense<0.000000e+00> : vector<1x32xf32>
    %438 = tpu.matmul %437, %425, %cst_299 {dimension_numbers = #tpu.dot_dimension_numbers<[1], [0], [0], [1], [0, 0, 1, 1], [], []>} : vector<1x128xf32>, vector<128x32xf32>, vector<1x32xf32> -> vector<1x32xf32>
    %cst_300 = arith.constant 3.125000e-02 : f32
    %439 = vector.broadcast %cst_300 : f32 to vector<1x32xf32>
    %440 = arith.mulf %438, %439 : vector<1x32xf32>
    %cst_301 = arith.constant 9.99999974E-6 : f32
    %441 = vector.broadcast %cst_301 : f32 to vector<1x32xf32>
    %442 = arith.addf %440, %441 : vector<1x32xf32>
    %443 = math.rsqrt %442 : vector<1x32xf32>
    %444 = arith.mulf %423, %443 : vector<1x32xf32>
    %445 = arith.mulf %431, %444 : vector<1x32xf32>
    %446 = arith.subf %424, %445 : vector<1x32xf32>
    %cst_302 = arith.constant dense<0.000000e+00> : vector<1x128xf32>
    %447 = tpu.matmul %444, %426, %cst_302 {dimension_numbers = #tpu.dot_dimension_numbers<[1], [0], [0], [1], [0, 0, 1, 1], [], []>} : vector<1x32xf32>, vector<32x128xf32>, vector<1x128xf32> -> vector<1x128xf32>
    %448 = vector.broadcast %447 : vector<1x128xf32> to vector<8x128xf32>
    %449 = arith.mulf %420, %448 : vector<8x128xf32>
    %cst_303 = arith.constant dense<0.000000e+00> : vector<1x128xf32>
    %450 = tpu.matmul %446, %426, %cst_303 {dimension_numbers = #tpu.dot_dimension_numbers<[1], [0], [0], [1], [0, 0, 1, 1], [], []>} : vector<1x32xf32>, vector<32x128xf32>, vector<1x128xf32> -> vector<1x128xf32>
    %451 = vector.broadcast %450 : vector<1x128xf32> to vector<8x128xf32>
    %452 = arith.addf %449, %451 : vector<8x128xf32>
    %c1_304 = arith.constant 1 : index
    %c0_305 = arith.constant 0 : index
    %c0_306 = arith.constant 0 : index
    %453 = vector.load %arg6[%c1_304, %c0_305, %c0_306] : memref<3x8x16xf32, #tpu.memory_space<vmem>>, vector<1x8x16xf32>
    %454 = vector.shape_cast %453 : vector<1x8x16xf32> to vector<8x16xf32>
    %cst_307 = arith.constant dense<0.000000e+00> : vector<8x128xf32>
    %455 = tpu.matmul %454, %336, %cst_307 {dimension_numbers = #tpu.dot_dimension_numbers<[1], [0], [0], [1], [0, 0, 1, 1], [], []>} : vector<8x16xf32>, vector<16x128xf32>, vector<8x128xf32> -> vector<8x128xf32>
    %456 = arith.truncf %455 : vector<8x128xf32> to vector<8x128xbf16>
    %c22 = arith.constant 22 : index
    %c0_308 = arith.constant 0 : index
    %c0_309 = arith.constant 0 : index
    %457 = vector.load %arg2[%c22, %c0_308, %c0_309] : memref<23x128x128xbf16, #tpu.memory_space<vmem>>, vector<1x128x128xbf16>
    %458 = vector.shape_cast %457 : vector<1x128x128xbf16> to vector<128x128xbf16>
    %cst_310 = arith.constant dense<0.000000e+00> : vector<8x128xf32>
    %459 = tpu.matmul %456, %458, %cst_310 {dimension_numbers = #tpu.dot_dimension_numbers<[1], [0], [0], [1], [0, 0, 1, 1], [], []>} : vector<8x128xbf16>, vector<128x128xbf16>, vector<8x128xf32> -> vector<8x128xf32>
    %c8_311 = arith.constant 8 : index
    %c0_312 = arith.constant 0 : index
    %c0_313 = arith.constant 0 : index
    %460 = vector.load %arg14[%c8_311, %c0_312, %c0_313] : memref<9x2x32xf32, #tpu.memory_space<vmem>>, vector<1x2x32xf32>
    %461 = vector.shape_cast %460 : vector<1x2x32xf32> to vector<2x32xf32>
    %462 = vector.extract_strided_slice %461 {offsets = [0, 0], sizes = [1, 32], strides = [1, 1]} : vector<2x32xf32> to vector<1x32xf32>
    %463 = vector.extract_strided_slice %461 {offsets = [1, 0], sizes = [1, 32], strides = [1, 1]} : vector<2x32xf32> to vector<1x32xf32>
    %c0_314 = arith.constant 0 : index
    %c0_315 = arith.constant 0 : index
    %464 = vector.load %arg12[%c0_314, %c0_315] : memref<128x32xf32, #tpu.memory_space<vmem>>, vector<128x32xf32>
    %c0_316 = arith.constant 0 : index
    %c0_317 = arith.constant 0 : index
    %465 = vector.load %arg13[%c0_316, %c0_317] : memref<32x128xf32, #tpu.memory_space<vmem>>, vector<32x128xf32>
    %cst_318 = arith.constant dense<0.000000e+00> : vector<128xf32>
    %466 = vector.multi_reduction <add>, %459, %cst_318 [0] : vector<8x128xf32> to vector<128xf32>
    %467 = vector.shape_cast %466 : vector<128xf32> to vector<1x128xf32>
    %cst_319 = arith.constant dense<0.000000e+00> : vector<1x32xf32>
    %468 = tpu.matmul %467, %464, %cst_319 {dimension_numbers = #tpu.dot_dimension_numbers<[1], [0], [0], [1], [0, 0, 1, 1], [], []>} : vector<1x128xf32>, vector<128x32xf32>, vector<1x32xf32> -> vector<1x32xf32>
    %cst_320 = arith.constant 3.125000e-02 : f32
    %469 = vector.broadcast %cst_320 : f32 to vector<1x32xf32>
    %470 = arith.mulf %468, %469 : vector<1x32xf32>
    %cst_321 = arith.constant dense<0.000000e+00> : vector<1x128xf32>
    %471 = tpu.matmul %470, %465, %cst_321 {dimension_numbers = #tpu.dot_dimension_numbers<[1], [0], [0], [1], [0, 0, 1, 1], [], []>} : vector<1x32xf32>, vector<32x128xf32>, vector<1x128xf32> -> vector<1x128xf32>
    %472 = vector.broadcast %471 : vector<1x128xf32> to vector<8x128xf32>
    %473 = arith.subf %459, %472 : vector<8x128xf32>
    %474 = arith.mulf %473, %473 : vector<8x128xf32>
    %cst_322 = arith.constant dense<0.000000e+00> : vector<128xf32>
    %475 = vector.multi_reduction <add>, %474, %cst_322 [0] : vector<8x128xf32> to vector<128xf32>
    %476 = vector.shape_cast %475 : vector<128xf32> to vector<1x128xf32>
    %cst_323 = arith.constant dense<0.000000e+00> : vector<1x32xf32>
    %477 = tpu.matmul %476, %464, %cst_323 {dimension_numbers = #tpu.dot_dimension_numbers<[1], [0], [0], [1], [0, 0, 1, 1], [], []>} : vector<1x128xf32>, vector<128x32xf32>, vector<1x32xf32> -> vector<1x32xf32>
    %cst_324 = arith.constant 3.125000e-02 : f32
    %478 = vector.broadcast %cst_324 : f32 to vector<1x32xf32>
    %479 = arith.mulf %477, %478 : vector<1x32xf32>
    %cst_325 = arith.constant 9.99999974E-6 : f32
    %480 = vector.broadcast %cst_325 : f32 to vector<1x32xf32>
    %481 = arith.addf %479, %480 : vector<1x32xf32>
    %482 = math.rsqrt %481 : vector<1x32xf32>
    %483 = arith.mulf %462, %482 : vector<1x32xf32>
    %484 = arith.mulf %470, %483 : vector<1x32xf32>
    %485 = arith.subf %463, %484 : vector<1x32xf32>
    %cst_326 = arith.constant dense<0.000000e+00> : vector<1x128xf32>
    %486 = tpu.matmul %483, %465, %cst_326 {dimension_numbers = #tpu.dot_dimension_numbers<[1], [0], [0], [1], [0, 0, 1, 1], [], []>} : vector<1x32xf32>, vector<32x128xf32>, vector<1x128xf32> -> vector<1x128xf32>
    %487 = vector.broadcast %486 : vector<1x128xf32> to vector<8x128xf32>
    %488 = arith.mulf %459, %487 : vector<8x128xf32>
    %cst_327 = arith.constant dense<0.000000e+00> : vector<1x128xf32>
    %489 = tpu.matmul %485, %465, %cst_327 {dimension_numbers = #tpu.dot_dimension_numbers<[1], [0], [0], [1], [0, 0, 1, 1], [], []>} : vector<1x32xf32>, vector<32x128xf32>, vector<1x128xf32> -> vector<1x128xf32>
    %490 = vector.broadcast %489 : vector<1x128xf32> to vector<8x128xf32>
    %491 = arith.addf %488, %490 : vector<8x128xf32>
    %492 = arith.addf %452, %491 : vector<8x128xf32>
    %cst_328 = arith.constant 0.000000e+00 : f32
    %493 = vector.broadcast %cst_328 : f32 to vector<8x128xf32>
    %494 = arith.maximumf %492, %493 : vector<8x128xf32>
    %c0_329 = arith.constant 0 : index
    %c0_330 = arith.constant 0 : index
    %495 = vector.load %arg15[%c0_329, %c0_330] : memref<2x8xf32, #tpu.memory_space<vmem>>, vector<2x8xf32>
    %cst_331 = arith.constant dense<0.000000e+00> : vector<2x128xf32>
    %496 = tpu.matmul %495, %494, %cst_331 {dimension_numbers = #tpu.dot_dimension_numbers<[1], [0], [0], [1], [0, 0, 1, 1], [], []>} : vector<2x8xf32>, vector<8x128xf32>, vector<2x128xf32> -> vector<2x128xf32>
    %c0_332 = arith.constant 0 : index
    %c0_333 = arith.constant 0 : index
    %497 = vector.load %arg12[%c0_332, %c0_333] : memref<128x32xf32, #tpu.memory_space<vmem>>, vector<128x32xf32>
    %cst_334 = arith.constant dense<0.000000e+00> : vector<2x32xf32>
    %498 = tpu.matmul %496, %497, %cst_334 {dimension_numbers = #tpu.dot_dimension_numbers<[1], [0], [0], [1], [0, 0, 1, 1], [], []>} : vector<2x128xf32>, vector<128x32xf32>, vector<2x32xf32> -> vector<2x32xf32>
    %cst_335 = arith.constant 6.250000e-02 : f32
    %499 = vector.broadcast %cst_335 : f32 to vector<2x32xf32>
    %500 = arith.mulf %498, %499 : vector<2x32xf32>
    %501 = arith.truncf %500 : vector<2x32xf32> to vector<2x32xbf16>
    %c0_336 = arith.constant 0 : index
    %c0_337 = arith.constant 0 : index
    %502 = vector.load %arg16[%c0_336, %c0_337] : memref<32x512xbf16, #tpu.memory_space<vmem>>, vector<32x512xbf16>
    %cst_338 = arith.constant dense<0.000000e+00> : vector<2x512xf32>
    %503 = tpu.matmul %501, %502, %cst_338 {dimension_numbers = #tpu.dot_dimension_numbers<[1], [0], [0], [1], [0, 0, 1, 1], [], []>} : vector<2x32xbf16>, vector<32x512xbf16>, vector<2x512xf32> -> vector<2x512xf32>
    %c0_339 = arith.constant 0 : index
    %c0_340 = arith.constant 0 : index
    %504 = vector.load %arg17[%c0_339, %c0_340] : memref<1x512xf32, #tpu.memory_space<vmem>>, vector<1x512xf32>
    %505 = vector.broadcast %504 : vector<1x512xf32> to vector<2x512xf32>
    %506 = arith.addf %503, %505 : vector<2x512xf32>
    %cst_341 = arith.constant 0.000000e+00 : f32
    %507 = vector.broadcast %cst_341 : f32 to vector<2x512xf32>
    %508 = arith.maximumf %506, %507 : vector<2x512xf32>
    %509 = arith.truncf %508 : vector<2x512xf32> to vector<2x512xbf16>
    %c0_342 = arith.constant 0 : index
    %c0_343 = arith.constant 0 : index
    %510 = vector.load %arg18[%c0_342, %c0_343] : memref<512x256xbf16, #tpu.memory_space<vmem>>, vector<512x256xbf16>
    %cst_344 = arith.constant dense<0.000000e+00> : vector<2x256xf32>
    %511 = tpu.matmul %509, %510, %cst_344 {dimension_numbers = #tpu.dot_dimension_numbers<[1], [0], [0], [1], [0, 0, 1, 1], [], []>} : vector<2x512xbf16>, vector<512x256xbf16>, vector<2x256xf32> -> vector<2x256xf32>
    %c0_345 = arith.constant 0 : index
    %c0_346 = arith.constant 0 : index
    %512 = vector.load %arg19[%c0_345, %c0_346] : memref<1x256xf32, #tpu.memory_space<vmem>>, vector<1x256xf32>
    %513 = vector.broadcast %512 : vector<1x256xf32> to vector<2x256xf32>
    %514 = arith.addf %511, %513 : vector<2x256xf32>
    %515 = arith.negf %514 : vector<2x256xf32>
    %516 = math.exp %515 : vector<2x256xf32>
    %cst_347 = arith.constant 1.000000e+00 : f32
    %517 = vector.broadcast %cst_347 : f32 to vector<2x256xf32>
    %518 = arith.addf %517, %516 : vector<2x256xf32>
    %519 = arith.divf %517, %518 : vector<2x256xf32>
    %c0_348 = arith.constant 0 : index
    %c0_349 = arith.constant 0 : index
    %520 = vector.load %arg20[%c0_348, %c0_349] : memref<2x256xf32, #tpu.memory_space<vmem>>, vector<2x256xf32>
    tpu.vector_store %arg20[%c0_348, %c0_349], %519 {strides = array<i32>} : memref<2x256xf32, #tpu.memory_space<vmem>>, vector<2x256xf32>,
    return
  }
  func.func @transform_0(%arg0: i32) -> (i32, i32) {
    %c0_i32 = arith.constant 0 : i32
    %c0_i32_0 = arith.constant 0 : i32
    %c0_i32_1 = arith.constant 0 : i32
    return %c0_i32, %c0_i32_0 : i32, i32
  }
  func.func @transform_1(%arg0: i32) -> (i32, i32, i32) {
    %c0_i32 = arith.constant 0 : i32
    %c0_i32_0 = arith.constant 0 : i32
    %c0_i32_1 = arith.constant 0 : i32
    %c0_i32_2 = arith.constant 0 : i32
    return %c0_i32, %c0_i32_0, %c0_i32_1 : i32, i32, i32
  }
  func.func @transform_2(%arg0: i32) -> (i32, i32, i32) {
    %c0_i32 = arith.constant 0 : i32
    %c0_i32_0 = arith.constant 0 : i32
    %c0_i32_1 = arith.constant 0 : i32
    %c0_i32_2 = arith.constant 0 : i32
    return %c0_i32, %c0_i32_0, %c0_i32_1 : i32, i32, i32
  }
  func.func @transform_3(%arg0: i32) -> (i32, i32, i32) {
    %c0_i32 = arith.constant 0 : i32
    %c0_i32_0 = arith.constant 0 : i32
    %c0_i32_1 = arith.constant 0 : i32
    %c0_i32_2 = arith.constant 0 : i32
    return %c0_i32, %c0_i32_0, %c0_i32_1 : i32, i32, i32
  }
  func.func @transform_4(%arg0: i32) -> (i32, i32, i32) {
    %c0_i32 = arith.constant 0 : i32
    %c0_i32_0 = arith.constant 0 : i32
    %c0_i32_1 = arith.constant 0 : i32
    %c0_i32_2 = arith.constant 0 : i32
    return %c0_i32, %c0_i32_0, %c0_i32_1 : i32, i32, i32
  }
  func.func @transform_5(%arg0: i32) -> (i32, i32, i32) {
    %c0_i32 = arith.constant 0 : i32
    %c0_i32_0 = arith.constant 0 : i32
    %c0_i32_1 = arith.constant 0 : i32
    %c0_i32_2 = arith.constant 0 : i32
    return %c0_i32, %c0_i32_0, %c0_i32_1 : i32, i32, i32
  }
  func.func @transform_6(%arg0: i32) -> (i32, i32, i32) {
    %c0_i32 = arith.constant 0 : i32
    %c0_i32_0 = arith.constant 0 : i32
    %c0_i32_1 = arith.constant 0 : i32
    %c0_i32_2 = arith.constant 0 : i32
    return %c0_i32, %c0_i32_0, %c0_i32_1 : i32, i32, i32
  }
  func.func @transform_7(%arg0: i32) -> (i32, i32) {
    %c0_i32 = arith.constant 0 : i32
    %c0_i32_0 = arith.constant 0 : i32
    %c0_i32_1 = arith.constant 0 : i32
    return %c0_i32, %c0_i32_0 : i32, i32
  }
  func.func @transform_8(%arg0: i32) -> (i32, i32) {
    %c0_i32 = arith.constant 0 : i32
    %c0_i32_0 = arith.constant 0 : i32
    %c0_i32_1 = arith.constant 0 : i32
    return %c0_i32, %c0_i32_0 : i32, i32
  }
  func.func @transform_9(%arg0: i32) -> (i32, i32) {
    %c0_i32 = arith.constant 0 : i32
    %c0_i32_0 = arith.constant 0 : i32
    %c0_i32_1 = arith.constant 0 : i32
    return %c0_i32, %c0_i32_0 : i32, i32
  }
  func.func @transform_10(%arg0: i32) -> (i32, i32) {
    %c0_i32 = arith.constant 0 : i32
    %c0_i32_0 = arith.constant 0 : i32
    %c0_i32_1 = arith.constant 0 : i32
    return %c0_i32, %c0_i32_0 : i32, i32
  }
  func.func @transform_11(%arg0: i32) -> (i32, i32) {
    %c0_i32 = arith.constant 0 : i32
    %c0_i32_0 = arith.constant 0 : i32
    %c0_i32_1 = arith.constant 0 : i32
    return %c0_i32, %c0_i32_0 : i32, i32
  }
  func.func @transform_12(%arg0: i32) -> (i32, i32) {
    %c0_i32 = arith.constant 0 : i32
    %c0_i32_0 = arith.constant 0 : i32
    %c0_i32_1 = arith.constant 0 : i32
    return %c0_i32, %c0_i32_0 : i32, i32
  }
  func.func @transform_13(%arg0: i32) -> (i32, i32, i32) {
    %c0_i32 = arith.constant 0 : i32
    %c0_i32_0 = arith.constant 0 : i32
    %c0_i32_1 = arith.constant 0 : i32
    %c0_i32_2 = arith.constant 0 : i32
    return %c0_i32, %c0_i32_0, %c0_i32_1 : i32, i32, i32
  }
  func.func @transform_14(%arg0: i32) -> (i32, i32) {
    %c0_i32 = arith.constant 0 : i32
    %c0_i32_0 = arith.constant 0 : i32
    %c0_i32_1 = arith.constant 0 : i32
    return %c0_i32, %c0_i32_0 : i32, i32
  }
  func.func @transform_15(%arg0: i32) -> (i32, i32) {
    %c0_i32 = arith.constant 0 : i32
    %c0_i32_0 = arith.constant 0 : i32
    %c0_i32_1 = arith.constant 0 : i32
    return %c0_i32, %c0_i32_0 : i32, i32
  }
  func.func @transform_16(%arg0: i32) -> (i32, i32) {
    %c0_i32 = arith.constant 0 : i32
    %c0_i32_0 = arith.constant 0 : i32
    %c0_i32_1 = arith.constant 0 : i32
    return %c0_i32, %c0_i32_0 : i32, i32
  }
  func.func @transform_17(%arg0: i32) -> (i32, i32) {
    %c0_i32 = arith.constant 0 : i32
    %c0_i32_0 = arith.constant 0 : i32
    %c0_i32_1 = arith.constant 0 : i32
    return %c0_i32, %c0_i32_0 : i32, i32
  }
  func.func @transform_18(%arg0: i32) -> (i32, i32) {
    %c0_i32 = arith.constant 0 : i32
    %c0_i32_0 = arith.constant 0 : i32
    %c0_i32_1 = arith.constant 0 : i32
    return %c0_i32, %c0_i32_0 : i32, i32
  }
  func.func @transform_19(%arg0: i32) -> (i32, i32) {
    %c0_i32 = arith.constant 0 : i32
    %c0_i32_0 = arith.constant 0 : i32
    %c0_i32_1 = arith.constant 0 : i32
    return %c0_i32, %c0_i32_0 : i32, i32
  }
}

</mosaic_0001>

<llo_original>
// kernel: _lambda_.1
$region0: #{_lambda_.1}
  #allocation0 [shape = 'u32[]', space=smem, size = 0x4, offset = 0x4, fixed_abs, tag = 'smem constant byte address 0x4 - core index']
  #allocation1 [shape = 'u32[72,128]{1,0:T(1,128)}', space=vmem, size = 0x9000, scoped, tag = 'internal scratch']
  %s0 = inlined_call_operand.vmem [shape: f32[32,128], index: 0, kind: input, shape index: {}]
  %s1 = inlined_call_operand.hbm [shape: bf16[23,128,128], index: 1, kind: input, shape index: {}]
  %s2 = inlined_call_operand.vmem [shape: f32[3,32,32], index: 2, kind: input, shape index: {}]
  %s3 = inlined_call_operand.hbm [shape: f32[3,16,32], index: 3, kind: input, shape index: {}]
  %s4 = inlined_call_operand.hbm [shape: f32[3,16,16], index: 4, kind: input, shape index: {}]
  %s5 = inlined_call_operand.hbm [shape: f32[3,8,16], index: 5, kind: input, shape index: {}]
  %s6 = inlined_call_operand.hbm [shape: f32[3,8,8], index: 6, kind: input, shape index: {}]
  %s7 = inlined_call_operand.hbm [shape: f32[128,8], index: 7, kind: input, shape index: {}]
  %s8 = inlined_call_operand.vmem [shape: f32[8,128], index: 8, kind: input, shape index: {}]
  %s9 = inlined_call_operand.hbm [shape: f32[128,16], index: 9, kind: input, shape index: {}]
  %s10 = inlined_call_operand.hbm [shape: f32[16,128], index: 10, kind: input, shape index: {}]
  %s11 = inlined_call_operand.hbm [shape: f32[128,32], index: 11, kind: input, shape index: {}]
  %s12 = inlined_call_operand.hbm [shape: f32[32,128], index: 12, kind: input, shape index: {}]
  %s13 = inlined_call_operand.hbm [shape: f32[9,2,32], index: 13, kind: input, shape index: {}]
  %s14 = inlined_call_operand.vmem [shape: f32[2,8], index: 14, kind: input, shape index: {}]
  %s15 = inlined_call_operand.hbm [shape: bf16[32,512], index: 15, kind: input, shape index: {}]
  %s16 = inlined_call_operand.vmem [shape: f32[1,512], index: 16, kind: input, shape index: {}]
  %s17 = inlined_call_operand.vmem [shape: bf16[512,256], index: 17, kind: input, shape index: {}]
  %s18 = inlined_call_operand.vmem [shape: f32[1,256], index: 18, kind: input, shape index: {}]
  %s19 = inlined_call_operand.hbm [shape: f32[2,256], index: 19, kind: output, shape index: {}]
  %s20 = sld [smem:[#allocation0]]
  $region134: #{_lambda_.1} parent=0
    _
  %s22 = ssub.s32 1, %s20
  %s23 = scalar_select 0, %s22, %s20
  $region1: #{_lambda_.1} parent=0
    #allocation2 [shape = 'u8[753664]{0}', space=vmem, size = 0xb8000, scoped, tag = 'input window, operand 1, single buffered']
    #allocation3 [shape = 's32[1]{0}', space=sflag, size = 0x4, scoped, tag = 'scoped memory for _lambda_.1']
    #allocation4 [shape = 's32[1]{0}', space=sflag, size = 0x4, scoped, tag = 'scoped memory for _lambda_.1']
    #allocation5 [shape = 'u8[24576]{0}', space=vmem, size = 0x6000, scoped, tag = 'input window, operand 3, single buffered']
    #allocation6 [shape = 's32[1]{0}', space=sflag, size = 0x4, scoped, tag = 'scoped memory for _lambda_.1']
    #allocation7 [shape = 'u8[24576]{0}', space=vmem, size = 0x6000, scoped, tag = 'input window, operand 4, single buffered']
    #allocation8 [shape = 'u8[12288]{0}', space=vmem, size = 0x3000, scoped, tag = 'input window, operand 5, single buffered']
    #allocation9 [shape = 's32[1]{0}', space=sflag, size = 0x4, scoped, tag = 'scoped memory for _lambda_.1']
    #allocation10 [shape = 'u8[12288]{0}', space=vmem, size = 0x3000, scoped, tag = 'input window, operand 6, single buffered']
    #allocation11 [shape = 'u8[65536]{0}', space=vmem, size = 0x10000, scoped, tag = 'input window, operand 7, single buffered']
    #allocation12 [shape = 's32[1]{0}', space=sflag, size = 0x4, scoped, tag = 'scoped memory for _lambda_.1']
    #allocation13 [shape = 'u8[65536]{0}', space=vmem, size = 0x10000, scoped, tag = 'input window, operand 9, single buffered']
    #allocation14 [shape = 'u8[8192]{0}', space=vmem, size = 0x2000, scoped, tag = 'input window, operand 10, single buffered']
    #allocation15 [shape = 's32[1]{0}', space=sflag, size = 0x4, scoped, tag = 'scoped memory for _lambda_.1']
    #allocation16 [shape = 'u8[65536]{0}', space=vmem, size = 0x10000, scoped, tag = 'input window, operand 11, single buffered']
    #allocation17 [shape = 'u8[16384]{0}', space=vmem, size = 0x4000, scoped, tag = 'input window, operand 12, single buffered']
    #allocation18 [shape = 's32[1]{0}', space=sflag, size = 0x4, scoped, tag = 'scoped memory for _lambda_.1']
    #allocation19 [shape = 'u8[9216]{0}', space=vmem, size = 0x2400, scoped, tag = 'input window, operand 13, single buffered']
    #allocation20 [shape = 'u8[32768]{0}', space=vmem, size = 0x8000, scoped, tag = 'input window, operand 15, single buffered']
    #allocation21 [shape = 's32[1]{0}', space=sflag, size = 0x4, scoped, tag = 'scoped memory for _lambda_.1']
    #allocation22 [shape = 'u8[2048]{0}', space=vmem, size = 0x800, scoped, tag = 'output window, operand 0, single buffered']
    %24 = vsyncpa [#allocation3], 0
    %25 = vsyncpa [#allocation6], 0
    %26 = vsyncpa [#allocation9], 0
    %27 = vsyncpa [#allocation12], 0
    %28 = vsyncpa [#allocation15], 0
    %29 = vsyncpa [#allocation18], 0
    %30 = vsyncpa [#allocation21], 0
    %31 = vsyncpa [#allocation4], 0
    // Predicated region
    $region2: #{_lambda_.1} parent=1 // pred_check
      _
    $region3: #{_lambda_.1} parent=1 // pred_check_branch
      %33 = sbr.rel (0) target = $region5
    $region4: #{_lambda_.1} parent=1 // pred_region
      _
    $region5: #{_lambda_.1} parent=1 // pred_fallthru
      _
    // Predicated region
    $region6: #{_lambda_.1} parent=1 // pred_check
      _
    $region7: #{_lambda_.1} parent=1 // pred_check_branch
      %35 = sbr.rel (0) target = $region9
    $region8: #{_lambda_.1} parent=1 // pred_region
      %37 = vsyncadd [#allocation3], 0
      %s38 = sshll.u32 %s1, 4
      %s39 = int_to_ptr.hbm [resolvable:$true] %s38
      %s40 = sshll.u32 [#allocation2], 4
      %s41 = int_to_ptr.vmem [resolvable:$true] %s40
      %46 = dma.hbm_to_vmem [thread:$0]  %s39, 23552, %s41, [#allocation3], 64, 64, 4
    $region9: #{_lambda_.1} parent=1 // pred_fallthru
      _
    // Predicated region
    $region10: #{_lambda_.1} parent=1 // pred_check
      _
    $region11: #{_lambda_.1} parent=1 // pred_check_branch
      %48 = sbr.rel (0) target = $region13
    $region12: #{_lambda_.1} parent=1 // pred_region
      _
    $region13: #{_lambda_.1} parent=1 // pred_fallthru
      _
    // Predicated region
    $region14: #{_lambda_.1} parent=1 // pred_check
      _
    $region15: #{_lambda_.1} parent=1 // pred_check_branch
      %50 = sbr.rel (0) target = $region17
    $region16: #{_lambda_.1} parent=1 // pred_region
      %52 = vsyncadd [#allocation6], 0
      %s53 = sshll.u32 %s3, 4
      %s54 = int_to_ptr.hbm [resolvable:$true] %s53
      %s55 = sshll.u32 [#allocation5], 4
      %s56 = int_to_ptr.vmem [resolvable:$true] %s55
      %61 = dma.hbm_to_vmem [thread:$0]  %s54, 768, %s56, [#allocation6], 128, 128, 8
    $region17: #{_lambda_.1} parent=1 // pred_fallthru
      _
    // Predicated region
    $region18: #{_lambda_.1} parent=1 // pred_check
      _
    $region19: #{_lambda_.1} parent=1 // pred_check_branch
      %63 = sbr.rel (0) target = $region21
    $region20: #{_lambda_.1} parent=1 // pred_region
      %65 = vsyncadd [#allocation6], 0
      %s66 = sshll.u32 %s4, 4
      %s67 = int_to_ptr.hbm [resolvable:$true] %s66
      %s68 = sshll.u32 [#allocation7], 4
      %s69 = int_to_ptr.vmem [resolvable:$true] %s68
      %74 = dma.hbm_to_vmem [thread:$0]  %s67, 768, %s69, [#allocation6], 128, 128, 8
    $region21: #{_lambda_.1} parent=1 // pred_fallthru
      _
    // Predicated region
    $region22: #{_lambda_.1} parent=1 // pred_check
      _
    $region23: #{_lambda_.1} parent=1 // pred_check_branch
      %76 = sbr.rel (0) target = $region25
    $region24: #{_lambda_.1} parent=1 // pred_region
      %78 = vsyncadd [#allocation9], 0
      %s79 = sshll.u32 %s5, 4
      %s80 = int_to_ptr.hbm [resolvable:$true] %s79
      %s81 = sshll.u32 [#allocation8], 4
      %s82 = int_to_ptr.vmem [resolvable:$true] %s81
      %87 = dma.hbm_to_vmem [thread:$0]  %s80, 384, %s82, [#allocation9], 128, 128, 8
    $region25: #{_lambda_.1} parent=1 // pred_fallthru
      _
    // Predicated region
    $region26: #{_lambda_.1} parent=1 // pred_check
      _
    $region27: #{_lambda_.1} parent=1 // pred_check_branch
      %89 = sbr.rel (0) target = $region29
    $region28: #{_lambda_.1} parent=1 // pred_region
      %91 = vsyncadd [#allocation9], 0
      %s92 = sshll.u32 %s6, 4
      %s93 = int_to_ptr.hbm [resolvable:$true] %s92
      %s94 = sshll.u32 [#allocation10], 4
      %s95 = int_to_ptr.vmem [resolvable:$true] %s94
      %100 = dma.hbm_to_vmem [thread:$0]  %s93, 384, %s95, [#allocation9], 128, 128, 8
    $region29: #{_lambda_.1} parent=1 // pred_fallthru
      _
    // Predicated region
    $region30: #{_lambda_.1} parent=1 // pred_check
      _
    $region31: #{_lambda_.1} parent=1 // pred_check_branch
      %102 = sbr.rel (0) target = $region33
    $region32: #{_lambda_.1} parent=1 // pred_region
      %104 = vsyncadd [#allocation12], 0
      %s105 = sshll.u32 %s7, 4
      %s106 = int_to_ptr.hbm [resolvable:$true] %s105
      %s107 = sshll.u32 [#allocation11], 4
      %s108 = int_to_ptr.vmem [resolvable:$true] %s107
      %113 = dma.hbm_to_vmem [thread:$0]  %s106, 2048, %s108, [#allocation12], 128, 128, 8
    $region33: #{_lambda_.1} parent=1 // pred_fallthru
      _
    // Predicated region
    $region34: #{_lambda_.1} parent=1 // pred_check
      _
    $region35: #{_lambda_.1} parent=1 // pred_check_branch
      %115 = sbr.rel (0) target = $region37
    $region36: #{_lambda_.1} parent=1 // pred_region
      _
    $region37: #{_lambda_.1} parent=1 // pred_fallthru
      _
    // Predicated region
    $region38: #{_lambda_.1} parent=1 // pred_check
      _
    $region39: #{_lambda_.1} parent=1 // pred_check_branch
      %117 = sbr.rel (0) target = $region41
    $region40: #{_lambda_.1} parent=1 // pred_region
      %119 = vsyncadd [#allocation12], 0
      %s120 = sshll.u32 %s9, 4
      %s121 = int_to_ptr.hbm [resolvable:$true] %s120
      %s122 = sshll.u32 [#allocation13], 4
      %s123 = int_to_ptr.vmem [resolvable:$true] %s122
      %128 = dma.hbm_to_vmem [thread:$0]  %s121, 2048, %s123, [#allocation12], 128, 128, 8
    $region41: #{_lambda_.1} parent=1 // pred_fallthru
      _
    // Predicated region
    $region42: #{_lambda_.1} parent=1 // pred_check
      _
    $region43: #{_lambda_.1} parent=1 // pred_check_branch
      %130 = sbr.rel (0) target = $region45
    $region44: #{_lambda_.1} parent=1 // pred_region
      %132 = vsyncadd [#allocation15], 0
      %s133 = sshll.u32 %s10, 4
      %s134 = int_to_ptr.hbm [resolvable:$true] %s133
      %s135 = sshll.u32 [#allocation14], 4
      %s136 = int_to_ptr.vmem [resolvable:$true] %s135
      %141 = dma.hbm_to_vmem [thread:$0]  %s134, 256, %s136, [#allocation15], 128, 128, 8
    $region45: #{_lambda_.1} parent=1 // pred_fallthru
      _
    // Predicated region
    $region46: #{_lambda_.1} parent=1 // pred_check
      _
    $region47: #{_lambda_.1} parent=1 // pred_check_branch
      %143 = sbr.rel (0) target = $region49
    $region48: #{_lambda_.1} parent=1 // pred_region
      %145 = vsyncadd [#allocation15], 0
      %s146 = sshll.u32 %s11, 4
      %s147 = int_to_ptr.hbm [resolvable:$true] %s146
      %s148 = sshll.u32 [#allocation16], 4
      %s149 = int_to_ptr.vmem [resolvable:$true] %s148
      %154 = dma.hbm_to_vmem [thread:$0]  %s147, 2048, %s149, [#allocation15], 128, 128, 8
    $region49: #{_lambda_.1} parent=1 // pred_fallthru
      _
    // Predicated region
    $region50: #{_lambda_.1} parent=1 // pred_check
      _
    $region51: #{_lambda_.1} parent=1 // pred_check_branch
      %156 = sbr.rel (0) target = $region53
    $region52: #{_lambda_.1} parent=1 // pred_region
      %158 = vsyncadd [#allocation18], 0
      %s159 = sshll.u32 %s12, 4
      %s160 = int_to_ptr.hbm [resolvable:$true] %s159
      %s161 = sshll.u32 [#allocation17], 4
      %s162 = int_to_ptr.vmem [resolvable:$true] %s161
      %167 = dma.hbm_to_vmem [thread:$0]  %s160, 512, %s162, [#allocation18], 128, 128, 8
    $region53: #{_lambda_.1} parent=1 // pred_fallthru
      _
    // Predicated region
    $region54: #{_lambda_.1} parent=1 // pred_check
      _
    $region55: #{_lambda_.1} parent=1 // pred_check_branch
      %169 = sbr.rel (0) target = $region57
    $region56: #{_lambda_.1} parent=1 // pred_region
      %171 = vsyncadd [#allocation18], 0
      %s172 = sshll.u32 %s13, 4
      %s173 = int_to_ptr.hbm [resolvable:$true] %s172
      %s174 = sshll.u32 [#allocation19], 4
      %s175 = int_to_ptr.vmem [resolvable:$true] %s174
      %180 = dma.hbm_to_vmem [thread:$0]  %s173, 288, %s175, [#allocation18], 32, 32, 2
    $region57: #{_lambda_.1} parent=1 // pred_fallthru
      _
    // Predicated region
    $region58: #{_lambda_.1} parent=1 // pred_check
      _
    $region59: #{_lambda_.1} parent=1 // pred_check_branch
      %182 = sbr.rel (0) target = $region61
    $region60: #{_lambda_.1} parent=1 // pred_region
      _
    $region61: #{_lambda_.1} parent=1 // pred_fallthru
      _
    // Predicated region
    $region62: #{_lambda_.1} parent=1 // pred_check
      _
    $region63: #{_lambda_.1} parent=1 // pred_check_branch
      %184 = sbr.rel (0) target = $region65
    $region64: #{_lambda_.1} parent=1 // pred_region
      %186 = vsyncadd [#allocation21], 0
      %s187 = sshll.u32 %s15, 4
      %s188 = int_to_ptr.hbm [resolvable:$true] %s187
      %s189 = sshll.u32 [#allocation20], 4
      %s190 = int_to_ptr.vmem [resolvable:$true] %s189
      %195 = dma.hbm_to_vmem [thread:$0]  %s188, 1024, %s190, [#allocation21], 256, 256, 16
    $region65: #{_lambda_.1} parent=1 // pred_fallthru
      _
    // Predicated region
    $region66: #{_lambda_.1} parent=1 // pred_check
      _
    $region67: #{_lambda_.1} parent=1 // pred_check_branch
      %197 = sbr.rel (0) target = $region69
    $region68: #{_lambda_.1} parent=1 // pred_region
      _
    $region69: #{_lambda_.1} parent=1 // pred_fallthru
      _
    // Predicated region
    $region70: #{_lambda_.1} parent=1 // pred_check
      _
    $region71: #{_lambda_.1} parent=1 // pred_check_branch
      %199 = sbr.rel (0) target = $region73
    $region72: #{_lambda_.1} parent=1 // pred_region
      _
    $region73: #{_lambda_.1} parent=1 // pred_fallthru
      _
    // Predicated region
    $region74: #{_lambda_.1} parent=1 // pred_check
      _
    $region75: #{_lambda_.1} parent=1 // pred_check_branch
      %201 = sbr.rel (0) target = $region77
    $region76: #{_lambda_.1} parent=1 // pred_region
      _
    $region77: #{_lambda_.1} parent=1 // pred_fallthru
      _
    // Predicated region
    $region78: #{_lambda_.1} parent=1 // pred_check
      _
    $region79: #{_lambda_.1} parent=1 // pred_check_branch
      %203 = sbr.rel (0) target = $region81
    $region80: #{_lambda_.1} parent=1 // pred_region
      %205 = dma.done [#allocation3], 23552
    $region81: #{_lambda_.1} parent=1 // pred_fallthru
      _
    // Predicated region
    $region82: #{_lambda_.1} parent=1 // pred_check
      _
    $region83: #{_lambda_.1} parent=1 // pred_check_branch
      %207 = sbr.rel (0) target = $region85
    $region84: #{_lambda_.1} parent=1 // pred_region
      %209 = dma.done [#allocation6], 768
    $region85: #{_lambda_.1} parent=1 // pred_fallthru
      _
    // Predicated region
    $region86: #{_lambda_.1} parent=1 // pred_check
      _
    $region87: #{_lambda_.1} parent=1 // pred_check_branch
      %211 = sbr.rel (0) target = $region89
    $region88: #{_lambda_.1} parent=1 // pred_region
      %213 = dma.done [#allocation6], 768
    $region89: #{_lambda_.1} parent=1 // pred_fallthru
      _
    // Predicated region
    $region90: #{_lambda_.1} parent=1 // pred_check
      _
    $region91: #{_lambda_.1} parent=1 // pred_check_branch
      %215 = sbr.rel (0) target = $region93
    $region92: #{_lambda_.1} parent=1 // pred_region
      %217 = dma.done [#allocation9], 384
    $region93: #{_lambda_.1} parent=1 // pred_fallthru
      _
    // Predicated region
    $region94: #{_lambda_.1} parent=1 // pred_check
      _
    $region95: #{_lambda_.1} parent=1 // pred_check_branch
      %219 = sbr.rel (0) target = $region97
    $region96: #{_lambda_.1} parent=1 // pred_region
      %221 = dma.done [#allocation9], 384
    $region97: #{_lambda_.1} parent=1 // pred_fallthru
      _
    // Predicated region
    $region98: #{_lambda_.1} parent=1 // pred_check
      _
    $region99: #{_lambda_.1} parent=1 // pred_check_branch
      %223 = sbr.rel (0) target = $region101
    $region100: #{_lambda_.1} parent=1 // pred_region
      %225 = dma.done [#allocation12], 2048
    $region101: #{_lambda_.1} parent=1 // pred_fallthru
      _
    // Predicated region
    $region102: #{_lambda_.1} parent=1 // pred_check
      _
    $region103: #{_lambda_.1} parent=1 // pred_check_branch
      %227 = sbr.rel (0) target = $region105
    $region104: #{_lambda_.1} parent=1 // pred_region
      %229 = dma.done [#allocation12], 2048
    $region105: #{_lambda_.1} parent=1 // pred_fallthru
      _
    // Predicated region
    $region106: #{_lambda_.1} parent=1 // pred_check
      _
    $region107: #{_lambda_.1} parent=1 // pred_check_branch
      %231 = sbr.rel (0) target = $region109
    $region108: #{_lambda_.1} parent=1 // pred_region
      %233 = dma.done [#allocation15], 256
    $region109: #{_lambda_.1} parent=1 // pred_fallthru
      _
    // Predicated region
    $region110: #{_lambda_.1} parent=1 // pred_check
      _
    $region111: #{_lambda_.1} parent=1 // pred_check_branch
      %235 = sbr.rel (0) target = $region113
    $region112: #{_lambda_.1} parent=1 // pred_region
      %237 = dma.done [#allocation15], 2048
    $region113: #{_lambda_.1} parent=1 // pred_fallthru
      _
    // Predicated region
    $region114: #{_lambda_.1} parent=1 // pred_check
      _
    $region115: #{_lambda_.1} parent=1 // pred_check_branch
      %239 = sbr.rel (0) target = $region117
    $region116: #{_lambda_.1} parent=1 // pred_region
      %241 = dma.done [#allocation18], 512
    $region117: #{_lambda_.1} parent=1 // pred_fallthru
      _
    // Predicated region
    $region118: #{_lambda_.1} parent=1 // pred_check
      _
    $region119: #{_lambda_.1} parent=1 // pred_check_branch
      %243 = sbr.rel (0) target = $region121
    $region120: #{_lambda_.1} parent=1 // pred_region
      %245 = dma.done [#allocation18], 288
    $region121: #{_lambda_.1} parent=1 // pred_fallthru
      _
    // Predicated region
    $region122: #{_lambda_.1} parent=1 // pred_check
      _
    $region123: #{_lambda_.1} parent=1 // pred_check_branch
      %247 = sbr.rel (0) target = $region125
    $region124: #{_lambda_.1} parent=1 // pred_region
      %249 = dma.done [#allocation21], 1024
    $region125: #{_lambda_.1} parent=1 // pred_fallthru
      _
    %v251 = vld [vmem:[%s0] sm:$0xff]
    %v252 = vld [vmem:[%s0 + $0x8] sm:$0xff]
    %v253 = vld [vmem:[%s0 + $0x10] sm:$0xff]
    %v254 = vld [vmem:[%s0 + $0x18] sm:$0xff]
    %v255 = vld [vmem:[%s2] sm:$0xff]
    %v256 = vld [vmem:[%s2 + $0x8] sm:$0xff]
    %v257 = vld [vmem:[%s2 + $0x10] sm:$0xff]
    %v258 = vld [vmem:[%s2 + $0x18] sm:$0xff]
    %vm259 = vcmask 261120
    %v261 = vsel %vm259, %v255, 0
    %v264 = vsel %vm259, %v256, 0
    %v267 = vsel %vm259, %v257, 0
    %v270 = vsel %vm259, %v258, 0
    %272 = vmatpush.msra.mxu0 0.0
    %273 = vmatpush.msra.mxu0 0.0
    %274 = vmatpush.msra.mxu0 0.0
    %275 = vmatpush.msra.mxu0 0.0
    %276 = vmatpush.msra.mxu0 0.0
    %277 = vmatpush.msra.mxu0 0.0
    %278 = vmatpush.msra.mxu0 0.0
    %279 = vmatpush.msra.mxu0 0.0
    %280 = vmatpush.msra.mxu0 0.0
    %281 = vmatpush.msra.mxu0 0.0
    %282 = vmatpush.msra.mxu0 0.0
    %283 = vmatpush.msra.mxu0 0.0
    %284 = vmatpush.msra.mxu0 %v254
    %285 = vmatpush.msra.mxu0 %v253
    %286 = vmatpush.msra.mxu0 %v252
    %287 = vmatpush.msra.mxu0 %v251
    %288 = vmatmul.f32.gmra.mxu0 %v261
    %v289 = vpop.f32.mrf.mxu0
    %v290 = vadd.f32 0.0, %v289
    %291 = vmatmul.f32.gmra.mxu0 %v264
    %v292 = vpop.f32.mrf.mxu0
    %v293 = vadd.f32 0.0, %v292
    %294 = vmatmul.f32.gmra.mxu0 %v267
    %v295 = vpop.f32.mrf.mxu0
    %v296 = vadd.f32 0.0, %v295
    %297 = vmatmul.f32.gmra.mxu0 %v270
    %v298 = vpop.f32.mrf.mxu0
    %v299 = vadd.f32 0.0, %v298
    %300 = vdwg.mxu0
    %v301 = vpack.c.bf16 %v293, %v290
    %v302 = vpack.c.bf16 %v299, %v296
    %v303 = vld [vmem:[#allocation2] sm:$0xf]
    %v304 = vld [vmem:[#allocation2 + $0x4] sm:$0xf]
    %v305 = vld [vmem:[#allocation2 + $0x8] sm:$0xf]
    %v306 = vld [vmem:[#allocation2 + $0xc] sm:$0xf]
    %v307 = vld [vmem:[#allocation2 + $0x10] sm:$0xf]
    %v308 = vld [vmem:[#allocation2 + $0x14] sm:$0xf]
    %v309 = vld [vmem:[#allocation2 + $0x18] sm:$0xf]
    %v310 = vld [vmem:[#allocation2 + $0x1c] sm:$0xf]
    %v311 = vld [vmem:[#allocation2 + $0x20] sm:$0xf]
    %v312 = vld [vmem:[#allocation2 + $0x24] sm:$0xf]
    %v313 = vld [vmem:[#allocation2 + $0x28] sm:$0xf]
    %v314 = vld [vmem:[#allocation2 + $0x2c] sm:$0xf]
    %v315 = vld [vmem:[#allocation2 + $0x30] sm:$0xf]
    %v316 = vld [vmem:[#allocation2 + $0x34] sm:$0xf]
    %v317 = vld [vmem:[#allocation2 + $0x38] sm:$0xf]
    %v318 = vld [vmem:[#allocation2 + $0x3c] sm:$0xf]
    %s319 = scalar_lea.vmem %s2, 32
    %v320 = vld [vmem:[%s319] sm:$0xff]
    %v321 = vld [vmem:[%s319 + $0x8] sm:$0xff]
    %v322 = vld [vmem:[%s319 + $0x10] sm:$0xff]
    %v323 = vld [vmem:[%s319 + $0x18] sm:$0xff]
    %v325 = vsel %vm259, %v320, 0
    %v328 = vsel %vm259, %v321, 0
    %v331 = vsel %vm259, %v322, 0
    %v334 = vsel %vm259, %v323, 0
    %336 = vmatpush.msra.mxu0 0.0
    %337 = vmatpush.msra.mxu0 0.0
    %338 = vmatpush.msra.mxu0 0.0
    %339 = vmatpush.msra.mxu0 0.0
    %340 = vmatpush.msra.mxu0 0.0
    %341 = vmatpush.msra.mxu0 0.0
    %342 = vmatpush.msra.mxu0 0.0
    %343 = vmatpush.msra.mxu0 0.0
    %344 = vmatpush.msra.mxu0 0.0
    %345 = vmatpush.msra.mxu0 0.0
    %346 = vmatpush.msra.mxu0 0.0
    %347 = vmatpush.msra.mxu0 0.0
    %348 = vmatpush.msra.mxu0 %v254
    %349 = vmatpush.msra.mxu0 %v253
    %350 = vmatpush.msra.mxu0 %v252
    %351 = vmatpush.msra.mxu0 %v251
    %352 = vmatmul.f32.gmra.mxu0 %v325
    %v353 = vpop.f32.mrf.mxu0
    %v354 = vadd.f32 0.0, %v353
    %355 = vmatmul.f32.gmra.mxu0 %v328
    %v356 = vpop.f32.mrf.mxu0
    %v357 = vadd.f32 0.0, %v356
    %358 = vmatmul.f32.gmra.mxu0 %v331
    %v359 = vpop.f32.mrf.mxu0
    %v360 = vadd.f32 0.0, %v359
    %361 = vmatmul.f32.gmra.mxu0 %v334
    %v362 = vpop.f32.mrf.mxu0
    %v363 = vadd.f32 0.0, %v362
    %364 = vdwg.mxu0
    %v365 = vpack.c.bf16 %v357, %v354
    %v366 = vpack.c.bf16 %v363, %v360
    %s367 = scalar_lea.vmem [#allocation2], 64
    %v368 = vld [vmem:[%s367] sm:$0xf]
    %v369 = vld [vmem:[%s367 + $0x4] sm:$0xf]
    %v370 = vld [vmem:[%s367 + $0x8] sm:$0xf]
    %v371 = vld [vmem:[%s367 + $0xc] sm:$0xf]
    %v372 = vld [vmem:[%s367 + $0x10] sm:$0xf]
    %v373 = vld [vmem:[%s367 + $0x14] sm:$0xf]
    %v374 = vld [vmem:[%s367 + $0x18] sm:$0xf]
    %v375 = vld [vmem:[%s367 + $0x1c] sm:$0xf]
    %v376 = vld [vmem:[%s367 + $0x20] sm:$0xf]
    %v377 = vld [vmem:[%s367 + $0x24] sm:$0xf]
    %v378 = vld [vmem:[%s367 + $0x28] sm:$0xf]
    %v379 = vld [vmem:[%s367 + $0x2c] sm:$0xf]
    %v380 = vld [vmem:[%s367 + $0x30] sm:$0xf]
    %v381 = vld [vmem:[%s367 + $0x34] sm:$0xf]
    %v382 = vld [vmem:[%s367 + $0x38] sm:$0xf]
    %v383 = vld [vmem:[%s367 + $0x3c] sm:$0xf]
    %v400 = vunpack.c.l.b16 %v368
    %v401 = vunpack.c.l.b16 %v369
    %v402 = vunpack.c.l.b16 %v370
    %v403 = vunpack.c.l.b16 %v371
    %v404 = vunpack.c.l.b16 %v372
    %v405 = vunpack.c.l.b16 %v373
    %v406 = vunpack.c.l.b16 %v374
    %v407 = vunpack.c.l.b16 %v375
    %v408 = vunpack.c.l.b16 %v376
    %v409 = vunpack.c.l.b16 %v377
    %v410 = vunpack.c.l.b16 %v378
    %v411 = vunpack.c.l.b16 %v379
    %v412 = vunpack.c.l.b16 %v380
    %v413 = vunpack.c.l.b16 %v381
    %v414 = vunpack.c.l.b16 %v382
    %v415 = vunpack.c.l.b16 %v383
    %v416 = vpack.c.b16 %v401, %v400
    %v417 = vpack.c.b16 %v403, %v402
    %v418 = vpack.c.b16 %v405, %v404
    %v419 = vpack.c.b16 %v407, %v406
    %v420 = vpack.c.b16 %v409, %v408
    %v421 = vpack.c.b16 %v411, %v410
    %v422 = vpack.c.b16 %v413, %v412
    %v423 = vpack.c.b16 %v415, %v414
    %432 = vmatpush.bf16.msra.mxu0 %v423
    %433 = vmatpush.bf16.msra.mxu0 %v422
    %434 = vmatpush.bf16.msra.mxu0 %v421
    %435 = vmatpush.bf16.msra.mxu0 %v420
    %436 = vmatpush.bf16.msra.mxu0 %v419
    %437 = vmatpush.bf16.msra.mxu0 %v418
    %438 = vmatpush.bf16.msra.mxu0 %v417
    %439 = vmatpush.bf16.msra.mxu0 %v416
    %440 = vmatmul.bf16.gmra.mxu0 %v365
    %v441 = vpop.f32.mrf.mxu0
    %v442 = vadd.f32 0.0, %v441
    %v443 = vpop.f32.mrf.mxu0
    %v444 = vadd.f32 0.0, %v443
    %445 = vmatmul.bf16.gmra.mxu0 %v366
    %v446 = vpop.f32.mrf.mxu0
    %v447 = vadd.f32 0.0, %v446
    %v448 = vpop.f32.mrf.mxu0
    %v449 = vadd.f32 0.0, %v448
    %450 = vdwg.mxu0
    %v467 = vunpack.c.l.b16 %v303
    %v468 = vunpack.c.l.b16 %v304
    %v469 = vunpack.c.l.b16 %v305
    %v470 = vunpack.c.l.b16 %v306
    %v471 = vunpack.c.l.b16 %v307
    %v472 = vunpack.c.l.b16 %v308
    %v473 = vunpack.c.l.b16 %v309
    %v474 = vunpack.c.l.b16 %v310
    %v475 = vunpack.c.l.b16 %v311
    %v476 = vunpack.c.l.b16 %v312
    %v477 = vunpack.c.l.b16 %v313
    %v478 = vunpack.c.l.b16 %v314
    %v479 = vunpack.c.l.b16 %v315
    %v480 = vunpack.c.l.b16 %v316
    %v481 = vunpack.c.l.b16 %v317
    %v482 = vunpack.c.l.b16 %v318
    %v483 = vpack.c.b16 %v468, %v467
    %v484 = vpack.c.b16 %v470, %v469
    %v485 = vpack.c.b16 %v472, %v471
    %v486 = vpack.c.b16 %v474, %v473
    %v487 = vpack.c.b16 %v476, %v475
    %v488 = vpack.c.b16 %v478, %v477
    %v489 = vpack.c.b16 %v480, %v479
    %v490 = vpack.c.b16 %v482, %v481
    %499 = vmatpush.bf16.msra.mxu0 %v490
    %500 = vmatpush.bf16.msra.mxu0 %v489
    %501 = vmatpush.bf16.msra.mxu0 %v488
    %502 = vmatpush.bf16.msra.mxu0 %v487
    %503 = vmatpush.bf16.msra.mxu0 %v486
    %504 = vmatpush.bf16.msra.mxu0 %v485
    %505 = vmatpush.bf16.msra.mxu0 %v484
    %506 = vmatpush.bf16.msra.mxu0 %v483
    %507 = vmatmul.bf16.gmra.mxu0 %v301
    %v508 = vpop.f32.mrf.mxu0
    %v509 = vadd.f32 %v442, %v508
    %v510 = vpop.f32.mrf.mxu0
    %v511 = vadd.f32 %v444, %v510
    %512 = vmatmul.bf16.gmra.mxu0 %v302
    %v513 = vpop.f32.mrf.mxu0
    %v514 = vadd.f32 %v447, %v513
    %v515 = vpop.f32.mrf.mxu0
    %v516 = vadd.f32 %v449, %v515
    %517 = vdwg.mxu0
    %s518 = scalar_lea.vmem %s2, 64
    %v519 = vld [vmem:[%s518] sm:$0xff]
    %v520 = vld [vmem:[%s518 + $0x8] sm:$0xff]
    %v521 = vld [vmem:[%s518 + $0x10] sm:$0xff]
    %v522 = vld [vmem:[%s518 + $0x18] sm:$0xff]
    %v524 = vsel %vm259, %v519, 0
    %v527 = vsel %vm259, %v520, 0
    %v530 = vsel %vm259, %v521, 0
    %v533 = vsel %vm259, %v522, 0
    %535 = vmatpush.msra.mxu0 0.0
    %536 = vmatpush.msra.mxu0 0.0
    %537 = vmatpush.msra.mxu0 0.0
    %538 = vmatpush.msra.mxu0 0.0
    %539 = vmatpush.msra.mxu0 0.0
    %540 = vmatpush.msra.mxu0 0.0
    %541 = vmatpush.msra.mxu0 0.0
    %542 = vmatpush.msra.mxu0 0.0
    %543 = vmatpush.msra.mxu0 0.0
    %544 = vmatpush.msra.mxu0 0.0
    %545 = vmatpush.msra.mxu0 0.0
    %546 = vmatpush.msra.mxu0 0.0
    %547 = vmatpush.msra.mxu0 %v254
    %548 = vmatpush.msra.mxu0 %v253
    %549 = vmatpush.msra.mxu0 %v252
    %550 = vmatpush.msra.mxu0 %v251
    %551 = vmatmul.f32.gmra.mxu0 %v524
    %v552 = vpop.f32.mrf.mxu0
    %v553 = vadd.f32 0.0, %v552
    %554 = vmatmul.f32.gmra.mxu0 %v527
    %v555 = vpop.f32.mrf.mxu0
    %v556 = vadd.f32 0.0, %v555
    %557 = vmatmul.f32.gmra.mxu0 %v530
    %v558 = vpop.f32.mrf.mxu0
    %v559 = vadd.f32 0.0, %v558
    %560 = vmatmul.f32.gmra.mxu0 %v533
    %v561 = vpop.f32.mrf.mxu0
    %v562 = vadd.f32 0.0, %v561
    %563 = vdwg.mxu0
    %v564 = vpack.c.bf16 %v556, %v553
    %v565 = vpack.c.bf16 %v562, %v559
    %s566 = scalar_lea.vmem [#allocation2], 128
    %v567 = vld [vmem:[%s566] sm:$0xf]
    %v568 = vld [vmem:[%s566 + $0x4] sm:$0xf]
    %v569 = vld [vmem:[%s566 + $0x8] sm:$0xf]
    %v570 = vld [vmem:[%s566 + $0xc] sm:$0xf]
    %v571 = vld [vmem:[%s566 + $0x10] sm:$0xf]
    %v572 = vld [vmem:[%s566 + $0x14] sm:$0xf]
    %v573 = vld [vmem:[%s566 + $0x18] sm:$0xf]
    %v574 = vld [vmem:[%s566 + $0x1c] sm:$0xf]
    %v575 = vld [vmem:[%s566 + $0x20] sm:$0xf]
    %v576 = vld [vmem:[%s566 + $0x24] sm:$0xf]
    %v577 = vld [vmem:[%s566 + $0x28] sm:$0xf]
    %v578 = vld [vmem:[%s566 + $0x2c] sm:$0xf]
    %v579 = vld [vmem:[%s566 + $0x30] sm:$0xf]
    %v580 = vld [vmem:[%s566 + $0x34] sm:$0xf]
    %v581 = vld [vmem:[%s566 + $0x38] sm:$0xf]
    %v582 = vld [vmem:[%s566 + $0x3c] sm:$0xf]
    %v599 = vunpack.c.l.b16 %v567
    %v600 = vunpack.c.l.b16 %v568
    %v601 = vunpack.c.l.b16 %v569
    %v602 = vunpack.c.l.b16 %v570
    %v603 = vunpack.c.l.b16 %v571
    %v604 = vunpack.c.l.b16 %v572
    %v605 = vunpack.c.l.b16 %v573
    %v606 = vunpack.c.l.b16 %v574
    %v607 = vunpack.c.l.b16 %v575
    %v608 = vunpack.c.l.b16 %v576
    %v609 = vunpack.c.l.b16 %v577
    %v610 = vunpack.c.l.b16 %v578
    %v611 = vunpack.c.l.b16 %v579
    %v612 = vunpack.c.l.b16 %v580
    %v613 = vunpack.c.l.b16 %v581
    %v614 = vunpack.c.l.b16 %v582
    %v615 = vpack.c.b16 %v600, %v599
    %v616 = vpack.c.b16 %v602, %v601
    %v617 = vpack.c.b16 %v604, %v603
    %v618 = vpack.c.b16 %v606, %v605
    %v619 = vpack.c.b16 %v608, %v607
    %v620 = vpack.c.b16 %v610, %v609
    %v621 = vpack.c.b16 %v612, %v611
    %v622 = vpack.c.b16 %v614, %v613
    %631 = vmatpush.bf16.msra.mxu0 %v622
    %632 = vmatpush.bf16.msra.mxu0 %v621
    %633 = vmatpush.bf16.msra.mxu0 %v620
    %634 = vmatpush.bf16.msra.mxu0 %v619
    %635 = vmatpush.bf16.msra.mxu0 %v618
    %636 = vmatpush.bf16.msra.mxu0 %v617
    %637 = vmatpush.bf16.msra.mxu0 %v616
    %638 = vmatpush.bf16.msra.mxu0 %v615
    %639 = vmatmul.bf16.gmra.mxu0 %v564
    %v640 = vpop.f32.mrf.mxu0
    %v641 = vadd.f32 0.0, %v640
    %v642 = vpop.f32.mrf.mxu0
    %v643 = vadd.f32 0.0, %v642
    %644 = vmatmul.bf16.gmra.mxu0 %v565
    %v645 = vpop.f32.mrf.mxu0
    %v646 = vadd.f32 0.0, %v645
    %v647 = vpop.f32.mrf.mxu0
    %v648 = vadd.f32 0.0, %v647
    %649 = vdwg.mxu0
    %v650 = vadd.f32 %v509, %v641
    %v651 = vadd.f32 %v511, %v643
    %v652 = vadd.f32 %v514, %v646
    %v653 = vadd.f32 %v516, %v648
    %v654 = vld [vmem:[#allocation19] sm:$0x3]
    %v655 = vld [vmem:[#allocation11] sm:$0xff]
    %v656 = vld [vmem:[#allocation11 + $0x8] sm:$0xff]
    %v657 = vld [vmem:[#allocation11 + $0x10] sm:$0xff]
    %v658 = vld [vmem:[#allocation11 + $0x18] sm:$0xff]
    %v659 = vld [vmem:[#allocation11 + $0x20] sm:$0xff]
    %v660 = vld [vmem:[#allocation11 + $0x28] sm:$0xff]
    %v661 = vld [vmem:[#allocation11 + $0x30] sm:$0xff]
    %v662 = vld [vmem:[#allocation11 + $0x38] sm:$0xff]
    %v663 = vld [vmem:[#allocation11 + $0x40] sm:$0xff]
    %v664 = vld [vmem:[#allocation11 + $0x48] sm:$0xff]
    %v665 = vld [vmem:[#allocation11 + $0x50] sm:$0xff]
    %v666 = vld [vmem:[#allocation11 + $0x58] sm:$0xff]
    %v667 = vld [vmem:[#allocation11 + $0x60] sm:$0xff]
    %v668 = vld [vmem:[#allocation11 + $0x68] sm:$0xff]
    %v669 = vld [vmem:[#allocation11 + $0x70] sm:$0xff]
    %v670 = vld [vmem:[#allocation11 + $0x78] sm:$0xff]
    %v671 = vld [vmem:[%s8] sm:$0xff]
    %v672 = vadd.f32 %v650, %v651
    %v673 = vadd.f32 %v672, %v652
    %v674 = vadd.f32 %v673, %v653
    %v675 = vrot.slane %v674, 4
    %v676 = vadd.f32 %v674, %v675
    %v677 = vrot.slane %v676, 2
    %v678 = vadd.f32 %v676, %v677
    %v679 = vrot.slane %v678, 1
    %v680 = vadd.f32 %v678, %v679
    %681 = vmatpush.msra.mxu0 %v670
    %682 = vmatpush.msra.mxu0 %v669
    %683 = vmatpush.msra.mxu0 %v668
    %684 = vmatpush.msra.mxu0 %v667
    %685 = vmatpush.msra.mxu0 %v666
    %686 = vmatpush.msra.mxu0 %v665
    %687 = vmatpush.msra.mxu0 %v664
    %688 = vmatpush.msra.mxu0 %v663
    %689 = vmatpush.msra.mxu0 %v662
    %690 = vmatpush.msra.mxu0 %v661
    %691 = vmatpush.msra.mxu0 %v660
    %692 = vmatpush.msra.mxu0 %v659
    %693 = vmatpush.msra.mxu0 %v658
    %694 = vmatpush.msra.mxu0 %v657
    %695 = vmatpush.msra.mxu0 %v656
    %696 = vmatpush.msra.mxu0 %v655
    %697 = vmatmul.f32.gmra.mxu0 %v680
    %v698 = vpop.f32.mrf.mxu0
    %v699 = vadd.f32 0.0, %v698
    %700 = vdwg.mxu0
    %v701 = vmul.f32 %v699, 0.001953125
    %vm702 = vcmask 64512
    %v704 = vsel %vm702, %v701, 0
    %706 = vmatpush.msra.mxu0 0.0
    %707 = vmatpush.msra.mxu0 0.0
    %708 = vmatpush.msra.mxu0 0.0
    %709 = vmatpush.msra.mxu0 0.0
    %710 = vmatpush.msra.mxu0 0.0
    %711 = vmatpush.msra.mxu0 0.0
    %712 = vmatpush.msra.mxu0 0.0
    %713 = vmatpush.msra.mxu0 0.0
    %714 = vmatpush.msra.mxu0 0.0
    %715 = vmatpush.msra.mxu0 0.0
    %716 = vmatpush.msra.mxu0 0.0
    %717 = vmatpush.msra.mxu0 0.0
    %718 = vmatpush.msra.mxu0 0.0
    %719 = vmatpush.msra.mxu0 0.0
    %720 = vmatpush.msra.mxu0 0.0
    %721 = vmatpush.msra.mxu0 %v671
    %722 = vmatmul.f32.gmra.mxu0 %v704
    %v723 = vpop.f32.mrf.mxu0
    %v724 = vadd.f32 0.0, %v723
    %725 = vdwg.mxu0
    %v726 = vperm.slane %v724, 0
    %v727 = vsub.f32 %v650, %v726
    %v728 = vsub.f32 %v651, %v726
    %v729 = vsub.f32 %v652, %v726
    %v730 = vsub.f32 %v653, %v726
    %v731 = vmul.f32 %v727, %v727
    %v732 = vmul.f32 %v728, %v728
    %v733 = vmul.f32 %v729, %v729
    %v734 = vmul.f32 %v730, %v730
    %v735 = vadd.f32 %v731, %v732
    %v736 = vadd.f32 %v735, %v733
    %v737 = vadd.f32 %v736, %v734
    %v738 = vrot.slane %v737, 4
    %v739 = vadd.f32 %v737, %v738
    %v740 = vrot.slane %v739, 2
    %v741 = vadd.f32 %v739, %v740
    %v742 = vrot.slane %v741, 1
    %v743 = vadd.f32 %v741, %v742
    %744 = vmatpush.msra.mxu0 %v670
    %745 = vmatpush.msra.mxu0 %v669
    %746 = vmatpush.msra.mxu0 %v668
    %747 = vmatpush.msra.mxu0 %v667
    %748 = vmatpush.msra.mxu0 %v666
    %749 = vmatpush.msra.mxu0 %v665
    %750 = vmatpush.msra.mxu0 %v664
    %751 = vmatpush.msra.mxu0 %v663
    %752 = vmatpush.msra.mxu0 %v662
    %753 = vmatpush.msra.mxu0 %v661
    %754 = vmatpush.msra.mxu0 %v660
    %755 = vmatpush.msra.mxu0 %v659
    %756 = vmatpush.msra.mxu0 %v658
    %757 = vmatpush.msra.mxu0 %v657
    %758 = vmatpush.msra.mxu0 %v656
    %759 = vmatpush.msra.mxu0 %v655
    %760 = vmatmul.f32.gmra.mxu0 %v743
    %v761 = vpop.f32.mrf.mxu0
    %v762 = vadd.f32 0.0, %v761
    %763 = vdwg.mxu0
    %v764 = vmul.f32 %v762, 0.001953125
    %v765 = vadd.f32 %v764, 1e-05
    %v766 = vrsqrt.pop %v765
    %v767 = vmul.f32 %v766, %v765
    %v768 = vmul.f32 %v767, %v766
    %v769 = vmul.f32 0.5, %v768
    %v770 = vsub.f32 1.5, %v769
    %v771 = vmul.f32 %v766, %v770
    %vm772 = vweird.f32 %v765
    %vm773 = vweird.f32 %v766
    %vm774 = vmor %vm772, %vm773
    %v775 = vsel %vm774, %v766, %v771
    %v776 = vmul.f32 %v654, %v775
    %v777 = vmul.f32 %v701, %v776
    %v779 = vrot.slane %v777, 7
    %v781 = vsub.f32 %v654, %v779
    %v783 = vsel %vm702, %v776, 0
    %785 = vmatpush.msra.mxu0 0.0
    %786 = vmatpush.msra.mxu0 0.0
    %787 = vmatpush.msra.mxu0 0.0
    %788 = vmatpush.msra.mxu0 0.0
    %789 = vmatpush.msra.mxu0 0.0
    %790 = vmatpush.msra.mxu0 0.0
    %791 = vmatpush.msra.mxu0 0.0
    %792 = vmatpush.msra.mxu0 0.0
    %793 = vmatpush.msra.mxu0 0.0
    %794 = vmatpush.msra.mxu0 0.0
    %795 = vmatpush.msra.mxu0 0.0
    %796 = vmatpush.msra.mxu0 0.0
    %797 = vmatpush.msra.mxu0 0.0
    %798 = vmatpush.msra.mxu0 0.0
    %799 = vmatpush.msra.mxu0 0.0
    %800 = vmatpush.msra.mxu0 %v671
    %801 = vmatmul.f32.gmra.mxu0 %v783
    %v802 = vpop.f32.mrf.mxu0
    %v803 = vadd.f32 0.0, %v802
    %804 = vdwg.mxu0
    %v805 = vperm.slane %v803, 0
    %v806 = vmul.f32 %v650, %v805
    %v807 = vmul.f32 %v651, %v805
    %v808 = vmul.f32 %v652, %v805
    %v809 = vmul.f32 %v653, %v805
    %v811 = vrot.slane %v781, 1
    %v812 = vsel %vm702, %v811, 0
    %814 = vmatpush.msra.mxu0 0.0
    %815 = vmatpush.msra.mxu0 0.0
    %816 = vmatpush.msra.mxu0 0.0
    %817 = vmatpush.msra.mxu0 0.0
    %818 = vmatpush.msra.mxu0 0.0
    %819 = vmatpush.msra.mxu0 0.0
    %820 = vmatpush.msra.mxu0 0.0
    %821 = vmatpush.msra.mxu0 0.0
    %822 = vmatpush.msra.mxu0 0.0
    %823 = vmatpush.msra.mxu0 0.0
    %824 = vmatpush.msra.mxu0 0.0
    %825 = vmatpush.msra.mxu0 0.0
    %826 = vmatpush.msra.mxu0 0.0
    %827 = vmatpush.msra.mxu0 0.0
    %828 = vmatpush.msra.mxu0 0.0
    %829 = vmatpush.msra.mxu0 %v671
    %830 = vmatmul.f32.gmra.mxu0 %v812
    %v831 = vpop.f32.mrf.mxu0
    %v832 = vadd.f32 0.0, %v831
    %833 = vdwg.mxu0
    %v834 = vperm.slane %v832, 0
    %v835 = vadd.f32 %v806, %v834
    %v836 = vadd.f32 %v807, %v834
    %v837 = vadd.f32 %v808, %v834
    %v838 = vadd.f32 %v809, %v834
    %v839 = vmax.f32 %v835, 0.0
    %v840 = vmax.f32 %v836, 0.0
    %v841 = vmax.f32 %v837, 0.0
    %v842 = vmax.f32 %v838, 0.0
    %843 = vmatpush.msra.mxu0 0.0
    %844 = vmatpush.msra.mxu0 0.0
    %845 = vmatpush.msra.mxu0 0.0
    %846 = vmatpush.msra.mxu0 0.0
    %847 = vmatpush.msra.mxu0 0.0
    %848 = vmatpush.msra.mxu0 0.0
    %849 = vmatpush.msra.mxu0 0.0
    %850 = vmatpush.msra.mxu0 0.0
    %851 = vmatpush.msra.mxu0 0.0
    %852 = vmatpush.msra.mxu0 0.0
    %853 = vmatpush.msra.mxu0 0.0
    %854 = vmatpush.msra.mxu0 0.0
    %855 = vmatpush.msra.mxu0 %v842
    %856 = vmatpush.msra.mxu0 %v841
    %857 = vmatpush.msra.mxu0 %v840
    %858 = vmatpush.msra.mxu0 %v839
    %859 = vmatmul.f32.gmra.mxu0 %v261
    %v860 = vpop.f32.mrf.mxu0
    %v861 = vadd.f32 0.0, %v860
    %862 = vmatmul.f32.gmra.mxu0 %v264
    %v863 = vpop.f32.mrf.mxu0
    %v864 = vadd.f32 0.0, %v863
    %865 = vmatmul.f32.gmra.mxu0 %v267
    %v866 = vpop.f32.mrf.mxu0
    %v867 = vadd.f32 0.0, %v866
    %868 = vmatmul.f32.gmra.mxu0 %v270
    %v869 = vpop.f32.mrf.mxu0
    %v870 = vadd.f32 0.0, %v869
    %871 = vdwg.mxu0
    %v872 = vpack.c.bf16 %v864, %v861
    %v873 = vpack.c.bf16 %v870, %v867
    %s874 = scalar_lea.vmem [#allocation2], 192
    %v875 = vld [vmem:[%s874] sm:$0xf]
    %v876 = vld [vmem:[%s874 + $0x4] sm:$0xf]
    %v877 = vld [vmem:[%s874 + $0x8] sm:$0xf]
    %v878 = vld [vmem:[%s874 + $0xc] sm:$0xf]
    %v879 = vld [vmem:[%s874 + $0x10] sm:$0xf]
    %v880 = vld [vmem:[%s874 + $0x14] sm:$0xf]
    %v881 = vld [vmem:[%s874 + $0x18] sm:$0xf]
    %v882 = vld [vmem:[%s874 + $0x1c] sm:$0xf]
    %v883 = vld [vmem:[%s874 + $0x20] sm:$0xf]
    %v884 = vld [vmem:[%s874 + $0x24] sm:$0xf]
    %v885 = vld [vmem:[%s874 + $0x28] sm:$0xf]
    %v886 = vld [vmem:[%s874 + $0x2c] sm:$0xf]
    %v887 = vld [vmem:[%s874 + $0x30] sm:$0xf]
    %v888 = vld [vmem:[%s874 + $0x34] sm:$0xf]
    %v889 = vld [vmem:[%s874 + $0x38] sm:$0xf]
    %v890 = vld [vmem:[%s874 + $0x3c] sm:$0xf]
    %891 = vmatpush.msra.mxu0 0.0
    %892 = vmatpush.msra.mxu0 0.0
    %893 = vmatpush.msra.mxu0 0.0
    %894 = vmatpush.msra.mxu0 0.0
    %895 = vmatpush.msra.mxu0 0.0
    %896 = vmatpush.msra.mxu0 0.0
    %897 = vmatpush.msra.mxu0 0.0
    %898 = vmatpush.msra.mxu0 0.0
    %899 = vmatpush.msra.mxu0 0.0
    %900 = vmatpush.msra.mxu0 0.0
    %901 = vmatpush.msra.mxu0 0.0
    %902 = vmatpush.msra.mxu0 0.0
    %903 = vmatpush.msra.mxu0 %v842
    %904 = vmatpush.msra.mxu0 %v841
    %905 = vmatpush.msra.mxu0 %v840
    %906 = vmatpush.msra.mxu0 %v839
    %907 = vmatmul.f32.gmra.mxu0 %v325
    %v908 = vpop.f32.mrf.mxu0
    %v909 = vadd.f32 0.0, %v908
    %910 = vmatmul.f32.gmra.mxu0 %v328
    %v911 = vpop.f32.mrf.mxu0
    %v912 = vadd.f32 0.0, %v911
    %913 = vmatmul.f32.gmra.mxu0 %v331
    %v914 = vpop.f32.mrf.mxu0
    %v915 = vadd.f32 0.0, %v914
    %916 = vmatmul.f32.gmra.mxu0 %v334
    %v917 = vpop.f32.mrf.mxu0
    %v918 = vadd.f32 0.0, %v917
    %919 = vdwg.mxu0
    %v920 = vpack.c.bf16 %v912, %v909
    %v921 = vpack.c.bf16 %v918, %v915
    %s922 = scalar_lea.vmem [#allocation2], 256
    %v923 = vld [vmem:[%s922] sm:$0xf]
    %v924 = vld [vmem:[%s922 + $0x4] sm:$0xf]
    %v925 = vld [vmem:[%s922 + $0x8] sm:$0xf]
    %v926 = vld [vmem:[%s922 + $0xc] sm:$0xf]
    %v927 = vld [vmem:[%s922 + $0x10] sm:$0xf]
    %v928 = vld [vmem:[%s922 + $0x14] sm:$0xf]
    %v929 = vld [vmem:[%s922 + $0x18] sm:$0xf]
    %v930 = vld [vmem:[%s922 + $0x1c] sm:$0xf]
    %v931 = vld [vmem:[%s922 + $0x20] sm:$0xf]
    %v932 = vld [vmem:[%s922 + $0x24] sm:$0xf]
    %v933 = vld [vmem:[%s922 + $0x28] sm:$0xf]
    %v934 = vld [vmem:[%s922 + $0x2c] sm:$0xf]
    %v935 = vld [vmem:[%s922 + $0x30] sm:$0xf]
    %v936 = vld [vmem:[%s922 + $0x34] sm:$0xf]
    %v937 = vld [vmem:[%s922 + $0x38] sm:$0xf]
    %v938 = vld [vmem:[%s922 + $0x3c] sm:$0xf]
    %v955 = vunpack.c.l.b16 %v923
    %v956 = vunpack.c.l.b16 %v924
    %v957 = vunpack.c.l.b16 %v925
    %v958 = vunpack.c.l.b16 %v926
    %v959 = vunpack.c.l.b16 %v927
    %v960 = vunpack.c.l.b16 %v928
    %v961 = vunpack.c.l.b16 %v929
    %v962 = vunpack.c.l.b16 %v930
    %v963 = vunpack.c.l.b16 %v931
    %v964 = vunpack.c.l.b16 %v932
    %v965 = vunpack.c.l.b16 %v933
    %v966 = vunpack.c.l.b16 %v934
    %v967 = vunpack.c.l.b16 %v935
    %v968 = vunpack.c.l.b16 %v936
    %v969 = vunpack.c.l.b16 %v937
    %v970 = vunpack.c.l.b16 %v938
    %v971 = vpack.c.b16 %v956, %v955
    %v972 = vpack.c.b16 %v958, %v957
    %v973 = vpack.c.b16 %v960, %v959
    %v974 = vpack.c.b16 %v962, %v961
    %v975 = vpack.c.b16 %v964, %v963
    %v976 = vpack.c.b16 %v966, %v965
    %v977 = vpack.c.b16 %v968, %v967
    %v978 = vpack.c.b16 %v970, %v969
    %987 = vmatpush.bf16.msra.mxu0 %v978
    %988 = vmatpush.bf16.msra.mxu0 %v977
    %989 = vmatpush.bf16.msra.mxu0 %v976
    %990 = vmatpush.bf16.msra.mxu0 %v975
    %991 = vmatpush.bf16.msra.mxu0 %v974
    %992 = vmatpush.bf16.msra.mxu0 %v973
    %993 = vmatpush.bf16.msra.mxu0 %v972
    %994 = vmatpush.bf16.msra.mxu0 %v971
    %995 = vmatmul.bf16.gmra.mxu0 %v920
    %v996 = vpop.f32.mrf.mxu0
    %v997 = vadd.f32 0.0, %v996
    %v998 = vpop.f32.mrf.mxu0
    %v999 = vadd.f32 0.0, %v998
    %1000 = vmatmul.bf16.gmra.mxu0 %v921
    %v1001 = vpop.f32.mrf.mxu0
    %v1002 = vadd.f32 0.0, %v1001
    %v1003 = vpop.f32.mrf.mxu0
    %v1004 = vadd.f32 0.0, %v1003
    %1005 = vdwg.mxu0
    %v1022 = vunpack.c.l.b16 %v875
    %v1023 = vunpack.c.l.b16 %v876
    %v1024 = vunpack.c.l.b16 %v877
    %v1025 = vunpack.c.l.b16 %v878
    %v1026 = vunpack.c.l.b16 %v879
    %v1027 = vunpack.c.l.b16 %v880
    %v1028 = vunpack.c.l.b16 %v881
    %v1029 = vunpack.c.l.b16 %v882
    %v1030 = vunpack.c.l.b16 %v883
    %v1031 = vunpack.c.l.b16 %v884
    %v1032 = vunpack.c.l.b16 %v885
    %v1033 = vunpack.c.l.b16 %v886
    %v1034 = vunpack.c.l.b16 %v887
    %v1035 = vunpack.c.l.b16 %v888
    %v1036 = vunpack.c.l.b16 %v889
    %v1037 = vunpack.c.l.b16 %v890
    %v1038 = vpack.c.b16 %v1023, %v1022
    %v1039 = vpack.c.b16 %v1025, %v1024
    %v1040 = vpack.c.b16 %v1027, %v1026
    %v1041 = vpack.c.b16 %v1029, %v1028
    %v1042 = vpack.c.b16 %v1031, %v1030
    %v1043 = vpack.c.b16 %v1033, %v1032
    %v1044 = vpack.c.b16 %v1035, %v1034
    %v1045 = vpack.c.b16 %v1037, %v1036
    %1054 = vmatpush.bf16.msra.mxu0 %v1045
    %1055 = vmatpush.bf16.msra.mxu0 %v1044
    %1056 = vmatpush.bf16.msra.mxu0 %v1043
    %1057 = vmatpush.bf16.msra.mxu0 %v1042
    %1058 = vmatpush.bf16.msra.mxu0 %v1041
    %1059 = vmatpush.bf16.msra.mxu0 %v1040
    %1060 = vmatpush.bf16.msra.mxu0 %v1039
    %1061 = vmatpush.bf16.msra.mxu0 %v1038
    %1062 = vmatmul.bf16.gmra.mxu0 %v872
    %v1063 = vpop.f32.mrf.mxu0
    %v1064 = vadd.f32 %v997, %v1063
    %v1065 = vpop.f32.mrf.mxu0
    %v1066 = vadd.f32 %v999, %v1065
    %1067 = vmatmul.bf16.gmra.mxu0 %v873
    %v1068 = vpop.f32.mrf.mxu0
    %v1069 = vadd.f32 %v1002, %v1068
    %v1070 = vpop.f32.mrf.mxu0
    %v1071 = vadd.f32 %v1004, %v1070
    %1072 = vdwg.mxu0
    %1073 = vmatpush.msra.mxu0 0.0
    %1074 = vmatpush.msra.mxu0 0.0
    %1075 = vmatpush.msra.mxu0 0.0
    %1076 = vmatpush.msra.mxu0 0.0
    %1077 = vmatpush.msra.mxu0 0.0
    %1078 = vmatpush.msra.mxu0 0.0
    %1079 = vmatpush.msra.mxu0 0.0
    %1080 = vmatpush.msra.mxu0 0.0
    %1081 = vmatpush.msra.mxu0 0.0
    %1082 = vmatpush.msra.mxu0 0.0
    %1083 = vmatpush.msra.mxu0 0.0
    %1084 = vmatpush.msra.mxu0 0.0
    %1085 = vmatpush.msra.mxu0 %v842
    %1086 = vmatpush.msra.mxu0 %v841
    %1087 = vmatpush.msra.mxu0 %v840
    %1088 = vmatpush.msra.mxu0 %v839
    %1089 = vmatmul.f32.gmra.mxu0 %v524
    %v1090 = vpop.f32.mrf.mxu0
    %v1091 = vadd.f32 0.0, %v1090
    %1092 = vmatmul.f32.gmra.mxu0 %v527
    %v1093 = vpop.f32.mrf.mxu0
    %v1094 = vadd.f32 0.0, %v1093
    %1095 = vmatmul.f32.gmra.mxu0 %v530
    %v1096 = vpop.f32.mrf.mxu0
    %v1097 = vadd.f32 0.0, %v1096
    %1098 = vmatmul.f32.gmra.mxu0 %v533
    %v1099 = vpop.f32.mrf.mxu0
    %v1100 = vadd.f32 0.0, %v1099
    %1101 = vdwg.mxu0
    %v1102 = vpack.c.bf16 %v1094, %v1091
    %v1103 = vpack.c.bf16 %v1100, %v1097
    %s1104 = scalar_lea.vmem [#allocation2], 320
    %v1105 = vld [vmem:[%s1104] sm:$0xf]
    %v1106 = vld [vmem:[%s1104 + $0x4] sm:$0xf]
    %v1107 = vld [vmem:[%s1104 + $0x8] sm:$0xf]
    %v1108 = vld [vmem:[%s1104 + $0xc] sm:$0xf]
    %v1109 = vld [vmem:[%s1104 + $0x10] sm:$0xf]
    %v1110 = vld [vmem:[%s1104 + $0x14] sm:$0xf]
    %v1111 = vld [vmem:[%s1104 + $0x18] sm:$0xf]
    %v1112 = vld [vmem:[%s1104 + $0x1c] sm:$0xf]
    %v1113 = vld [vmem:[%s1104 + $0x20] sm:$0xf]
    %v1114 = vld [vmem:[%s1104 + $0x24] sm:$0xf]
    %v1115 = vld [vmem:[%s1104 + $0x28] sm:$0xf]
    %v1116 = vld [vmem:[%s1104 + $0x2c] sm:$0xf]
    %v1117 = vld [vmem:[%s1104 + $0x30] sm:$0xf]
    %v1118 = vld [vmem:[%s1104 + $0x34] sm:$0xf]
    %v1119 = vld [vmem:[%s1104 + $0x38] sm:$0xf]
    %v1120 = vld [vmem:[%s1104 + $0x3c] sm:$0xf]
    %v1137 = vunpack.c.l.b16 %v1105
    %v1138 = vunpack.c.l.b16 %v1106
    %v1139 = vunpack.c.l.b16 %v1107
    %v1140 = vunpack.c.l.b16 %v1108
    %v1141 = vunpack.c.l.b16 %v1109
    %v1142 = vunpack.c.l.b16 %v1110
    %v1143 = vunpack.c.l.b16 %v1111
    %v1144 = vunpack.c.l.b16 %v1112
    %v1145 = vunpack.c.l.b16 %v1113
    %v1146 = vunpack.c.l.b16 %v1114
    %v1147 = vunpack.c.l.b16 %v1115
    %v1148 = vunpack.c.l.b16 %v1116
    %v1149 = vunpack.c.l.b16 %v1117
    %v1150 = vunpack.c.l.b16 %v1118
    %v1151 = vunpack.c.l.b16 %v1119
    %v1152 = vunpack.c.l.b16 %v1120
    %v1153 = vpack.c.b16 %v1138, %v1137
    %v1154 = vpack.c.b16 %v1140, %v1139
    %v1155 = vpack.c.b16 %v1142, %v1141
    %v1156 = vpack.c.b16 %v1144, %v1143
    %v1157 = vpack.c.b16 %v1146, %v1145
    %v1158 = vpack.c.b16 %v1148, %v1147
    %v1159 = vpack.c.b16 %v1150, %v1149
    %v1160 = vpack.c.b16 %v1152, %v1151
    %1169 = vmatpush.bf16.msra.mxu0 %v1160
    %1170 = vmatpush.bf16.msra.mxu0 %v1159
    %1171 = vmatpush.bf16.msra.mxu0 %v1158
    %1172 = vmatpush.bf16.msra.mxu0 %v1157
    %1173 = vmatpush.bf16.msra.mxu0 %v1156
    %1174 = vmatpush.bf16.msra.mxu0 %v1155
    %1175 = vmatpush.bf16.msra.mxu0 %v1154
    %1176 = vmatpush.bf16.msra.mxu0 %v1153
    %1177 = vmatmul.bf16.gmra.mxu0 %v1102
    %v1178 = vpop.f32.mrf.mxu0
    %v1179 = vadd.f32 0.0, %v1178
    %v1180 = vpop.f32.mrf.mxu0
    %v1181 = vadd.f32 0.0, %v1180
    %1182 = vmatmul.bf16.gmra.mxu0 %v1103
    %v1183 = vpop.f32.mrf.mxu0
    %v1184 = vadd.f32 0.0, %v1183
    %v1185 = vpop.f32.mrf.mxu0
    %v1186 = vadd.f32 0.0, %v1185
    %1187 = vdwg.mxu0
    %v1188 = vadd.f32 %v1064, %v1179
    %v1189 = vadd.f32 %v1066, %v1181
    %v1190 = vadd.f32 %v1069, %v1184
    %v1191 = vadd.f32 %v1071, %v1186
    %s1192 = scalar_lea.vmem [#allocation19], 2
    %v1193 = vld [vmem:[%s1192] sm:$0x3]
    %v1194 = vadd.f32 %v1188, %v1189
    %v1195 = vadd.f32 %v1194, %v1190
    %v1196 = vadd.f32 %v1195, %v1191
    %v1197 = vrot.slane %v1196, 4
    %v1198 = vadd.f32 %v1196, %v1197
    %v1199 = vrot.slane %v1198, 2
    %v1200 = vadd.f32 %v1198, %v1199
    %v1201 = vrot.slane %v1200, 1
    %v1202 = vadd.f32 %v1200, %v1201
    %1203 = vmatpush.msra.mxu0 %v670
    %1204 = vmatpush.msra.mxu0 %v669
    %1205 = vmatpush.msra.mxu0 %v668
    %1206 = vmatpush.msra.mxu0 %v667
    %1207 = vmatpush.msra.mxu0 %v666
    %1208 = vmatpush.msra.mxu0 %v665
    %1209 = vmatpush.msra.mxu0 %v664
    %1210 = vmatpush.msra.mxu0 %v663
    %1211 = vmatpush.msra.mxu0 %v662
    %1212 = vmatpush.msra.mxu0 %v661
    %1213 = vmatpush.msra.mxu0 %v660
    %1214 = vmatpush.msra.mxu0 %v659
    %1215 = vmatpush.msra.mxu0 %v658
    %1216 = vmatpush.msra.mxu0 %v657
    %1217 = vmatpush.msra.mxu0 %v656
    %1218 = vmatpush.msra.mxu0 %v655
    %1219 = vmatmul.f32.gmra.mxu0 %v1202
    %v1220 = vpop.f32.mrf.mxu0
    %v1221 = vadd.f32 0.0, %v1220
    %1222 = vdwg.mxu0
    %v1223 = vmul.f32 %v1221, 0.001953125
    %v1225 = vsel %vm702, %v1223, 0
    %1227 = vmatpush.msra.mxu0 0.0
    %1228 = vmatpush.msra.mxu0 0.0
    %1229 = vmatpush.msra.mxu0 0.0
    %1230 = vmatpush.msra.mxu0 0.0
    %1231 = vmatpush.msra.mxu0 0.0
    %1232 = vmatpush.msra.mxu0 0.0
    %1233 = vmatpush.msra.mxu0 0.0
    %1234 = vmatpush.msra.mxu0 0.0
    %1235 = vmatpush.msra.mxu0 0.0
    %1236 = vmatpush.msra.mxu0 0.0
    %1237 = vmatpush.msra.mxu0 0.0
    %1238 = vmatpush.msra.mxu0 0.0
    %1239 = vmatpush.msra.mxu0 0.0
    %1240 = vmatpush.msra.mxu0 0.0
    %1241 = vmatpush.msra.mxu0 0.0
    %1242 = vmatpush.msra.mxu0 %v671
    %1243 = vmatmul.f32.gmra.mxu0 %v1225
    %v1244 = vpop.f32.mrf.mxu0
    %v1245 = vadd.f32 0.0, %v1244
    %1246 = vdwg.mxu0
    %v1247 = vperm.slane %v1245, 0
    %v1248 = vsub.f32 %v1188, %v1247
    %v1249 = vsub.f32 %v1189, %v1247
    %v1250 = vsub.f32 %v1190, %v1247
    %v1251 = vsub.f32 %v1191, %v1247
    %v1252 = vmul.f32 %v1248, %v1248
    %v1253 = vmul.f32 %v1249, %v1249
    %v1254 = vmul.f32 %v1250, %v1250
    %v1255 = vmul.f32 %v1251, %v1251
    %v1256 = vadd.f32 %v1252, %v1253
    %v1257 = vadd.f32 %v1256, %v1254
    %v1258 = vadd.f32 %v1257, %v1255
    %v1259 = vrot.slane %v1258, 4
    %v1260 = vadd.f32 %v1258, %v1259
    %v1261 = vrot.slane %v1260, 2
    %v1262 = vadd.f32 %v1260, %v1261
    %v1263 = vrot.slane %v1262, 1
    %v1264 = vadd.f32 %v1262, %v1263
    %1265 = vmatpush.msra.mxu0 %v670
    %1266 = vmatpush.msra.mxu0 %v669
    %1267 = vmatpush.msra.mxu0 %v668
    %1268 = vmatpush.msra.mxu0 %v667
    %1269 = vmatpush.msra.mxu0 %v666
    %1270 = vmatpush.msra.mxu0 %v665
    %1271 = vmatpush.msra.mxu0 %v664
    %1272 = vmatpush.msra.mxu0 %v663
    %1273 = vmatpush.msra.mxu0 %v662
    %1274 = vmatpush.msra.mxu0 %v661
    %1275 = vmatpush.msra.mxu0 %v660
    %1276 = vmatpush.msra.mxu0 %v659
    %1277 = vmatpush.msra.mxu0 %v658
    %1278 = vmatpush.msra.mxu0 %v657
    %1279 = vmatpush.msra.mxu0 %v656
    %1280 = vmatpush.msra.mxu0 %v655
    %1281 = vmatmul.f32.gmra.mxu0 %v1264
    %v1282 = vpop.f32.mrf.mxu0
    %v1283 = vadd.f32 0.0, %v1282
    %1284 = vdwg.mxu0
    %v1285 = vmul.f32 %v1283, 0.001953125
    %v1286 = vadd.f32 %v1285, 1e-05
    %v1287 = vrsqrt.pop %v1286
    %v1288 = vmul.f32 %v1287, %v1286
    %v1289 = vmul.f32 %v1288, %v1287
    %v1290 = vmul.f32 0.5, %v1289
    %v1291 = vsub.f32 1.5, %v1290
    %v1292 = vmul.f32 %v1287, %v1291
    %vm1293 = vweird.f32 %v1286
    %vm1294 = vweird.f32 %v1287
    %vm1295 = vmor %vm1293, %vm1294
    %v1296 = vsel %vm1295, %v1287, %v1292
    %v1297 = vmul.f32 %v1193, %v1296
    %v1298 = vmul.f32 %v1223, %v1297
    %v1300 = vrot.slane %v1298, 7
    %v1302 = vsub.f32 %v1193, %v1300
    %v1304 = vsel %vm702, %v1297, 0
    %1306 = vmatpush.msra.mxu0 0.0
    %1307 = vmatpush.msra.mxu0 0.0
    %1308 = vmatpush.msra.mxu0 0.0
    %1309 = vmatpush.msra.mxu0 0.0
    %1310 = vmatpush.msra.mxu0 0.0
    %1311 = vmatpush.msra.mxu0 0.0
    %1312 = vmatpush.msra.mxu0 0.0
    %1313 = vmatpush.msra.mxu0 0.0
    %1314 = vmatpush.msra.mxu0 0.0
    %1315 = vmatpush.msra.mxu0 0.0
    %1316 = vmatpush.msra.mxu0 0.0
    %1317 = vmatpush.msra.mxu0 0.0
    %1318 = vmatpush.msra.mxu0 0.0
    %1319 = vmatpush.msra.mxu0 0.0
    %1320 = vmatpush.msra.mxu0 0.0
    %1321 = vmatpush.msra.mxu0 %v671
    %1322 = vmatmul.f32.gmra.mxu0 %v1304
    %v1323 = vpop.f32.mrf.mxu0
    %v1324 = vadd.f32 0.0, %v1323
    %1325 = vdwg.mxu0
    %v1326 = vperm.slane %v1324, 0
    %v1327 = vmul.f32 %v1188, %v1326
    %v1328 = vmul.f32 %v1189, %v1326
    %v1329 = vmul.f32 %v1190, %v1326
    %v1330 = vmul.f32 %v1191, %v1326
    %v1332 = vrot.slane %v1302, 1
    %v1333 = vsel %vm702, %v1332, 0
    %1335 = vmatpush.msra.mxu0 0.0
    %1336 = vmatpush.msra.mxu0 0.0
    %1337 = vmatpush.msra.mxu0 0.0
    %1338 = vmatpush.msra.mxu0 0.0
    %1339 = vmatpush.msra.mxu0 0.0
    %1340 = vmatpush.msra.mxu0 0.0
    %1341 = vmatpush.msra.mxu0 0.0
    %1342 = vmatpush.msra.mxu0 0.0
    %1343 = vmatpush.msra.mxu0 0.0
    %1344 = vmatpush.msra.mxu0 0.0
    %1345 = vmatpush.msra.mxu0 0.0
    %1346 = vmatpush.msra.mxu0 0.0
    %1347 = vmatpush.msra.mxu0 0.0
    %1348 = vmatpush.msra.mxu0 0.0
    %1349 = vmatpush.msra.mxu0 0.0
    %1350 = vmatpush.msra.mxu0 %v671
    %1351 = vmatmul.f32.gmra.mxu0 %v1333
    %v1352 = vpop.f32.mrf.mxu0
    %v1353 = vadd.f32 0.0, %v1352
    %1354 = vdwg.mxu0
    %v1355 = vperm.slane %v1353, 0
    %v1356 = vadd.f32 %v1327, %v1355
    %v1357 = vadd.f32 %v1328, %v1355
    %v1358 = vadd.f32 %v1329, %v1355
    %v1359 = vadd.f32 %v1330, %v1355
    %v1360 = vmax.f32 %v1356, 0.0
    %v1361 = vmax.f32 %v1357, 0.0
    %v1362 = vmax.f32 %v1358, 0.0
    %v1363 = vmax.f32 %v1359, 0.0
    %1364 = vmatpush.msra.mxu0 0.0
    %1365 = vmatpush.msra.mxu0 0.0
    %1366 = vmatpush.msra.mxu0 0.0
    %1367 = vmatpush.msra.mxu0 0.0
    %1368 = vmatpush.msra.mxu0 0.0
    %1369 = vmatpush.msra.mxu0 0.0
    %1370 = vmatpush.msra.mxu0 0.0
    %1371 = vmatpush.msra.mxu0 0.0
    %1372 = vmatpush.msra.mxu0 0.0
    %1373 = vmatpush.msra.mxu0 0.0
    %1374 = vmatpush.msra.mxu0 0.0
    %1375 = vmatpush.msra.mxu0 0.0
    %1376 = vmatpush.msra.mxu0 %v1363
    %1377 = vmatpush.msra.mxu0 %v1362
    %1378 = vmatpush.msra.mxu0 %v1361
    %1379 = vmatpush.msra.mxu0 %v1360
    %1380 = vmatmul.f32.gmra.mxu0 %v261
    %v1381 = vpop.f32.mrf.mxu0
    %v1382 = vadd.f32 0.0, %v1381
    %1383 = vmatmul.f32.gmra.mxu0 %v264
    %v1384 = vpop.f32.mrf.mxu0
    %v1385 = vadd.f32 0.0, %v1384
    %1386 = vmatmul.f32.gmra.mxu0 %v267
    %v1387 = vpop.f32.mrf.mxu0
    %v1388 = vadd.f32 0.0, %v1387
    %1389 = vmatmul.f32.gmra.mxu0 %v270
    %v1390 = vpop.f32.mrf.mxu0
    %v1391 = vadd.f32 0.0, %v1390
    %1392 = vdwg.mxu0
    %v1393 = vpack.c.bf16 %v1385, %v1382
    %v1394 = vpack.c.bf16 %v1391, %v1388
    %s1395 = scalar_lea.vmem [#allocation2], 384
    %v1396 = vld [vmem:[%s1395] sm:$0xf]
    %v1397 = vld [vmem:[%s1395 + $0x4] sm:$0xf]
    %v1398 = vld [vmem:[%s1395 + $0x8] sm:$0xf]
    %v1399 = vld [vmem:[%s1395 + $0xc] sm:$0xf]
    %v1400 = vld [vmem:[%s1395 + $0x10] sm:$0xf]
    %v1401 = vld [vmem:[%s1395 + $0x14] sm:$0xf]
    %v1402 = vld [vmem:[%s1395 + $0x18] sm:$0xf]
    %v1403 = vld [vmem:[%s1395 + $0x1c] sm:$0xf]
    %v1404 = vld [vmem:[%s1395 + $0x20] sm:$0xf]
    %v1405 = vld [vmem:[%s1395 + $0x24] sm:$0xf]
    %v1406 = vld [vmem:[%s1395 + $0x28] sm:$0xf]
    %v1407 = vld [vmem:[%s1395 + $0x2c] sm:$0xf]
    %v1408 = vld [vmem:[%s1395 + $0x30] sm:$0xf]
    %v1409 = vld [vmem:[%s1395 + $0x34] sm:$0xf]
    %v1410 = vld [vmem:[%s1395 + $0x38] sm:$0xf]
    %v1411 = vld [vmem:[%s1395 + $0x3c] sm:$0xf]
    %1412 = vmatpush.msra.mxu0 0.0
    %1413 = vmatpush.msra.mxu0 0.0
    %1414 = vmatpush.msra.mxu0 0.0
    %1415 = vmatpush.msra.mxu0 0.0
    %1416 = vmatpush.msra.mxu0 0.0
    %1417 = vmatpush.msra.mxu0 0.0
    %1418 = vmatpush.msra.mxu0 0.0
    %1419 = vmatpush.msra.mxu0 0.0
    %1420 = vmatpush.msra.mxu0 0.0
    %1421 = vmatpush.msra.mxu0 0.0
    %1422 = vmatpush.msra.mxu0 0.0
    %1423 = vmatpush.msra.mxu0 0.0
    %1424 = vmatpush.msra.mxu0 %v1363
    %1425 = vmatpush.msra.mxu0 %v1362
    %1426 = vmatpush.msra.mxu0 %v1361
    %1427 = vmatpush.msra.mxu0 %v1360
    %1428 = vmatmul.f32.gmra.mxu0 %v325
    %v1429 = vpop.f32.mrf.mxu0
    %v1430 = vadd.f32 0.0, %v1429
    %1431 = vmatmul.f32.gmra.mxu0 %v328
    %v1432 = vpop.f32.mrf.mxu0
    %v1433 = vadd.f32 0.0, %v1432
    %1434 = vmatmul.f32.gmra.mxu0 %v331
    %v1435 = vpop.f32.mrf.mxu0
    %v1436 = vadd.f32 0.0, %v1435
    %1437 = vmatmul.f32.gmra.mxu0 %v334
    %v1438 = vpop.f32.mrf.mxu0
    %v1439 = vadd.f32 0.0, %v1438
    %1440 = vdwg.mxu0
    %v1441 = vpack.c.bf16 %v1433, %v1430
    %v1442 = vpack.c.bf16 %v1439, %v1436
    %s1443 = scalar_lea.vmem [#allocation2], 448
    %v1444 = vld [vmem:[%s1443] sm:$0xf]
    %v1445 = vld [vmem:[%s1443 + $0x4] sm:$0xf]
    %v1446 = vld [vmem:[%s1443 + $0x8] sm:$0xf]
    %v1447 = vld [vmem:[%s1443 + $0xc] sm:$0xf]
    %v1448 = vld [vmem:[%s1443 + $0x10] sm:$0xf]
    %v1449 = vld [vmem:[%s1443 + $0x14] sm:$0xf]
    %v1450 = vld [vmem:[%s1443 + $0x18] sm:$0xf]
    %v1451 = vld [vmem:[%s1443 + $0x1c] sm:$0xf]
    %v1452 = vld [vmem:[%s1443 + $0x20] sm:$0xf]
    %v1453 = vld [vmem:[%s1443 + $0x24] sm:$0xf]
    %v1454 = vld [vmem:[%s1443 + $0x28] sm:$0xf]
    %v1455 = vld [vmem:[%s1443 + $0x2c] sm:$0xf]
    %v1456 = vld [vmem:[%s1443 + $0x30] sm:$0xf]
    %v1457 = vld [vmem:[%s1443 + $0x34] sm:$0xf]
    %v1458 = vld [vmem:[%s1443 + $0x38] sm:$0xf]
    %v1459 = vld [vmem:[%s1443 + $0x3c] sm:$0xf]
    %v1476 = vunpack.c.l.b16 %v1444
    %v1477 = vunpack.c.l.b16 %v1445
    %v1478 = vunpack.c.l.b16 %v1446
    %v1479 = vunpack.c.l.b16 %v1447
    %v1480 = vunpack.c.l.b16 %v1448
    %v1481 = vunpack.c.l.b16 %v1449
    %v1482 = vunpack.c.l.b16 %v1450
    %v1483 = vunpack.c.l.b16 %v1451
    %v1484 = vunpack.c.l.b16 %v1452
    %v1485 = vunpack.c.l.b16 %v1453
    %v1486 = vunpack.c.l.b16 %v1454
    %v1487 = vunpack.c.l.b16 %v1455
    %v1488 = vunpack.c.l.b16 %v1456
    %v1489 = vunpack.c.l.b16 %v1457
    %v1490 = vunpack.c.l.b16 %v1458
    %v1491 = vunpack.c.l.b16 %v1459
    %v1492 = vpack.c.b16 %v1477, %v1476
    %v1493 = vpack.c.b16 %v1479, %v1478
    %v1494 = vpack.c.b16 %v1481, %v1480
    %v1495 = vpack.c.b16 %v1483, %v1482
    %v1496 = vpack.c.b16 %v1485, %v1484
    %v1497 = vpack.c.b16 %v1487, %v1486
    %v1498 = vpack.c.b16 %v1489, %v1488
    %v1499 = vpack.c.b16 %v1491, %v1490
    %1508 = vmatpush.bf16.msra.mxu0 %v1499
    %1509 = vmatpush.bf16.msra.mxu0 %v1498
    %1510 = vmatpush.bf16.msra.mxu0 %v1497
    %1511 = vmatpush.bf16.msra.mxu0 %v1496
    %1512 = vmatpush.bf16.msra.mxu0 %v1495
    %1513 = vmatpush.bf16.msra.mxu0 %v1494
    %1514 = vmatpush.bf16.msra.mxu0 %v1493
    %1515 = vmatpush.bf16.msra.mxu0 %v1492
    %1516 = vmatmul.bf16.gmra.mxu0 %v1441
    %v1517 = vpop.f32.mrf.mxu0
    %v1518 = vadd.f32 0.0, %v1517
    %v1519 = vpop.f32.mrf.mxu0
    %v1520 = vadd.f32 0.0, %v1519
    %1521 = vmatmul.bf16.gmra.mxu0 %v1442
    %v1522 = vpop.f32.mrf.mxu0
    %v1523 = vadd.f32 0.0, %v1522
    %v1524 = vpop.f32.mrf.mxu0
    %v1525 = vadd.f32 0.0, %v1524
    %1526 = vdwg.mxu0
    %v1543 = vunpack.c.l.b16 %v1396
    %v1544 = vunpack.c.l.b16 %v1397
    %v1545 = vunpack.c.l.b16 %v1398
    %v1546 = vunpack.c.l.b16 %v1399
    %v1547 = vunpack.c.l.b16 %v1400
    %v1548 = vunpack.c.l.b16 %v1401
    %v1549 = vunpack.c.l.b16 %v1402
    %v1550 = vunpack.c.l.b16 %v1403
    %v1551 = vunpack.c.l.b16 %v1404
    %v1552 = vunpack.c.l.b16 %v1405
    %v1553 = vunpack.c.l.b16 %v1406
    %v1554 = vunpack.c.l.b16 %v1407
    %v1555 = vunpack.c.l.b16 %v1408
    %v1556 = vunpack.c.l.b16 %v1409
    %v1557 = vunpack.c.l.b16 %v1410
    %v1558 = vunpack.c.l.b16 %v1411
    %v1559 = vpack.c.b16 %v1544, %v1543
    %v1560 = vpack.c.b16 %v1546, %v1545
    %v1561 = vpack.c.b16 %v1548, %v1547
    %v1562 = vpack.c.b16 %v1550, %v1549
    %v1563 = vpack.c.b16 %v1552, %v1551
    %v1564 = vpack.c.b16 %v1554, %v1553
    %v1565 = vpack.c.b16 %v1556, %v1555
    %v1566 = vpack.c.b16 %v1558, %v1557
    %1575 = vmatpush.bf16.msra.mxu0 %v1566
    %1576 = vmatpush.bf16.msra.mxu0 %v1565
    %1577 = vmatpush.bf16.msra.mxu0 %v1564
    %1578 = vmatpush.bf16.msra.mxu0 %v1563
    %1579 = vmatpush.bf16.msra.mxu0 %v1562
    %1580 = vmatpush.bf16.msra.mxu0 %v1561
    %1581 = vmatpush.bf16.msra.mxu0 %v1560
    %1582 = vmatpush.bf16.msra.mxu0 %v1559
    %1583 = vmatmul.bf16.gmra.mxu0 %v1393
    %v1584 = vpop.f32.mrf.mxu0
    %v1585 = vadd.f32 %v1518, %v1584
    %v1586 = vpop.f32.mrf.mxu0
    %v1587 = vadd.f32 %v1520, %v1586
    %1588 = vmatmul.bf16.gmra.mxu0 %v1394
    %v1589 = vpop.f32.mrf.mxu0
    %v1590 = vadd.f32 %v1523, %v1589
    %v1591 = vpop.f32.mrf.mxu0
    %v1592 = vadd.f32 %v1525, %v1591
    %1593 = vdwg.mxu0
    %1594 = vmatpush.msra.mxu0 0.0
    %1595 = vmatpush.msra.mxu0 0.0
    %1596 = vmatpush.msra.mxu0 0.0
    %1597 = vmatpush.msra.mxu0 0.0
    %1598 = vmatpush.msra.mxu0 0.0
    %1599 = vmatpush.msra.mxu0 0.0
    %1600 = vmatpush.msra.mxu0 0.0
    %1601 = vmatpush.msra.mxu0 0.0
    %1602 = vmatpush.msra.mxu0 0.0
    %1603 = vmatpush.msra.mxu0 0.0
    %1604 = vmatpush.msra.mxu0 0.0
    %1605 = vmatpush.msra.mxu0 0.0
    %1606 = vmatpush.msra.mxu0 %v1363
    %1607 = vmatpush.msra.mxu0 %v1362
    %1608 = vmatpush.msra.mxu0 %v1361
    %1609 = vmatpush.msra.mxu0 %v1360
    %1610 = vmatmul.f32.gmra.mxu0 %v524
    %v1611 = vpop.f32.mrf.mxu0
    %v1612 = vadd.f32 0.0, %v1611
    %1613 = vmatmul.f32.gmra.mxu0 %v527
    %v1614 = vpop.f32.mrf.mxu0
    %v1615 = vadd.f32 0.0, %v1614
    %1616 = vmatmul.f32.gmra.mxu0 %v530
    %v1617 = vpop.f32.mrf.mxu0
    %v1618 = vadd.f32 0.0, %v1617
    %1619 = vmatmul.f32.gmra.mxu0 %v533
    %v1620 = vpop.f32.mrf.mxu0
    %v1621 = vadd.f32 0.0, %v1620
    %1622 = vdwg.mxu0
    %v1623 = vpack.c.bf16 %v1615, %v1612
    %v1624 = vpack.c.bf16 %v1621, %v1618
    %s1625 = scalar_lea.vmem [#allocation2], 512
    %v1626 = vld [vmem:[%s1625] sm:$0xf]
    %v1627 = vld [vmem:[%s1625 + $0x4] sm:$0xf]
    %v1628 = vld [vmem:[%s1625 + $0x8] sm:$0xf]
    %v1629 = vld [vmem:[%s1625 + $0xc] sm:$0xf]
    %v1630 = vld [vmem:[%s1625 + $0x10] sm:$0xf]
    %v1631 = vld [vmem:[%s1625 + $0x14] sm:$0xf]
    %v1632 = vld [vmem:[%s1625 + $0x18] sm:$0xf]
    %v1633 = vld [vmem:[%s1625 + $0x1c] sm:$0xf]
    %v1634 = vld [vmem:[%s1625 + $0x20] sm:$0xf]
    %v1635 = vld [vmem:[%s1625 + $0x24] sm:$0xf]
    %v1636 = vld [vmem:[%s1625 + $0x28] sm:$0xf]
    %v1637 = vld [vmem:[%s1625 + $0x2c] sm:$0xf]
    %v1638 = vld [vmem:[%s1625 + $0x30] sm:$0xf]
    %v1639 = vld [vmem:[%s1625 + $0x34] sm:$0xf]
    %v1640 = vld [vmem:[%s1625 + $0x38] sm:$0xf]
    %v1641 = vld [vmem:[%s1625 + $0x3c] sm:$0xf]
    %v1658 = vunpack.c.l.b16 %v1626
    %v1659 = vunpack.c.l.b16 %v1627
    %v1660 = vunpack.c.l.b16 %v1628
    %v1661 = vunpack.c.l.b16 %v1629
    %v1662 = vunpack.c.l.b16 %v1630
    %v1663 = vunpack.c.l.b16 %v1631
    %v1664 = vunpack.c.l.b16 %v1632
    %v1665 = vunpack.c.l.b16 %v1633
    %v1666 = vunpack.c.l.b16 %v1634
    %v1667 = vunpack.c.l.b16 %v1635
    %v1668 = vunpack.c.l.b16 %v1636
    %v1669 = vunpack.c.l.b16 %v1637
    %v1670 = vunpack.c.l.b16 %v1638
    %v1671 = vunpack.c.l.b16 %v1639
    %v1672 = vunpack.c.l.b16 %v1640
    %v1673 = vunpack.c.l.b16 %v1641
    %v1674 = vpack.c.b16 %v1659, %v1658
    %v1675 = vpack.c.b16 %v1661, %v1660
    %v1676 = vpack.c.b16 %v1663, %v1662
    %v1677 = vpack.c.b16 %v1665, %v1664
    %v1678 = vpack.c.b16 %v1667, %v1666
    %v1679 = vpack.c.b16 %v1669, %v1668
    %v1680 = vpack.c.b16 %v1671, %v1670
    %v1681 = vpack.c.b16 %v1673, %v1672
    %1690 = vmatpush.bf16.msra.mxu0 %v1681
    %1691 = vmatpush.bf16.msra.mxu0 %v1680
    %1692 = vmatpush.bf16.msra.mxu0 %v1679
    %1693 = vmatpush.bf16.msra.mxu0 %v1678
    %1694 = vmatpush.bf16.msra.mxu0 %v1677
    %1695 = vmatpush.bf16.msra.mxu0 %v1676
    %1696 = vmatpush.bf16.msra.mxu0 %v1675
    %1697 = vmatpush.bf16.msra.mxu0 %v1674
    %1698 = vmatmul.bf16.gmra.mxu0 %v1623
    %v1699 = vpop.f32.mrf.mxu0
    %v1700 = vadd.f32 0.0, %v1699
    %v1701 = vpop.f32.mrf.mxu0
    %v1702 = vadd.f32 0.0, %v1701
    %1703 = vmatmul.bf16.gmra.mxu0 %v1624
    %v1704 = vpop.f32.mrf.mxu0
    %v1705 = vadd.f32 0.0, %v1704
    %v1706 = vpop.f32.mrf.mxu0
    %v1707 = vadd.f32 0.0, %v1706
    %1708 = vdwg.mxu0
    %v1709 = vadd.f32 %v1585, %v1700
    %v1710 = vadd.f32 %v1587, %v1702
    %v1711 = vadd.f32 %v1590, %v1705
    %v1712 = vadd.f32 %v1592, %v1707
    %s1713 = scalar_lea.vmem [#allocation19], 4
    %v1714 = vld [vmem:[%s1713] sm:$0x3]
    %v1715 = vadd.f32 %v1709, %v1710
    %v1716 = vadd.f32 %v1715, %v1711
    %v1717 = vadd.f32 %v1716, %v1712
    %v1718 = vrot.slane %v1717, 4
    %v1719 = vadd.f32 %v1717, %v1718
    %v1720 = vrot.slane %v1719, 2
    %v1721 = vadd.f32 %v1719, %v1720
    %v1722 = vrot.slane %v1721, 1
    %v1723 = vadd.f32 %v1721, %v1722
    %1724 = vmatpush.msra.mxu0 %v670
    %1725 = vmatpush.msra.mxu0 %v669
    %1726 = vmatpush.msra.mxu0 %v668
    %1727 = vmatpush.msra.mxu0 %v667
    %1728 = vmatpush.msra.mxu0 %v666
    %1729 = vmatpush.msra.mxu0 %v665
    %1730 = vmatpush.msra.mxu0 %v664
    %1731 = vmatpush.msra.mxu0 %v663
    %1732 = vmatpush.msra.mxu0 %v662
    %1733 = vmatpush.msra.mxu0 %v661
    %1734 = vmatpush.msra.mxu0 %v660
    %1735 = vmatpush.msra.mxu0 %v659
    %1736 = vmatpush.msra.mxu0 %v658
    %1737 = vmatpush.msra.mxu0 %v657
    %1738 = vmatpush.msra.mxu0 %v656
    %1739 = vmatpush.msra.mxu0 %v655
    %1740 = vmatmul.f32.gmra.mxu0 %v1723
    %v1741 = vpop.f32.mrf.mxu0
    %v1742 = vadd.f32 0.0, %v1741
    %1743 = vdwg.mxu0
    %v1744 = vmul.f32 %v1742, 0.001953125
    %v1746 = vsel %vm702, %v1744, 0
    %1748 = vmatpush.msra.mxu0 0.0
    %1749 = vmatpush.msra.mxu0 0.0
    %1750 = vmatpush.msra.mxu0 0.0
    %1751 = vmatpush.msra.mxu0 0.0
    %1752 = vmatpush.msra.mxu0 0.0
    %1753 = vmatpush.msra.mxu0 0.0
    %1754 = vmatpush.msra.mxu0 0.0
    %1755 = vmatpush.msra.mxu0 0.0
    %1756 = vmatpush.msra.mxu0 0.0
    %1757 = vmatpush.msra.mxu0 0.0
    %1758 = vmatpush.msra.mxu0 0.0
    %1759 = vmatpush.msra.mxu0 0.0
    %1760 = vmatpush.msra.mxu0 0.0
    %1761 = vmatpush.msra.mxu0 0.0
    %1762 = vmatpush.msra.mxu0 0.0
    %1763 = vmatpush.msra.mxu0 %v671
    %1764 = vmatmul.f32.gmra.mxu0 %v1746
    %v1765 = vpop.f32.mrf.mxu0
    %v1766 = vadd.f32 0.0, %v1765
    %1767 = vdwg.mxu0
    %v1768 = vperm.slane %v1766, 0
    %v1769 = vsub.f32 %v1709, %v1768
    %v1770 = vsub.f32 %v1710, %v1768
    %v1771 = vsub.f32 %v1711, %v1768
    %v1772 = vsub.f32 %v1712, %v1768
    %v1773 = vmul.f32 %v1769, %v1769
    %v1774 = vmul.f32 %v1770, %v1770
    %v1775 = vmul.f32 %v1771, %v1771
    %v1776 = vmul.f32 %v1772, %v1772
    %v1777 = vadd.f32 %v1773, %v1774
    %v1778 = vadd.f32 %v1777, %v1775
    %v1779 = vadd.f32 %v1778, %v1776
    %v1780 = vrot.slane %v1779, 4
    %v1781 = vadd.f32 %v1779, %v1780
    %v1782 = vrot.slane %v1781, 2
    %v1783 = vadd.f32 %v1781, %v1782
    %v1784 = vrot.slane %v1783, 1
    %v1785 = vadd.f32 %v1783, %v1784
    %1786 = vmatpush.msra.mxu0 %v670
    %1787 = vmatpush.msra.mxu0 %v669
    %1788 = vmatpush.msra.mxu0 %v668
    %1789 = vmatpush.msra.mxu0 %v667
    %1790 = vmatpush.msra.mxu0 %v666
    %1791 = vmatpush.msra.mxu0 %v665
    %1792 = vmatpush.msra.mxu0 %v664
    %1793 = vmatpush.msra.mxu0 %v663
    %1794 = vmatpush.msra.mxu0 %v662
    %1795 = vmatpush.msra.mxu0 %v661
    %1796 = vmatpush.msra.mxu0 %v660
    %1797 = vmatpush.msra.mxu0 %v659
    %1798 = vmatpush.msra.mxu0 %v658
    %1799 = vmatpush.msra.mxu0 %v657
    %1800 = vmatpush.msra.mxu0 %v656
    %1801 = vmatpush.msra.mxu0 %v655
    %1802 = vmatmul.f32.gmra.mxu0 %v1785
    %v1803 = vpop.f32.mrf.mxu0
    %v1804 = vadd.f32 0.0, %v1803
    %1805 = vdwg.mxu0
    %v1806 = vmul.f32 %v1804, 0.001953125
    %v1807 = vadd.f32 %v1806, 1e-05
    %v1808 = vrsqrt.pop %v1807
    %v1809 = vmul.f32 %v1808, %v1807
    %v1810 = vmul.f32 %v1809, %v1808
    %v1811 = vmul.f32 0.5, %v1810
    %v1812 = vsub.f32 1.5, %v1811
    %v1813 = vmul.f32 %v1808, %v1812
    %vm1814 = vweird.f32 %v1807
    %vm1815 = vweird.f32 %v1808
    %vm1816 = vmor %vm1814, %vm1815
    %v1817 = vsel %vm1816, %v1808, %v1813
    %v1818 = vmul.f32 %v1714, %v1817
    %v1819 = vmul.f32 %v1744, %v1818
    %v1821 = vrot.slane %v1819, 7
    %v1823 = vsub.f32 %v1714, %v1821
    %v1825 = vsel %vm702, %v1818, 0
    %1827 = vmatpush.msra.mxu0 0.0
    %1828 = vmatpush.msra.mxu0 0.0
    %1829 = vmatpush.msra.mxu0 0.0
    %1830 = vmatpush.msra.mxu0 0.0
    %1831 = vmatpush.msra.mxu0 0.0
    %1832 = vmatpush.msra.mxu0 0.0
    %1833 = vmatpush.msra.mxu0 0.0
    %1834 = vmatpush.msra.mxu0 0.0
    %1835 = vmatpush.msra.mxu0 0.0
    %1836 = vmatpush.msra.mxu0 0.0
    %1837 = vmatpush.msra.mxu0 0.0
    %1838 = vmatpush.msra.mxu0 0.0
    %1839 = vmatpush.msra.mxu0 0.0
    %1840 = vmatpush.msra.mxu0 0.0
    %1841 = vmatpush.msra.mxu0 0.0
    %1842 = vmatpush.msra.mxu0 %v671
    %1843 = vmatmul.f32.gmra.mxu0 %v1825
    %v1844 = vpop.f32.mrf.mxu0
    %v1845 = vadd.f32 0.0, %v1844
    %1846 = vdwg.mxu0
    %v1847 = vperm.slane %v1845, 0
    %v1848 = vmul.f32 %v1709, %v1847
    %v1849 = vmul.f32 %v1710, %v1847
    %v1850 = vmul.f32 %v1711, %v1847
    %v1851 = vmul.f32 %v1712, %v1847
    %v1853 = vrot.slane %v1823, 1
    %v1854 = vsel %vm702, %v1853, 0
    %1856 = vmatpush.msra.mxu0 0.0
    %1857 = vmatpush.msra.mxu0 0.0
    %1858 = vmatpush.msra.mxu0 0.0
    %1859 = vmatpush.msra.mxu0 0.0
    %1860 = vmatpush.msra.mxu0 0.0
    %1861 = vmatpush.msra.mxu0 0.0
    %1862 = vmatpush.msra.mxu0 0.0
    %1863 = vmatpush.msra.mxu0 0.0
    %1864 = vmatpush.msra.mxu0 0.0
    %1865 = vmatpush.msra.mxu0 0.0
    %1866 = vmatpush.msra.mxu0 0.0
    %1867 = vmatpush.msra.mxu0 0.0
    %1868 = vmatpush.msra.mxu0 0.0
    %1869 = vmatpush.msra.mxu0 0.0
    %1870 = vmatpush.msra.mxu0 0.0
    %1871 = vmatpush.msra.mxu0 %v671
    %1872 = vmatmul.f32.gmra.mxu0 %v1854
    %v1873 = vpop.f32.mrf.mxu0
    %v1874 = vadd.f32 0.0, %v1873
    %1875 = vdwg.mxu0
    %v1876 = vperm.slane %v1874, 0
    %v1877 = vadd.f32 %v1848, %v1876
    %v1878 = vadd.f32 %v1849, %v1876
    %v1879 = vadd.f32 %v1850, %v1876
    %v1880 = vadd.f32 %v1851, %v1876
    %v1881 = vadd.f32 %v1877, %v839
    %v1882 = vadd.f32 %v1878, %v840
    %v1883 = vadd.f32 %v1879, %v841
    %v1884 = vadd.f32 %v1880, %v842
    %v1885 = vmax.f32 %v1881, 0.0
    %v1886 = vmax.f32 %v1882, 0.0
    %v1887 = vmax.f32 %v1883, 0.0
    %v1888 = vmax.f32 %v1884, 0.0
    %v1889 = vld [vmem:[#allocation5] sm:$0xff]
    %v1890 = vld [vmem:[#allocation5 + $0x8] sm:$0xff]
    %v1892 = vsel %vm259, %v1889, 0
    %v1895 = vsel %vm259, %v1890, 0
    %1897 = vmatpush.msra.mxu0 0.0
    %1898 = vmatpush.msra.mxu0 0.0
    %1899 = vmatpush.msra.mxu0 0.0
    %1900 = vmatpush.msra.mxu0 0.0
    %1901 = vmatpush.msra.mxu0 0.0
    %1902 = vmatpush.msra.mxu0 0.0
    %1903 = vmatpush.msra.mxu0 0.0
    %1904 = vmatpush.msra.mxu0 0.0
    %1905 = vmatpush.msra.mxu0 0.0
    %1906 = vmatpush.msra.mxu0 0.0
    %1907 = vmatpush.msra.mxu0 0.0
    %1908 = vmatpush.msra.mxu0 0.0
    %1909 = vmatpush.msra.mxu0 %v1888
    %1910 = vmatpush.msra.mxu0 %v1887
    %1911 = vmatpush.msra.mxu0 %v1886
    %1912 = vmatpush.msra.mxu0 %v1885
    %1913 = vmatmul.f32.gmra.mxu0 %v1892
    %v1914 = vpop.f32.mrf.mxu0
    %v1915 = vadd.f32 0.0, %v1914
    %1916 = vmatmul.f32.gmra.mxu0 %v1895
    %v1917 = vpop.f32.mrf.mxu0
    %v1918 = vadd.f32 0.0, %v1917
    %1919 = vdwg.mxu0
    %v1920 = vpack.c.bf16 %v1918, %v1915
    %s1921 = scalar_lea.vmem [#allocation2], 576
    %v1922 = vld [vmem:[%s1921] sm:$0xf]
    %v1923 = vld [vmem:[%s1921 + $0x4] sm:$0xf]
    %v1924 = vld [vmem:[%s1921 + $0x8] sm:$0xf]
    %v1925 = vld [vmem:[%s1921 + $0xc] sm:$0xf]
    %v1926 = vld [vmem:[%s1921 + $0x10] sm:$0xf]
    %v1927 = vld [vmem:[%s1921 + $0x14] sm:$0xf]
    %v1928 = vld [vmem:[%s1921 + $0x18] sm:$0xf]
    %v1929 = vld [vmem:[%s1921 + $0x1c] sm:$0xf]
    %v1930 = vld [vmem:[%s1921 + $0x20] sm:$0xf]
    %v1931 = vld [vmem:[%s1921 + $0x24] sm:$0xf]
    %v1932 = vld [vmem:[%s1921 + $0x28] sm:$0xf]
    %v1933 = vld [vmem:[%s1921 + $0x2c] sm:$0xf]
    %v1934 = vld [vmem:[%s1921 + $0x30] sm:$0xf]
    %v1935 = vld [vmem:[%s1921 + $0x34] sm:$0xf]
    %v1936 = vld [vmem:[%s1921 + $0x38] sm:$0xf]
    %v1937 = vld [vmem:[%s1921 + $0x3c] sm:$0xf]
    %s1938 = scalar_lea.vmem [#allocation5], 16
    %v1939 = vld [vmem:[%s1938] sm:$0xff]
    %v1940 = vld [vmem:[%s1938 + $0x8] sm:$0xff]
    %v1942 = vsel %vm259, %v1939, 0
    %v1945 = vsel %vm259, %v1940, 0
    %1947 = vmatpush.msra.mxu0 0.0
    %1948 = vmatpush.msra.mxu0 0.0
    %1949 = vmatpush.msra.mxu0 0.0
    %1950 = vmatpush.msra.mxu0 0.0
    %1951 = vmatpush.msra.mxu0 0.0
    %1952 = vmatpush.msra.mxu0 0.0
    %1953 = vmatpush.msra.mxu0 0.0
    %1954 = vmatpush.msra.mxu0 0.0
    %1955 = vmatpush.msra.mxu0 0.0
    %1956 = vmatpush.msra.mxu0 0.0
    %1957 = vmatpush.msra.mxu0 0.0
    %1958 = vmatpush.msra.mxu0 0.0
    %1959 = vmatpush.msra.mxu0 %v1888
    %1960 = vmatpush.msra.mxu0 %v1887
    %1961 = vmatpush.msra.mxu0 %v1886
    %1962 = vmatpush.msra.mxu0 %v1885
    %1963 = vmatmul.f32.gmra.mxu0 %v1942
    %v1964 = vpop.f32.mrf.mxu0
    %v1965 = vadd.f32 0.0, %v1964
    %1966 = vmatmul.f32.gmra.mxu0 %v1945
    %v1967 = vpop.f32.mrf.mxu0
    %v1968 = vadd.f32 0.0, %v1967
    %1969 = vdwg.mxu0
    %v1970 = vpack.c.bf16 %v1968, %v1965
    %s1971 = scalar_lea.vmem [#allocation2], 640
    %v1972 = vld [vmem:[%s1971] sm:$0xf]
    %v1973 = vld [vmem:[%s1971 + $0x4] sm:$0xf]
    %v1974 = vld [vmem:[%s1971 + $0x8] sm:$0xf]
    %v1975 = vld [vmem:[%s1971 + $0xc] sm:$0xf]
    %v1976 = vld [vmem:[%s1971 + $0x10] sm:$0xf]
    %v1977 = vld [vmem:[%s1971 + $0x14] sm:$0xf]
    %v1978 = vld [vmem:[%s1971 + $0x18] sm:$0xf]
    %v1979 = vld [vmem:[%s1971 + $0x1c] sm:$0xf]
    %v1980 = vld [vmem:[%s1971 + $0x20] sm:$0xf]
    %v1981 = vld [vmem:[%s1971 + $0x24] sm:$0xf]
    %v1982 = vld [vmem:[%s1971 + $0x28] sm:$0xf]
    %v1983 = vld [vmem:[%s1971 + $0x2c] sm:$0xf]
    %v1984 = vld [vmem:[%s1971 + $0x30] sm:$0xf]
    %v1985 = vld [vmem:[%s1971 + $0x34] sm:$0xf]
    %v1986 = vld [vmem:[%s1971 + $0x38] sm:$0xf]
    %v1987 = vld [vmem:[%s1971 + $0x3c] sm:$0xf]
    %v2004 = vunpack.c.l.b16 %v1972
    %v2005 = vunpack.c.l.b16 %v1973
    %v2006 = vunpack.c.l.b16 %v1974
    %v2007 = vunpack.c.l.b16 %v1975
    %v2008 = vunpack.c.l.b16 %v1976
    %v2009 = vunpack.c.l.b16 %v1977
    %v2010 = vunpack.c.l.b16 %v1978
    %v2011 = vunpack.c.l.b16 %v1979
    %v2012 = vunpack.c.l.b16 %v1980
    %v2013 = vunpack.c.l.b16 %v1981
    %v2014 = vunpack.c.l.b16 %v1982
    %v2015 = vunpack.c.l.b16 %v1983
    %v2016 = vunpack.c.l.b16 %v1984
    %v2017 = vunpack.c.l.b16 %v1985
    %v2018 = vunpack.c.l.b16 %v1986
    %v2019 = vunpack.c.l.b16 %v1987
    %v2020 = vpack.c.b16 %v2005, %v2004
    %v2021 = vpack.c.b16 %v2007, %v2006
    %v2022 = vpack.c.b16 %v2009, %v2008
    %v2023 = vpack.c.b16 %v2011, %v2010
    %v2024 = vpack.c.b16 %v2013, %v2012
    %v2025 = vpack.c.b16 %v2015, %v2014
    %v2026 = vpack.c.b16 %v2017, %v2016
    %v2027 = vpack.c.b16 %v2019, %v2018
    %2036 = vmatpush.bf16.msra.mxu0 %v2027
    %2037 = vmatpush.bf16.msra.mxu0 %v2026
    %2038 = vmatpush.bf16.msra.mxu0 %v2025
    %2039 = vmatpush.bf16.msra.mxu0 %v2024
    %2040 = vmatpush.bf16.msra.mxu0 %v2023
    %2041 = vmatpush.bf16.msra.mxu0 %v2022
    %2042 = vmatpush.bf16.msra.mxu0 %v2021
    %2043 = vmatpush.bf16.msra.mxu0 %v2020
    %2044 = vmatmul.bf16.gmra.mxu0 %v1970
    %v2045 = vpop.f32.mrf.mxu0
    %v2046 = vadd.f32 0.0, %v2045
    %v2047 = vpop.f32.mrf.mxu0
    %v2048 = vadd.f32 0.0, %v2047
    %2049 = vdwg.mxu0
    %v2066 = vunpack.c.l.b16 %v1922
    %v2067 = vunpack.c.l.b16 %v1923
    %v2068 = vunpack.c.l.b16 %v1924
    %v2069 = vunpack.c.l.b16 %v1925
    %v2070 = vunpack.c.l.b16 %v1926
    %v2071 = vunpack.c.l.b16 %v1927
    %v2072 = vunpack.c.l.b16 %v1928
    %v2073 = vunpack.c.l.b16 %v1929
    %v2074 = vunpack.c.l.b16 %v1930
    %v2075 = vunpack.c.l.b16 %v1931
    %v2076 = vunpack.c.l.b16 %v1932
    %v2077 = vunpack.c.l.b16 %v1933
    %v2078 = vunpack.c.l.b16 %v1934
    %v2079 = vunpack.c.l.b16 %v1935
    %v2080 = vunpack.c.l.b16 %v1936
    %v2081 = vunpack.c.l.b16 %v1937
    %v2082 = vpack.c.b16 %v2067, %v2066
    %v2083 = vpack.c.b16 %v2069, %v2068
    %v2084 = vpack.c.b16 %v2071, %v2070
    %v2085 = vpack.c.b16 %v2073, %v2072
    %v2086 = vpack.c.b16 %v2075, %v2074
    %v2087 = vpack.c.b16 %v2077, %v2076
    %v2088 = vpack.c.b16 %v2079, %v2078
    %v2089 = vpack.c.b16 %v2081, %v2080
    %2098 = vmatpush.bf16.msra.mxu0 %v2089
    %2099 = vmatpush.bf16.msra.mxu0 %v2088
    %2100 = vmatpush.bf16.msra.mxu0 %v2087
    %2101 = vmatpush.bf16.msra.mxu0 %v2086
    %2102 = vmatpush.bf16.msra.mxu0 %v2085
    %2103 = vmatpush.bf16.msra.mxu0 %v2084
    %2104 = vmatpush.bf16.msra.mxu0 %v2083
    %2105 = vmatpush.bf16.msra.mxu0 %v2082
    %2106 = vmatmul.bf16.gmra.mxu0 %v1920
    %v2107 = vpop.f32.mrf.mxu0
    %v2108 = vadd.f32 %v2046, %v2107
    %v2109 = vpop.f32.mrf.mxu0
    %v2110 = vadd.f32 %v2048, %v2109
    %2111 = vdwg.mxu0
    %s2112 = scalar_lea.vmem [#allocation5], 32
    %v2113 = vld [vmem:[%s2112] sm:$0xff]
    %v2114 = vld [vmem:[%s2112 + $0x8] sm:$0xff]
    %v2116 = vsel %vm259, %v2113, 0
    %v2119 = vsel %vm259, %v2114, 0
    %2121 = vmatpush.msra.mxu0 0.0
    %2122 = vmatpush.msra.mxu0 0.0
    %2123 = vmatpush.msra.mxu0 0.0
    %2124 = vmatpush.msra.mxu0 0.0
    %2125 = vmatpush.msra.mxu0 0.0
    %2126 = vmatpush.msra.mxu0 0.0
    %2127 = vmatpush.msra.mxu0 0.0
    %2128 = vmatpush.msra.mxu0 0.0
    %2129 = vmatpush.msra.mxu0 0.0
    %2130 = vmatpush.msra.mxu0 0.0
    %2131 = vmatpush.msra.mxu0 0.0
    %2132 = vmatpush.msra.mxu0 0.0
    %2133 = vmatpush.msra.mxu0 %v1888
    %2134 = vmatpush.msra.mxu0 %v1887
    %2135 = vmatpush.msra.mxu0 %v1886
    %2136 = vmatpush.msra.mxu0 %v1885
    %2137 = vmatmul.f32.gmra.mxu0 %v2116
    %v2138 = vpop.f32.mrf.mxu0
    %v2139 = vadd.f32 0.0, %v2138
    %2140 = vmatmul.f32.gmra.mxu0 %v2119
    %v2141 = vpop.f32.mrf.mxu0
    %v2142 = vadd.f32 0.0, %v2141
    %2143 = vdwg.mxu0
    %v2144 = vpack.c.bf16 %v2142, %v2139
    %s2145 = scalar_lea.vmem [#allocation2], 704
    %v2146 = vld [vmem:[%s2145] sm:$0xf]
    %v2147 = vld [vmem:[%s2145 + $0x4] sm:$0xf]
    %v2148 = vld [vmem:[%s2145 + $0x8] sm:$0xf]
    %v2149 = vld [vmem:[%s2145 + $0xc] sm:$0xf]
    %v2150 = vld [vmem:[%s2145 + $0x10] sm:$0xf]
    %v2151 = vld [vmem:[%s2145 + $0x14] sm:$0xf]
    %v2152 = vld [vmem:[%s2145 + $0x18] sm:$0xf]
    %v2153 = vld [vmem:[%s2145 + $0x1c] sm:$0xf]
    %v2154 = vld [vmem:[%s2145 + $0x20] sm:$0xf]
    %v2155 = vld [vmem:[%s2145 + $0x24] sm:$0xf]
    %v2156 = vld [vmem:[%s2145 + $0x28] sm:$0xf]
    %v2157 = vld [vmem:[%s2145 + $0x2c] sm:$0xf]
    %v2158 = vld [vmem:[%s2145 + $0x30] sm:$0xf]
    %v2159 = vld [vmem:[%s2145 + $0x34] sm:$0xf]
    %v2160 = vld [vmem:[%s2145 + $0x38] sm:$0xf]
    %v2161 = vld [vmem:[%s2145 + $0x3c] sm:$0xf]
    %v2178 = vunpack.c.l.b16 %v2146
    %v2179 = vunpack.c.l.b16 %v2147
    %v2180 = vunpack.c.l.b16 %v2148
    %v2181 = vunpack.c.l.b16 %v2149
    %v2182 = vunpack.c.l.b16 %v2150
    %v2183 = vunpack.c.l.b16 %v2151
    %v2184 = vunpack.c.l.b16 %v2152
    %v2185 = vunpack.c.l.b16 %v2153
    %v2186 = vunpack.c.l.b16 %v2154
    %v2187 = vunpack.c.l.b16 %v2155
    %v2188 = vunpack.c.l.b16 %v2156
    %v2189 = vunpack.c.l.b16 %v2157
    %v2190 = vunpack.c.l.b16 %v2158
    %v2191 = vunpack.c.l.b16 %v2159
    %v2192 = vunpack.c.l.b16 %v2160
    %v2193 = vunpack.c.l.b16 %v2161
    %v2194 = vpack.c.b16 %v2179, %v2178
    %v2195 = vpack.c.b16 %v2181, %v2180
    %v2196 = vpack.c.b16 %v2183, %v2182
    %v2197 = vpack.c.b16 %v2185, %v2184
    %v2198 = vpack.c.b16 %v2187, %v2186
    %v2199 = vpack.c.b16 %v2189, %v2188
    %v2200 = vpack.c.b16 %v2191, %v2190
    %v2201 = vpack.c.b16 %v2193, %v2192
    %2210 = vmatpush.bf16.msra.mxu0 %v2201
    %2211 = vmatpush.bf16.msra.mxu0 %v2200
    %2212 = vmatpush.bf16.msra.mxu0 %v2199
    %2213 = vmatpush.bf16.msra.mxu0 %v2198
    %2214 = vmatpush.bf16.msra.mxu0 %v2197
    %2215 = vmatpush.bf16.msra.mxu0 %v2196
    %2216 = vmatpush.bf16.msra.mxu0 %v2195
    %2217 = vmatpush.bf16.msra.mxu0 %v2194
    %2218 = vmatmul.bf16.gmra.mxu0 %v2144
    %v2219 = vpop.f32.mrf.mxu0
    %v2220 = vadd.f32 0.0, %v2219
    %v2221 = vpop.f32.mrf.mxu0
    %v2222 = vadd.f32 0.0, %v2221
    %2223 = vdwg.mxu0
    %v2224 = vadd.f32 %v2108, %v2220
    %v2225 = vadd.f32 %v2110, %v2222
    %s2226 = scalar_lea.vmem [#allocation19], 6
    %v2227 = vld [vmem:[%s2226] sm:$0x3]
    %v2228 = vld [vmem:[#allocation13] sm:$0xff]
    %v2229 = vld [vmem:[#allocation13 + $0x8] sm:$0xff]
    %v2230 = vld [vmem:[#allocation13 + $0x10] sm:$0xff]
    %v2231 = vld [vmem:[#allocation13 + $0x18] sm:$0xff]
    %v2232 = vld [vmem:[#allocation13 + $0x20] sm:$0xff]
    %v2233 = vld [vmem:[#allocation13 + $0x28] sm:$0xff]
    %v2234 = vld [vmem:[#allocation13 + $0x30] sm:$0xff]
    %v2235 = vld [vmem:[#allocation13 + $0x38] sm:$0xff]
    %v2236 = vld [vmem:[#allocation13 + $0x40] sm:$0xff]
    %v2237 = vld [vmem:[#allocation13 + $0x48] sm:$0xff]
    %v2238 = vld [vmem:[#allocation13 + $0x50] sm:$0xff]
    %v2239 = vld [vmem:[#allocation13 + $0x58] sm:$0xff]
    %v2240 = vld [vmem:[#allocation13 + $0x60] sm:$0xff]
    %v2241 = vld [vmem:[#allocation13 + $0x68] sm:$0xff]
    %v2242 = vld [vmem:[#allocation13 + $0x70] sm:$0xff]
    %v2243 = vld [vmem:[#allocation13 + $0x78] sm:$0xff]
    %v2244 = vld [vmem:[#allocation14] sm:$0xff]
    %v2245 = vld [vmem:[#allocation14 + $0x8] sm:$0xff]
    %v2246 = vadd.f32 %v2224, %v2225
    %v2247 = vrot.slane %v2246, 4
    %v2248 = vadd.f32 %v2246, %v2247
    %v2249 = vrot.slane %v2248, 2
    %v2250 = vadd.f32 %v2248, %v2249
    %v2251 = vrot.slane %v2250, 1
    %v2252 = vadd.f32 %v2250, %v2251
    %2253 = vmatpush.msra.mxu0 %v2243
    %2254 = vmatpush.msra.mxu0 %v2242
    %2255 = vmatpush.msra.mxu0 %v2241
    %2256 = vmatpush.msra.mxu0 %v2240
    %2257 = vmatpush.msra.mxu0 %v2239
    %2258 = vmatpush.msra.mxu0 %v2238
    %2259 = vmatpush.msra.mxu0 %v2237
    %2260 = vmatpush.msra.mxu0 %v2236
    %2261 = vmatpush.msra.mxu0 %v2235
    %2262 = vmatpush.msra.mxu0 %v2234
    %2263 = vmatpush.msra.mxu0 %v2233
    %2264 = vmatpush.msra.mxu0 %v2232
    %2265 = vmatpush.msra.mxu0 %v2231
    %2266 = vmatpush.msra.mxu0 %v2230
    %2267 = vmatpush.msra.mxu0 %v2229
    %2268 = vmatpush.msra.mxu0 %v2228
    %2269 = vmatmul.f32.gmra.mxu0 %v2252
    %v2270 = vpop.f32.mrf.mxu0
    %v2271 = vadd.f32 0.0, %v2270
    %2272 = vdwg.mxu0
    %v2273 = vmul.f32 %v2271, 0.0078125
    %vm2274 = vcmask 130048
    %v2276 = vsel %vm2274, %v2273, 0
    %2278 = vmatpush.msra.mxu0 0.0
    %2279 = vmatpush.msra.mxu0 0.0
    %2280 = vmatpush.msra.mxu0 0.0
    %2281 = vmatpush.msra.mxu0 0.0
    %2282 = vmatpush.msra.mxu0 0.0
    %2283 = vmatpush.msra.mxu0 0.0
    %2284 = vmatpush.msra.mxu0 0.0
    %2285 = vmatpush.msra.mxu0 0.0
    %2286 = vmatpush.msra.mxu0 0.0
    %2287 = vmatpush.msra.mxu0 0.0
    %2288 = vmatpush.msra.mxu0 0.0
    %2289 = vmatpush.msra.mxu0 0.0
    %2290 = vmatpush.msra.mxu0 0.0
    %2291 = vmatpush.msra.mxu0 0.0
    %2292 = vmatpush.msra.mxu0 %v2245
    %2293 = vmatpush.msra.mxu0 %v2244
    %2294 = vmatmul.f32.gmra.mxu0 %v2276
    %v2295 = vpop.f32.mrf.mxu0
    %v2296 = vadd.f32 0.0, %v2295
    %2297 = vdwg.mxu0
    %v2298 = vperm.slane %v2296, 0
    %v2299 = vsub.f32 %v2224, %v2298
    %v2300 = vsub.f32 %v2225, %v2298
    %v2301 = vmul.f32 %v2299, %v2299
    %v2302 = vmul.f32 %v2300, %v2300
    %v2303 = vadd.f32 %v2301, %v2302
    %v2304 = vrot.slane %v2303, 4
    %v2305 = vadd.f32 %v2303, %v2304
    %v2306 = vrot.slane %v2305, 2
    %v2307 = vadd.f32 %v2305, %v2306
    %v2308 = vrot.slane %v2307, 1
    %v2309 = vadd.f32 %v2307, %v2308
    %2310 = vmatpush.msra.mxu0 %v2243
    %2311 = vmatpush.msra.mxu0 %v2242
    %2312 = vmatpush.msra.mxu0 %v2241
    %2313 = vmatpush.msra.mxu0 %v2240
    %2314 = vmatpush.msra.mxu0 %v2239
    %2315 = vmatpush.msra.mxu0 %v2238
    %2316 = vmatpush.msra.mxu0 %v2237
    %2317 = vmatpush.msra.mxu0 %v2236
    %2318 = vmatpush.msra.mxu0 %v2235
    %2319 = vmatpush.msra.mxu0 %v2234
    %2320 = vmatpush.msra.mxu0 %v2233
    %2321 = vmatpush.msra.mxu0 %v2232
    %2322 = vmatpush.msra.mxu0 %v2231
    %2323 = vmatpush.msra.mxu0 %v2230
    %2324 = vmatpush.msra.mxu0 %v2229
    %2325 = vmatpush.msra.mxu0 %v2228
    %2326 = vmatmul.f32.gmra.mxu0 %v2309
    %v2327 = vpop.f32.mrf.mxu0
    %v2328 = vadd.f32 0.0, %v2327
    %2329 = vdwg.mxu0
    %v2330 = vmul.f32 %v2328, 0.0078125
    %v2331 = vadd.f32 %v2330, 1e-05
    %v2332 = vrsqrt.pop %v2331
    %v2333 = vmul.f32 %v2332, %v2331
    %v2334 = vmul.f32 %v2333, %v2332
    %v2335 = vmul.f32 0.5, %v2334
    %v2336 = vsub.f32 1.5, %v2335
    %v2337 = vmul.f32 %v2332, %v2336
    %vm2338 = vweird.f32 %v2331
    %vm2339 = vweird.f32 %v2332
    %vm2340 = vmor %vm2338, %vm2339
    %v2341 = vsel %vm2340, %v2332, %v2337
    %v2342 = vmul.f32 %v2227, %v2341
    %v2343 = vmul.f32 %v2273, %v2342
    %v2345 = vrot.slane %v2343, 7
    %v2347 = vsub.f32 %v2227, %v2345
    %v2349 = vsel %vm2274, %v2342, 0
    %2351 = vmatpush.msra.mxu0 0.0
    %2352 = vmatpush.msra.mxu0 0.0
    %2353 = vmatpush.msra.mxu0 0.0
    %2354 = vmatpush.msra.mxu0 0.0
    %2355 = vmatpush.msra.mxu0 0.0
    %2356 = vmatpush.msra.mxu0 0.0
    %2357 = vmatpush.msra.mxu0 0.0
    %2358 = vmatpush.msra.mxu0 0.0
    %2359 = vmatpush.msra.mxu0 0.0
    %2360 = vmatpush.msra.mxu0 0.0
    %2361 = vmatpush.msra.mxu0 0.0
    %2362 = vmatpush.msra.mxu0 0.0
    %2363 = vmatpush.msra.mxu0 0.0
    %2364 = vmatpush.msra.mxu0 0.0
    %2365 = vmatpush.msra.mxu0 %v2245
    %2366 = vmatpush.msra.mxu0 %v2244
    %2367 = vmatmul.f32.gmra.mxu0 %v2349
    %v2368 = vpop.f32.mrf.mxu0
    %v2369 = vadd.f32 0.0, %v2368
    %2370 = vdwg.mxu0
    %v2371 = vperm.slane %v2369, 0
    %v2372 = vmul.f32 %v2224, %v2371
    %v2373 = vmul.f32 %v2225, %v2371
    %v2375 = vrot.slane %v2347, 1
    %v2376 = vsel %vm2274, %v2375, 0
    %2378 = vmatpush.msra.mxu0 0.0
    %2379 = vmatpush.msra.mxu0 0.0
    %2380 = vmatpush.msra.mxu0 0.0
    %2381 = vmatpush.msra.mxu0 0.0
    %2382 = vmatpush.msra.mxu0 0.0
    %2383 = vmatpush.msra.mxu0 0.0
    %2384 = vmatpush.msra.mxu0 0.0
    %2385 = vmatpush.msra.mxu0 0.0
    %2386 = vmatpush.msra.mxu0 0.0
    %2387 = vmatpush.msra.mxu0 0.0
    %2388 = vmatpush.msra.mxu0 0.0
    %2389 = vmatpush.msra.mxu0 0.0
    %2390 = vmatpush.msra.mxu0 0.0
    %2391 = vmatpush.msra.mxu0 0.0
    %2392 = vmatpush.msra.mxu0 %v2245
    %2393 = vmatpush.msra.mxu0 %v2244
    %2394 = vmatmul.f32.gmra.mxu0 %v2376
    %v2395 = vpop.f32.mrf.mxu0
    %v2396 = vadd.f32 0.0, %v2395
    %2397 = vdwg.mxu0
    %v2398 = vperm.slane %v2396, 0
    %v2399 = vadd.f32 %v2372, %v2398
    %v2400 = vadd.f32 %v2373, %v2398
    %v2401 = vmax.f32 %v2399, 0.0
    %v2402 = vmax.f32 %v2400, 0.0
    %v2403 = vld [vmem:[#allocation7] sm:$0xff]
    %v2404 = vld [vmem:[#allocation7 + $0x8] sm:$0xff]
    %v2406 = vsel %vm2274, %v2403, 0
    %v2409 = vsel %vm2274, %v2404, 0
    %2411 = vmatpush.msra.mxu0 0.0
    %2412 = vmatpush.msra.mxu0 0.0
    %2413 = vmatpush.msra.mxu0 0.0
    %2414 = vmatpush.msra.mxu0 0.0
    %2415 = vmatpush.msra.mxu0 0.0
    %2416 = vmatpush.msra.mxu0 0.0
    %2417 = vmatpush.msra.mxu0 0.0
    %2418 = vmatpush.msra.mxu0 0.0
    %2419 = vmatpush.msra.mxu0 0.0
    %2420 = vmatpush.msra.mxu0 0.0
    %2421 = vmatpush.msra.mxu0 0.0
    %2422 = vmatpush.msra.mxu0 0.0
    %2423 = vmatpush.msra.mxu0 0.0
    %2424 = vmatpush.msra.mxu0 0.0
    %2425 = vmatpush.msra.mxu0 %v2402
    %2426 = vmatpush.msra.mxu0 %v2401
    %2427 = vmatmul.f32.gmra.mxu0 %v2406
    %v2428 = vpop.f32.mrf.mxu0
    %v2429 = vadd.f32 0.0, %v2428
    %2430 = vmatmul.f32.gmra.mxu0 %v2409
    %v2431 = vpop.f32.mrf.mxu0
    %v2432 = vadd.f32 0.0, %v2431
    %2433 = vdwg.mxu0
    %v2434 = vpack.c.bf16 %v2432, %v2429
    %s2435 = scalar_lea.vmem [#allocation2], 768
    %v2436 = vld [vmem:[%s2435] sm:$0xf]
    %v2437 = vld [vmem:[%s2435 + $0x4] sm:$0xf]
    %v2438 = vld [vmem:[%s2435 + $0x8] sm:$0xf]
    %v2439 = vld [vmem:[%s2435 + $0xc] sm:$0xf]
    %v2440 = vld [vmem:[%s2435 + $0x10] sm:$0xf]
    %v2441 = vld [vmem:[%s2435 + $0x14] sm:$0xf]
    %v2442 = vld [vmem:[%s2435 + $0x18] sm:$0xf]
    %v2443 = vld [vmem:[%s2435 + $0x1c] sm:$0xf]
    %v2444 = vld [vmem:[%s2435 + $0x20] sm:$0xf]
    %v2445 = vld [vmem:[%s2435 + $0x24] sm:$0xf]
    %v2446 = vld [vmem:[%s2435 + $0x28] sm:$0xf]
    %v2447 = vld [vmem:[%s2435 + $0x2c] sm:$0xf]
    %v2448 = vld [vmem:[%s2435 + $0x30] sm:$0xf]
    %v2449 = vld [vmem:[%s2435 + $0x34] sm:$0xf]
    %v2450 = vld [vmem:[%s2435 + $0x38] sm:$0xf]
    %v2451 = vld [vmem:[%s2435 + $0x3c] sm:$0xf]
    %s2452 = scalar_lea.vmem [#allocation7], 16
    %v2453 = vld [vmem:[%s2452] sm:$0xff]
    %v2454 = vld [vmem:[%s2452 + $0x8] sm:$0xff]
    %v2456 = vsel %vm2274, %v2453, 0
    %v2459 = vsel %vm2274, %v2454, 0
    %2461 = vmatpush.msra.mxu0 0.0
    %2462 = vmatpush.msra.mxu0 0.0
    %2463 = vmatpush.msra.mxu0 0.0
    %2464 = vmatpush.msra.mxu0 0.0
    %2465 = vmatpush.msra.mxu0 0.0
    %2466 = vmatpush.msra.mxu0 0.0
    %2467 = vmatpush.msra.mxu0 0.0
    %2468 = vmatpush.msra.mxu0 0.0
    %2469 = vmatpush.msra.mxu0 0.0
    %2470 = vmatpush.msra.mxu0 0.0
    %2471 = vmatpush.msra.mxu0 0.0
    %2472 = vmatpush.msra.mxu0 0.0
    %2473 = vmatpush.msra.mxu0 0.0
    %2474 = vmatpush.msra.mxu0 0.0
    %2475 = vmatpush.msra.mxu0 %v2402
    %2476 = vmatpush.msra.mxu0 %v2401
    %2477 = vmatmul.f32.gmra.mxu0 %v2456
    %v2478 = vpop.f32.mrf.mxu0
    %v2479 = vadd.f32 0.0, %v2478
    %2480 = vmatmul.f32.gmra.mxu0 %v2459
    %v2481 = vpop.f32.mrf.mxu0
    %v2482 = vadd.f32 0.0, %v2481
    %2483 = vdwg.mxu0
    %v2484 = vpack.c.bf16 %v2482, %v2479
    %s2485 = scalar_lea.vmem [#allocation2], 832
    %v2486 = vld [vmem:[%s2485] sm:$0xf]
    %v2487 = vld [vmem:[%s2485 + $0x4] sm:$0xf]
    %v2488 = vld [vmem:[%s2485 + $0x8] sm:$0xf]
    %v2489 = vld [vmem:[%s2485 + $0xc] sm:$0xf]
    %v2490 = vld [vmem:[%s2485 + $0x10] sm:$0xf]
    %v2491 = vld [vmem:[%s2485 + $0x14] sm:$0xf]
    %v2492 = vld [vmem:[%s2485 + $0x18] sm:$0xf]
    %v2493 = vld [vmem:[%s2485 + $0x1c] sm:$0xf]
    %v2494 = vld [vmem:[%s2485 + $0x20] sm:$0xf]
    %v2495 = vld [vmem:[%s2485 + $0x24] sm:$0xf]
    %v2496 = vld [vmem:[%s2485 + $0x28] sm:$0xf]
    %v2497 = vld [vmem:[%s2485 + $0x2c] sm:$0xf]
    %v2498 = vld [vmem:[%s2485 + $0x30] sm:$0xf]
    %v2499 = vld [vmem:[%s2485 + $0x34] sm:$0xf]
    %v2500 = vld [vmem:[%s2485 + $0x38] sm:$0xf]
    %v2501 = vld [vmem:[%s2485 + $0x3c] sm:$0xf]
    %v2518 = vunpack.c.l.b16 %v2486
    %v2519 = vunpack.c.l.b16 %v2487
    %v2520 = vunpack.c.l.b16 %v2488
    %v2521 = vunpack.c.l.b16 %v2489
    %v2522 = vunpack.c.l.b16 %v2490
    %v2523 = vunpack.c.l.b16 %v2491
    %v2524 = vunpack.c.l.b16 %v2492
    %v2525 = vunpack.c.l.b16 %v2493
    %v2526 = vunpack.c.l.b16 %v2494
    %v2527 = vunpack.c.l.b16 %v2495
    %v2528 = vunpack.c.l.b16 %v2496
    %v2529 = vunpack.c.l.b16 %v2497
    %v2530 = vunpack.c.l.b16 %v2498
    %v2531 = vunpack.c.l.b16 %v2499
    %v2532 = vunpack.c.l.b16 %v2500
    %v2533 = vunpack.c.l.b16 %v2501
    %v2534 = vpack.c.b16 %v2519, %v2518
    %v2535 = vpack.c.b16 %v2521, %v2520
    %v2536 = vpack.c.b16 %v2523, %v2522
    %v2537 = vpack.c.b16 %v2525, %v2524
    %v2538 = vpack.c.b16 %v2527, %v2526
    %v2539 = vpack.c.b16 %v2529, %v2528
    %v2540 = vpack.c.b16 %v2531, %v2530
    %v2541 = vpack.c.b16 %v2533, %v2532
    %2550 = vmatpush.bf16.msra.mxu0 %v2541
    %2551 = vmatpush.bf16.msra.mxu0 %v2540
    %2552 = vmatpush.bf16.msra.mxu0 %v2539
    %2553 = vmatpush.bf16.msra.mxu0 %v2538
    %2554 = vmatpush.bf16.msra.mxu0 %v2537
    %2555 = vmatpush.bf16.msra.mxu0 %v2536
    %2556 = vmatpush.bf16.msra.mxu0 %v2535
    %2557 = vmatpush.bf16.msra.mxu0 %v2534
    %2558 = vmatmul.bf16.gmra.mxu0 %v2484
    %v2559 = vpop.f32.mrf.mxu0
    %v2560 = vadd.f32 0.0, %v2559
    %v2561 = vpop.f32.mrf.mxu0
    %v2562 = vadd.f32 0.0, %v2561
    %2563 = vdwg.mxu0
    %v2580 = vunpack.c.l.b16 %v2436
    %v2581 = vunpack.c.l.b16 %v2437
    %v2582 = vunpack.c.l.b16 %v2438
    %v2583 = vunpack.c.l.b16 %v2439
    %v2584 = vunpack.c.l.b16 %v2440
    %v2585 = vunpack.c.l.b16 %v2441
    %v2586 = vunpack.c.l.b16 %v2442
    %v2587 = vunpack.c.l.b16 %v2443
    %v2588 = vunpack.c.l.b16 %v2444
    %v2589 = vunpack.c.l.b16 %v2445
    %v2590 = vunpack.c.l.b16 %v2446
    %v2591 = vunpack.c.l.b16 %v2447
    %v2592 = vunpack.c.l.b16 %v2448
    %v2593 = vunpack.c.l.b16 %v2449
    %v2594 = vunpack.c.l.b16 %v2450
    %v2595 = vunpack.c.l.b16 %v2451
    %v2596 = vpack.c.b16 %v2581, %v2580
    %v2597 = vpack.c.b16 %v2583, %v2582
    %v2598 = vpack.c.b16 %v2585, %v2584
    %v2599 = vpack.c.b16 %v2587, %v2586
    %v2600 = vpack.c.b16 %v2589, %v2588
    %v2601 = vpack.c.b16 %v2591, %v2590
    %v2602 = vpack.c.b16 %v2593, %v2592
    %v2603 = vpack.c.b16 %v2595, %v2594
    %2612 = vmatpush.bf16.msra.mxu0 %v2603
    %2613 = vmatpush.bf16.msra.mxu0 %v2602
    %2614 = vmatpush.bf16.msra.mxu0 %v2601
    %2615 = vmatpush.bf16.msra.mxu0 %v2600
    %2616 = vmatpush.bf16.msra.mxu0 %v2599
    %2617 = vmatpush.bf16.msra.mxu0 %v2598
    %2618 = vmatpush.bf16.msra.mxu0 %v2597
    %2619 = vmatpush.bf16.msra.mxu0 %v2596
    %2620 = vmatmul.bf16.gmra.mxu0 %v2434
    %v2621 = vpop.f32.mrf.mxu0
    %v2622 = vadd.f32 %v2560, %v2621
    %v2623 = vpop.f32.mrf.mxu0
    %v2624 = vadd.f32 %v2562, %v2623
    %2625 = vdwg.mxu0
    %s2626 = scalar_lea.vmem [#allocation7], 32
    %v2627 = vld [vmem:[%s2626] sm:$0xff]
    %v2628 = vld [vmem:[%s2626 + $0x8] sm:$0xff]
    %v2630 = vsel %vm2274, %v2627, 0
    %v2633 = vsel %vm2274, %v2628, 0
    %2635 = vmatpush.msra.mxu0 0.0
    %2636 = vmatpush.msra.mxu0 0.0
    %2637 = vmatpush.msra.mxu0 0.0
    %2638 = vmatpush.msra.mxu0 0.0
    %2639 = vmatpush.msra.mxu0 0.0
    %2640 = vmatpush.msra.mxu0 0.0
    %2641 = vmatpush.msra.mxu0 0.0
    %2642 = vmatpush.msra.mxu0 0.0
    %2643 = vmatpush.msra.mxu0 0.0
    %2644 = vmatpush.msra.mxu0 0.0
    %2645 = vmatpush.msra.mxu0 0.0
    %2646 = vmatpush.msra.mxu0 0.0
    %2647 = vmatpush.msra.mxu0 0.0
    %2648 = vmatpush.msra.mxu0 0.0
    %2649 = vmatpush.msra.mxu0 %v2402
    %2650 = vmatpush.msra.mxu0 %v2401
    %2651 = vmatmul.f32.gmra.mxu0 %v2630
    %v2652 = vpop.f32.mrf.mxu0
    %v2653 = vadd.f32 0.0, %v2652
    %2654 = vmatmul.f32.gmra.mxu0 %v2633
    %v2655 = vpop.f32.mrf.mxu0
    %v2656 = vadd.f32 0.0, %v2655
    %2657 = vdwg.mxu0
    %v2658 = vpack.c.bf16 %v2656, %v2653
    %s2659 = scalar_lea.vmem [#allocation2], 896
    %v2660 = vld [vmem:[%s2659] sm:$0xf]
    %v2661 = vld [vmem:[%s2659 + $0x4] sm:$0xf]
    %v2662 = vld [vmem:[%s2659 + $0x8] sm:$0xf]
    %v2663 = vld [vmem:[%s2659 + $0xc] sm:$0xf]
    %v2664 = vld [vmem:[%s2659 + $0x10] sm:$0xf]
    %v2665 = vld [vmem:[%s2659 + $0x14] sm:$0xf]
    %v2666 = vld [vmem:[%s2659 + $0x18] sm:$0xf]
    %v2667 = vld [vmem:[%s2659 + $0x1c] sm:$0xf]
    %v2668 = vld [vmem:[%s2659 + $0x20] sm:$0xf]
    %v2669 = vld [vmem:[%s2659 + $0x24] sm:$0xf]
    %v2670 = vld [vmem:[%s2659 + $0x28] sm:$0xf]
    %v2671 = vld [vmem:[%s2659 + $0x2c] sm:$0xf]
    %v2672 = vld [vmem:[%s2659 + $0x30] sm:$0xf]
    %v2673 = vld [vmem:[%s2659 + $0x34] sm:$0xf]
    %v2674 = vld [vmem:[%s2659 + $0x38] sm:$0xf]
    %v2675 = vld [vmem:[%s2659 + $0x3c] sm:$0xf]
    %v2692 = vunpack.c.l.b16 %v2660
    %v2693 = vunpack.c.l.b16 %v2661
    %v2694 = vunpack.c.l.b16 %v2662
    %v2695 = vunpack.c.l.b16 %v2663
    %v2696 = vunpack.c.l.b16 %v2664
    %v2697 = vunpack.c.l.b16 %v2665
    %v2698 = vunpack.c.l.b16 %v2666
    %v2699 = vunpack.c.l.b16 %v2667
    %v2700 = vunpack.c.l.b16 %v2668
    %v2701 = vunpack.c.l.b16 %v2669
    %v2702 = vunpack.c.l.b16 %v2670
    %v2703 = vunpack.c.l.b16 %v2671
    %v2704 = vunpack.c.l.b16 %v2672
    %v2705 = vunpack.c.l.b16 %v2673
    %v2706 = vunpack.c.l.b16 %v2674
    %v2707 = vunpack.c.l.b16 %v2675
    %v2708 = vpack.c.b16 %v2693, %v2692
    %v2709 = vpack.c.b16 %v2695, %v2694
    %v2710 = vpack.c.b16 %v2697, %v2696
    %v2711 = vpack.c.b16 %v2699, %v2698
    %v2712 = vpack.c.b16 %v2701, %v2700
    %v2713 = vpack.c.b16 %v2703, %v2702
    %v2714 = vpack.c.b16 %v2705, %v2704
    %v2715 = vpack.c.b16 %v2707, %v2706
    %2724 = vmatpush.bf16.msra.mxu0 %v2715
    %2725 = vmatpush.bf16.msra.mxu0 %v2714
    %2726 = vmatpush.bf16.msra.mxu0 %v2713
    %2727 = vmatpush.bf16.msra.mxu0 %v2712
    %2728 = vmatpush.bf16.msra.mxu0 %v2711
    %2729 = vmatpush.bf16.msra.mxu0 %v2710
    %2730 = vmatpush.bf16.msra.mxu0 %v2709
    %2731 = vmatpush.bf16.msra.mxu0 %v2708
    %2732 = vmatmul.bf16.gmra.mxu0 %v2658
    %v2733 = vpop.f32.mrf.mxu0
    %v2734 = vadd.f32 0.0, %v2733
    %v2735 = vpop.f32.mrf.mxu0
    %v2736 = vadd.f32 0.0, %v2735
    %2737 = vdwg.mxu0
    %v2738 = vadd.f32 %v2622, %v2734
    %v2739 = vadd.f32 %v2624, %v2736
    %s2740 = scalar_lea.vmem [#allocation19], 8
    %v2741 = vld [vmem:[%s2740] sm:$0x3]
    %v2742 = vadd.f32 %v2738, %v2739
    %v2743 = vrot.slane %v2742, 4
    %v2744 = vadd.f32 %v2742, %v2743
    %v2745 = vrot.slane %v2744, 2
    %v2746 = vadd.f32 %v2744, %v2745
    %v2747 = vrot.slane %v2746, 1
    %v2748 = vadd.f32 %v2746, %v2747
    %2749 = vmatpush.msra.mxu0 %v2243
    %2750 = vmatpush.msra.mxu0 %v2242
    %2751 = vmatpush.msra.mxu0 %v2241
    %2752 = vmatpush.msra.mxu0 %v2240
    %2753 = vmatpush.msra.mxu0 %v2239
    %2754 = vmatpush.msra.mxu0 %v2238
    %2755 = vmatpush.msra.mxu0 %v2237
    %2756 = vmatpush.msra.mxu0 %v2236
    %2757 = vmatpush.msra.mxu0 %v2235
    %2758 = vmatpush.msra.mxu0 %v2234
    %2759 = vmatpush.msra.mxu0 %v2233
    %2760 = vmatpush.msra.mxu0 %v2232
    %2761 = vmatpush.msra.mxu0 %v2231
    %2762 = vmatpush.msra.mxu0 %v2230
    %2763 = vmatpush.msra.mxu0 %v2229
    %2764 = vmatpush.msra.mxu0 %v2228
    %2765 = vmatmul.f32.gmra.mxu0 %v2748
    %v2766 = vpop.f32.mrf.mxu0
    %v2767 = vadd.f32 0.0, %v2766
    %2768 = vdwg.mxu0
    %v2769 = vmul.f32 %v2767, 0.0078125
    %v2771 = vsel %vm2274, %v2769, 0
    %2773 = vmatpush.msra.mxu0 0.0
    %2774 = vmatpush.msra.mxu0 0.0
    %2775 = vmatpush.msra.mxu0 0.0
    %2776 = vmatpush.msra.mxu0 0.0
    %2777 = vmatpush.msra.mxu0 0.0
    %2778 = vmatpush.msra.mxu0 0.0
    %2779 = vmatpush.msra.mxu0 0.0
    %2780 = vmatpush.msra.mxu0 0.0
    %2781 = vmatpush.msra.mxu0 0.0
    %2782 = vmatpush.msra.mxu0 0.0
    %2783 = vmatpush.msra.mxu0 0.0
    %2784 = vmatpush.msra.mxu0 0.0
    %2785 = vmatpush.msra.mxu0 0.0
    %2786 = vmatpush.msra.mxu0 0.0
    %2787 = vmatpush.msra.mxu0 %v2245
    %2788 = vmatpush.msra.mxu0 %v2244
    %2789 = vmatmul.f32.gmra.mxu0 %v2771
    %v2790 = vpop.f32.mrf.mxu0
    %v2791 = vadd.f32 0.0, %v2790
    %2792 = vdwg.mxu0
    %v2793 = vperm.slane %v2791, 0
    %v2794 = vsub.f32 %v2738, %v2793
    %v2795 = vsub.f32 %v2739, %v2793
    %v2796 = vmul.f32 %v2794, %v2794
    %v2797 = vmul.f32 %v2795, %v2795
    %v2798 = vadd.f32 %v2796, %v2797
    %v2799 = vrot.slane %v2798, 4
    %v2800 = vadd.f32 %v2798, %v2799
    %v2801 = vrot.slane %v2800, 2
    %v2802 = vadd.f32 %v2800, %v2801
    %v2803 = vrot.slane %v2802, 1
    %v2804 = vadd.f32 %v2802, %v2803
    %2805 = vmatpush.msra.mxu0 %v2243
    %2806 = vmatpush.msra.mxu0 %v2242
    %2807 = vmatpush.msra.mxu0 %v2241
    %2808 = vmatpush.msra.mxu0 %v2240
    %2809 = vmatpush.msra.mxu0 %v2239
    %2810 = vmatpush.msra.mxu0 %v2238
    %2811 = vmatpush.msra.mxu0 %v2237
    %2812 = vmatpush.msra.mxu0 %v2236
    %2813 = vmatpush.msra.mxu0 %v2235
    %2814 = vmatpush.msra.mxu0 %v2234
    %2815 = vmatpush.msra.mxu0 %v2233
    %2816 = vmatpush.msra.mxu0 %v2232
    %2817 = vmatpush.msra.mxu0 %v2231
    %2818 = vmatpush.msra.mxu0 %v2230
    %2819 = vmatpush.msra.mxu0 %v2229
    %2820 = vmatpush.msra.mxu0 %v2228
    %2821 = vmatmul.f32.gmra.mxu0 %v2804
    %v2822 = vpop.f32.mrf.mxu0
    %v2823 = vadd.f32 0.0, %v2822
    %2824 = vdwg.mxu0
    %v2825 = vmul.f32 %v2823, 0.0078125
    %v2826 = vadd.f32 %v2825, 1e-05
    %v2827 = vrsqrt.pop %v2826
    %v2828 = vmul.f32 %v2827, %v2826
    %v2829 = vmul.f32 %v2828, %v2827
    %v2830 = vmul.f32 0.5, %v2829
    %v2831 = vsub.f32 1.5, %v2830
    %v2832 = vmul.f32 %v2827, %v2831
    %vm2833 = vweird.f32 %v2826
    %vm2834 = vweird.f32 %v2827
    %vm2835 = vmor %vm2833, %vm2834
    %v2836 = vsel %vm2835, %v2827, %v2832
    %v2837 = vmul.f32 %v2741, %v2836
    %v2838 = vmul.f32 %v2769, %v2837
    %v2840 = vrot.slane %v2838, 7
    %v2842 = vsub.f32 %v2741, %v2840
    %v2844 = vsel %vm2274, %v2837, 0
    %2846 = vmatpush.msra.mxu0 0.0
    %2847 = vmatpush.msra.mxu0 0.0
    %2848 = vmatpush.msra.mxu0 0.0
    %2849 = vmatpush.msra.mxu0 0.0
    %2850 = vmatpush.msra.mxu0 0.0
    %2851 = vmatpush.msra.mxu0 0.0
    %2852 = vmatpush.msra.mxu0 0.0
    %2853 = vmatpush.msra.mxu0 0.0
    %2854 = vmatpush.msra.mxu0 0.0
    %2855 = vmatpush.msra.mxu0 0.0
    %2856 = vmatpush.msra.mxu0 0.0
    %2857 = vmatpush.msra.mxu0 0.0
    %2858 = vmatpush.msra.mxu0 0.0
    %2859 = vmatpush.msra.mxu0 0.0
    %2860 = vmatpush.msra.mxu0 %v2245
    %2861 = vmatpush.msra.mxu0 %v2244
    %2862 = vmatmul.f32.gmra.mxu0 %v2844
    %v2863 = vpop.f32.mrf.mxu0
    %v2864 = vadd.f32 0.0, %v2863
    %2865 = vdwg.mxu0
    %v2866 = vperm.slane %v2864, 0
    %v2867 = vmul.f32 %v2738, %v2866
    %v2868 = vmul.f32 %v2739, %v2866
    %v2870 = vrot.slane %v2842, 1
    %v2871 = vsel %vm2274, %v2870, 0
    %2873 = vmatpush.msra.mxu0 0.0
    %2874 = vmatpush.msra.mxu0 0.0
    %2875 = vmatpush.msra.mxu0 0.0
    %2876 = vmatpush.msra.mxu0 0.0
    %2877 = vmatpush.msra.mxu0 0.0
    %2878 = vmatpush.msra.mxu0 0.0
    %2879 = vmatpush.msra.mxu0 0.0
    %2880 = vmatpush.msra.mxu0 0.0
    %2881 = vmatpush.msra.mxu0 0.0
    %2882 = vmatpush.msra.mxu0 0.0
    %2883 = vmatpush.msra.mxu0 0.0
    %2884 = vmatpush.msra.mxu0 0.0
    %2885 = vmatpush.msra.mxu0 0.0
    %2886 = vmatpush.msra.mxu0 0.0
    %2887 = vmatpush.msra.mxu0 %v2245
    %2888 = vmatpush.msra.mxu0 %v2244
    %2889 = vmatmul.f32.gmra.mxu0 %v2871
    %v2890 = vpop.f32.mrf.mxu0
    %v2891 = vadd.f32 0.0, %v2890
    %2892 = vdwg.mxu0
    %v2893 = vperm.slane %v2891, 0
    %v2894 = vadd.f32 %v2867, %v2893
    %v2895 = vadd.f32 %v2868, %v2893
    %s2896 = scalar_lea.vmem [#allocation2], 1344
    %v2897 = vld [vmem:[%s2896] sm:$0xf]
    %v2898 = vld [vmem:[%s2896 + $0x4] sm:$0xf]
    %v2899 = vld [vmem:[%s2896 + $0x8] sm:$0xf]
    %v2900 = vld [vmem:[%s2896 + $0xc] sm:$0xf]
    %v2901 = vld [vmem:[%s2896 + $0x10] sm:$0xf]
    %v2902 = vld [vmem:[%s2896 + $0x14] sm:$0xf]
    %v2903 = vld [vmem:[%s2896 + $0x18] sm:$0xf]
    %v2904 = vld [vmem:[%s2896 + $0x1c] sm:$0xf]
    %v2905 = vld [vmem:[%s2896 + $0x20] sm:$0xf]
    %v2906 = vld [vmem:[%s2896 + $0x24] sm:$0xf]
    %v2907 = vld [vmem:[%s2896 + $0x28] sm:$0xf]
    %v2908 = vld [vmem:[%s2896 + $0x2c] sm:$0xf]
    %v2909 = vld [vmem:[%s2896 + $0x30] sm:$0xf]
    %v2910 = vld [vmem:[%s2896 + $0x34] sm:$0xf]
    %v2911 = vld [vmem:[%s2896 + $0x38] sm:$0xf]
    %v2912 = vld [vmem:[%s2896 + $0x3c] sm:$0xf]
    %v2929 = vunpack.c.l.b16 %v2897
    %v2930 = vunpack.c.l.b16 %v2898
    %v2931 = vunpack.c.l.b16 %v2899
    %v2932 = vunpack.c.l.b16 %v2900
    %v2933 = vunpack.c.l.b16 %v2901
    %v2934 = vunpack.c.l.b16 %v2902
    %v2935 = vunpack.c.l.b16 %v2903
    %v2936 = vunpack.c.l.b16 %v2904
    %v2937 = vunpack.c.l.b16 %v2905
    %v2938 = vunpack.c.l.b16 %v2906
    %v2939 = vunpack.c.l.b16 %v2907
    %v2940 = vunpack.c.l.b16 %v2908
    %v2941 = vunpack.c.l.b16 %v2909
    %v2942 = vunpack.c.l.b16 %v2910
    %v2943 = vunpack.c.l.b16 %v2911
    %v2944 = vunpack.c.l.b16 %v2912
    %v2945 = vpack.c.b16 %v2930, %v2929
    %v2946 = vpack.c.b16 %v2932, %v2931
    %v2947 = vpack.c.b16 %v2934, %v2933
    %v2948 = vpack.c.b16 %v2936, %v2935
    %v2949 = vpack.c.b16 %v2938, %v2937
    %v2950 = vpack.c.b16 %v2940, %v2939
    %v2951 = vpack.c.b16 %v2942, %v2941
    %v2952 = vpack.c.b16 %v2944, %v2943
    %2961 = vmatpush.bf16.msra.mxu0 %v2952
    %2962 = vmatpush.bf16.msra.mxu0 %v2951
    %2963 = vmatpush.bf16.msra.mxu0 %v2950
    %2964 = vmatpush.bf16.msra.mxu0 %v2949
    %2965 = vmatpush.bf16.msra.mxu0 %v2948
    %2966 = vmatpush.bf16.msra.mxu0 %v2947
    %2967 = vmatpush.bf16.msra.mxu0 %v2946
    %2968 = vmatpush.bf16.msra.mxu0 %v2945
    %2969 = vmatmul.bf16.gmra.mxu0 %v1970
    %v2970 = vpop.f32.mrf.mxu0
    %v2971 = vadd.f32 0.0, %v2970
    %v2972 = vpop.f32.mrf.mxu0
    %v2973 = vadd.f32 0.0, %v2972
    %2974 = vdwg.mxu0
    %s2975 = scalar_lea.vmem [#allocation19], 10
    %v2976 = vld [vmem:[%s2975] sm:$0x3]
    %v2977 = vadd.f32 %v2971, %v2973
    %v2978 = vrot.slane %v2977, 4
    %v2979 = vadd.f32 %v2977, %v2978
    %v2980 = vrot.slane %v2979, 2
    %v2981 = vadd.f32 %v2979, %v2980
    %v2982 = vrot.slane %v2981, 1
    %v2983 = vadd.f32 %v2981, %v2982
    %2984 = vmatpush.msra.mxu0 %v2243
    %2985 = vmatpush.msra.mxu0 %v2242
    %2986 = vmatpush.msra.mxu0 %v2241
    %2987 = vmatpush.msra.mxu0 %v2240
    %2988 = vmatpush.msra.mxu0 %v2239
    %2989 = vmatpush.msra.mxu0 %v2238
    %2990 = vmatpush.msra.mxu0 %v2237
    %2991 = vmatpush.msra.mxu0 %v2236
    %2992 = vmatpush.msra.mxu0 %v2235
    %2993 = vmatpush.msra.mxu0 %v2234
    %2994 = vmatpush.msra.mxu0 %v2233
    %2995 = vmatpush.msra.mxu0 %v2232
    %2996 = vmatpush.msra.mxu0 %v2231
    %2997 = vmatpush.msra.mxu0 %v2230
    %2998 = vmatpush.msra.mxu0 %v2229
    %2999 = vmatpush.msra.mxu0 %v2228
    %3000 = vmatmul.f32.gmra.mxu0 %v2983
    %v3001 = vpop.f32.mrf.mxu0
    %v3002 = vadd.f32 0.0, %v3001
    %3003 = vdwg.mxu0
    %v3004 = vmul.f32 %v3002, 0.0078125
    %v3006 = vsel %vm2274, %v3004, 0
    %3008 = vmatpush.msra.mxu0 0.0
    %3009 = vmatpush.msra.mxu0 0.0
    %3010 = vmatpush.msra.mxu0 0.0
    %3011 = vmatpush.msra.mxu0 0.0
    %3012 = vmatpush.msra.mxu0 0.0
    %3013 = vmatpush.msra.mxu0 0.0
    %3014 = vmatpush.msra.mxu0 0.0
    %3015 = vmatpush.msra.mxu0 0.0
    %3016 = vmatpush.msra.mxu0 0.0
    %3017 = vmatpush.msra.mxu0 0.0
    %3018 = vmatpush.msra.mxu0 0.0
    %3019 = vmatpush.msra.mxu0 0.0
    %3020 = vmatpush.msra.mxu0 0.0
    %3021 = vmatpush.msra.mxu0 0.0
    %3022 = vmatpush.msra.mxu0 %v2245
    %3023 = vmatpush.msra.mxu0 %v2244
    %3024 = vmatmul.f32.gmra.mxu0 %v3006
    %v3025 = vpop.f32.mrf.mxu0
    %v3026 = vadd.f32 0.0, %v3025
    %3027 = vdwg.mxu0
    %v3028 = vperm.slane %v3026, 0
    %v3029 = vsub.f32 %v2971, %v3028
    %v3030 = vsub.f32 %v2973, %v3028
    %v3031 = vmul.f32 %v3029, %v3029
    %v3032 = vmul.f32 %v3030, %v3030
    %v3033 = vadd.f32 %v3031, %v3032
    %v3034 = vrot.slane %v3033, 4
    %v3035 = vadd.f32 %v3033, %v3034
    %v3036 = vrot.slane %v3035, 2
    %v3037 = vadd.f32 %v3035, %v3036
    %v3038 = vrot.slane %v3037, 1
    %v3039 = vadd.f32 %v3037, %v3038
    %3040 = vmatpush.msra.mxu0 %v2243
    %3041 = vmatpush.msra.mxu0 %v2242
    %3042 = vmatpush.msra.mxu0 %v2241
    %3043 = vmatpush.msra.mxu0 %v2240
    %3044 = vmatpush.msra.mxu0 %v2239
    %3045 = vmatpush.msra.mxu0 %v2238
    %3046 = vmatpush.msra.mxu0 %v2237
    %3047 = vmatpush.msra.mxu0 %v2236
    %3048 = vmatpush.msra.mxu0 %v2235
    %3049 = vmatpush.msra.mxu0 %v2234
    %3050 = vmatpush.msra.mxu0 %v2233
    %3051 = vmatpush.msra.mxu0 %v2232
    %3052 = vmatpush.msra.mxu0 %v2231
    %3053 = vmatpush.msra.mxu0 %v2230
    %3054 = vmatpush.msra.mxu0 %v2229
    %3055 = vmatpush.msra.mxu0 %v2228
    %3056 = vmatmul.f32.gmra.mxu0 %v3039
    %v3057 = vpop.f32.mrf.mxu0
    %v3058 = vadd.f32 0.0, %v3057
    %3059 = vdwg.mxu0
    %v3060 = vmul.f32 %v3058, 0.0078125
    %v3061 = vadd.f32 %v3060, 1e-05
    %v3062 = vrsqrt.pop %v3061
    %v3063 = vmul.f32 %v3062, %v3061
    %v3064 = vmul.f32 %v3063, %v3062
    %v3065 = vmul.f32 0.5, %v3064
    %v3066 = vsub.f32 1.5, %v3065
    %v3067 = vmul.f32 %v3062, %v3066
    %vm3068 = vweird.f32 %v3061
    %vm3069 = vweird.f32 %v3062
    %vm3070 = vmor %vm3068, %vm3069
    %v3071 = vsel %vm3070, %v3062, %v3067
    %v3072 = vmul.f32 %v2976, %v3071
    %v3073 = vmul.f32 %v3004, %v3072
    %v3075 = vrot.slane %v3073, 7
    %v3077 = vsub.f32 %v2976, %v3075
    %v3079 = vsel %vm2274, %v3072, 0
    %3081 = vmatpush.msra.mxu0 0.0
    %3082 = vmatpush.msra.mxu0 0.0
    %3083 = vmatpush.msra.mxu0 0.0
    %3084 = vmatpush.msra.mxu0 0.0
    %3085 = vmatpush.msra.mxu0 0.0
    %3086 = vmatpush.msra.mxu0 0.0
    %3087 = vmatpush.msra.mxu0 0.0
    %3088 = vmatpush.msra.mxu0 0.0
    %3089 = vmatpush.msra.mxu0 0.0
    %3090 = vmatpush.msra.mxu0 0.0
    %3091 = vmatpush.msra.mxu0 0.0
    %3092 = vmatpush.msra.mxu0 0.0
    %3093 = vmatpush.msra.mxu0 0.0
    %3094 = vmatpush.msra.mxu0 0.0
    %3095 = vmatpush.msra.mxu0 %v2245
    %3096 = vmatpush.msra.mxu0 %v2244
    %3097 = vmatmul.f32.gmra.mxu0 %v3079
    %v3098 = vpop.f32.mrf.mxu0
    %v3099 = vadd.f32 0.0, %v3098
    %3100 = vdwg.mxu0
    %v3101 = vperm.slane %v3099, 0
    %v3102 = vmul.f32 %v2971, %v3101
    %v3103 = vmul.f32 %v2973, %v3101
    %v3105 = vrot.slane %v3077, 1
    %v3106 = vsel %vm2274, %v3105, 0
    %3108 = vmatpush.msra.mxu0 0.0
    %3109 = vmatpush.msra.mxu0 0.0
    %3110 = vmatpush.msra.mxu0 0.0
    %3111 = vmatpush.msra.mxu0 0.0
    %3112 = vmatpush.msra.mxu0 0.0
    %3113 = vmatpush.msra.mxu0 0.0
    %3114 = vmatpush.msra.mxu0 0.0
    %3115 = vmatpush.msra.mxu0 0.0
    %3116 = vmatpush.msra.mxu0 0.0
    %3117 = vmatpush.msra.mxu0 0.0
    %3118 = vmatpush.msra.mxu0 0.0
    %3119 = vmatpush.msra.mxu0 0.0
    %3120 = vmatpush.msra.mxu0 0.0
    %3121 = vmatpush.msra.mxu0 0.0
    %3122 = vmatpush.msra.mxu0 %v2245
    %3123 = vmatpush.msra.mxu0 %v2244
    %3124 = vmatmul.f32.gmra.mxu0 %v3106
    %v3125 = vpop.f32.mrf.mxu0
    %v3126 = vadd.f32 0.0, %v3125
    %3127 = vdwg.mxu0
    %v3128 = vperm.slane %v3126, 0
    %v3129 = vadd.f32 %v3102, %v3128
    %v3130 = vadd.f32 %v3103, %v3128
    %v3131 = vadd.f32 %v2894, %v3129
    %v3132 = vadd.f32 %v2895, %v3130
    %v3133 = vmax.f32 %v3131, 0.0
    %v3134 = vmax.f32 %v3132, 0.0
    %v3135 = vld [vmem:[#allocation8] sm:$0xff]
    %v3137 = vsel %vm2274, %v3135, 0
    %3139 = vmatpush.msra.mxu0 0.0
    %3140 = vmatpush.msra.mxu0 0.0
    %3141 = vmatpush.msra.mxu0 0.0
    %3142 = vmatpush.msra.mxu0 0.0
    %3143 = vmatpush.msra.mxu0 0.0
    %3144 = vmatpush.msra.mxu0 0.0
    %3145 = vmatpush.msra.mxu0 0.0
    %3146 = vmatpush.msra.mxu0 0.0
    %3147 = vmatpush.msra.mxu0 0.0
    %3148 = vmatpush.msra.mxu0 0.0
    %3149 = vmatpush.msra.mxu0 0.0
    %3150 = vmatpush.msra.mxu0 0.0
    %3151 = vmatpush.msra.mxu0 0.0
    %3152 = vmatpush.msra.mxu0 0.0
    %3153 = vmatpush.msra.mxu0 %v3134
    %3154 = vmatpush.msra.mxu0 %v3133
    %3155 = vmatmul.f32.gmra.mxu0 %v3137
    %v3156 = vpop.f32.mrf.mxu0
    %v3157 = vadd.f32 0.0, %v3156
    %3158 = vdwg.mxu0
    %v3159 = vpack.c.bf16 %v3157, %v3157
    %s3160 = scalar_lea.vmem [#allocation2], 960
    %v3161 = vld [vmem:[%s3160] sm:$0xf]
    %v3162 = vld [vmem:[%s3160 + $0x4] sm:$0xf]
    %v3163 = vld [vmem:[%s3160 + $0x8] sm:$0xf]
    %v3164 = vld [vmem:[%s3160 + $0xc] sm:$0xf]
    %v3165 = vld [vmem:[%s3160 + $0x10] sm:$0xf]
    %v3166 = vld [vmem:[%s3160 + $0x14] sm:$0xf]
    %v3167 = vld [vmem:[%s3160 + $0x18] sm:$0xf]
    %v3168 = vld [vmem:[%s3160 + $0x1c] sm:$0xf]
    %v3169 = vld [vmem:[%s3160 + $0x20] sm:$0xf]
    %v3170 = vld [vmem:[%s3160 + $0x24] sm:$0xf]
    %v3171 = vld [vmem:[%s3160 + $0x28] sm:$0xf]
    %v3172 = vld [vmem:[%s3160 + $0x2c] sm:$0xf]
    %v3173 = vld [vmem:[%s3160 + $0x30] sm:$0xf]
    %v3174 = vld [vmem:[%s3160 + $0x34] sm:$0xf]
    %v3175 = vld [vmem:[%s3160 + $0x38] sm:$0xf]
    %v3176 = vld [vmem:[%s3160 + $0x3c] sm:$0xf]
    %s3177 = scalar_lea.vmem [#allocation8], 8
    %v3178 = vld [vmem:[%s3177] sm:$0xff]
    %v3180 = vsel %vm2274, %v3178, 0
    %3182 = vmatpush.msra.mxu0 0.0
    %3183 = vmatpush.msra.mxu0 0.0
    %3184 = vmatpush.msra.mxu0 0.0
    %3185 = vmatpush.msra.mxu0 0.0
    %3186 = vmatpush.msra.mxu0 0.0
    %3187 = vmatpush.msra.mxu0 0.0
    %3188 = vmatpush.msra.mxu0 0.0
    %3189 = vmatpush.msra.mxu0 0.0
    %3190 = vmatpush.msra.mxu0 0.0
    %3191 = vmatpush.msra.mxu0 0.0
    %3192 = vmatpush.msra.mxu0 0.0
    %3193 = vmatpush.msra.mxu0 0.0
    %3194 = vmatpush.msra.mxu0 0.0
    %3195 = vmatpush.msra.mxu0 0.0
    %3196 = vmatpush.msra.mxu0 %v3134
    %3197 = vmatpush.msra.mxu0 %v3133
    %3198 = vmatmul.f32.gmra.mxu0 %v3180
    %v3199 = vpop.f32.mrf.mxu0
    %v3200 = vadd.f32 0.0, %v3199
    %3201 = vdwg.mxu0
    %v3202 = vpack.c.bf16 %v3200, %v3200
    %s3203 = scalar_lea.vmem [#allocation2], 1024
    %v3204 = vld [vmem:[%s3203] sm:$0xf]
    %v3205 = vld [vmem:[%s3203 + $0x4] sm:$0xf]
    %v3206 = vld [vmem:[%s3203 + $0x8] sm:$0xf]
    %v3207 = vld [vmem:[%s3203 + $0xc] sm:$0xf]
    %v3208 = vld [vmem:[%s3203 + $0x10] sm:$0xf]
    %v3209 = vld [vmem:[%s3203 + $0x14] sm:$0xf]
    %v3210 = vld [vmem:[%s3203 + $0x18] sm:$0xf]
    %v3211 = vld [vmem:[%s3203 + $0x1c] sm:$0xf]
    %v3212 = vld [vmem:[%s3203 + $0x20] sm:$0xf]
    %v3213 = vld [vmem:[%s3203 + $0x24] sm:$0xf]
    %v3214 = vld [vmem:[%s3203 + $0x28] sm:$0xf]
    %v3215 = vld [vmem:[%s3203 + $0x2c] sm:$0xf]
    %v3216 = vld [vmem:[%s3203 + $0x30] sm:$0xf]
    %v3217 = vld [vmem:[%s3203 + $0x34] sm:$0xf]
    %v3218 = vld [vmem:[%s3203 + $0x38] sm:$0xf]
    %v3219 = vld [vmem:[%s3203 + $0x3c] sm:$0xf]
    %v3236 = vunpack.c.l.b16 %v3204
    %v3237 = vunpack.c.l.b16 %v3205
    %v3238 = vunpack.c.l.b16 %v3206
    %v3239 = vunpack.c.l.b16 %v3207
    %v3240 = vunpack.c.l.b16 %v3208
    %v3241 = vunpack.c.l.b16 %v3209
    %v3242 = vunpack.c.l.b16 %v3210
    %v3243 = vunpack.c.l.b16 %v3211
    %v3244 = vunpack.c.l.b16 %v3212
    %v3245 = vunpack.c.l.b16 %v3213
    %v3246 = vunpack.c.l.b16 %v3214
    %v3247 = vunpack.c.l.b16 %v3215
    %v3248 = vunpack.c.l.b16 %v3216
    %v3249 = vunpack.c.l.b16 %v3217
    %v3250 = vunpack.c.l.b16 %v3218
    %v3251 = vunpack.c.l.b16 %v3219
    %v3252 = vpack.c.b16 %v3237, %v3236
    %v3253 = vpack.c.b16 %v3239, %v3238
    %v3254 = vpack.c.b16 %v3241, %v3240
    %v3255 = vpack.c.b16 %v3243, %v3242
    %v3256 = vpack.c.b16 %v3245, %v3244
    %v3257 = vpack.c.b16 %v3247, %v3246
    %v3258 = vpack.c.b16 %v3249, %v3248
    %v3259 = vpack.c.b16 %v3251, %v3250
    %3268 = vmatpush.bf16.msra.mxu0 %v3259
    %3269 = vmatpush.bf16.msra.mxu0 %v3258
    %3270 = vmatpush.bf16.msra.mxu0 %v3257
    %3271 = vmatpush.bf16.msra.mxu0 %v3256
    %3272 = vmatpush.bf16.msra.mxu0 %v3255
    %3273 = vmatpush.bf16.msra.mxu0 %v3254
    %3274 = vmatpush.bf16.msra.mxu0 %v3253
    %3275 = vmatpush.bf16.msra.mxu0 %v3252
    %3276 = vmatmul.bf16.gmra.mxu0 %v3202
    %v3277 = vpop.f32.mrf.mxu0
    %v3278 = vadd.f32 0.0, %v3277
    %v3279 = vpop.f32.mrf.mxu0
    %3280 = vdwg.mxu0
    %v3297 = vunpack.c.l.b16 %v3161
    %v3298 = vunpack.c.l.b16 %v3162
    %v3299 = vunpack.c.l.b16 %v3163
    %v3300 = vunpack.c.l.b16 %v3164
    %v3301 = vunpack.c.l.b16 %v3165
    %v3302 = vunpack.c.l.b16 %v3166
    %v3303 = vunpack.c.l.b16 %v3167
    %v3304 = vunpack.c.l.b16 %v3168
    %v3305 = vunpack.c.l.b16 %v3169
    %v3306 = vunpack.c.l.b16 %v3170
    %v3307 = vunpack.c.l.b16 %v3171
    %v3308 = vunpack.c.l.b16 %v3172
    %v3309 = vunpack.c.l.b16 %v3173
    %v3310 = vunpack.c.l.b16 %v3174
    %v3311 = vunpack.c.l.b16 %v3175
    %v3312 = vunpack.c.l.b16 %v3176
    %v3313 = vpack.c.b16 %v3298, %v3297
    %v3314 = vpack.c.b16 %v3300, %v3299
    %v3315 = vpack.c.b16 %v3302, %v3301
    %v3316 = vpack.c.b16 %v3304, %v3303
    %v3317 = vpack.c.b16 %v3306, %v3305
    %v3318 = vpack.c.b16 %v3308, %v3307
    %v3319 = vpack.c.b16 %v3310, %v3309
    %v3320 = vpack.c.b16 %v3312, %v3311
    %3329 = vmatpush.bf16.msra.mxu0 %v3320
    %3330 = vmatpush.bf16.msra.mxu0 %v3319
    %3331 = vmatpush.bf16.msra.mxu0 %v3318
    %3332 = vmatpush.bf16.msra.mxu0 %v3317
    %3333 = vmatpush.bf16.msra.mxu0 %v3316
    %3334 = vmatpush.bf16.msra.mxu0 %v3315
    %3335 = vmatpush.bf16.msra.mxu0 %v3314
    %3336 = vmatpush.bf16.msra.mxu0 %v3313
    %3337 = vmatmul.bf16.gmra.mxu0 %v3159
    %v3338 = vpop.f32.mrf.mxu0
    %v3339 = vadd.f32 %v3278, %v3338
    %v3340 = vpop.f32.mrf.mxu0
    %3341 = vdwg.mxu0
    %s3342 = scalar_lea.vmem [#allocation8], 16
    %v3343 = vld [vmem:[%s3342] sm:$0xff]
    %v3345 = vsel %vm2274, %v3343, 0
    %3347 = vmatpush.msra.mxu0 0.0
    %3348 = vmatpush.msra.mxu0 0.0
    %3349 = vmatpush.msra.mxu0 0.0
    %3350 = vmatpush.msra.mxu0 0.0
    %3351 = vmatpush.msra.mxu0 0.0
    %3352 = vmatpush.msra.mxu0 0.0
    %3353 = vmatpush.msra.mxu0 0.0
    %3354 = vmatpush.msra.mxu0 0.0
    %3355 = vmatpush.msra.mxu0 0.0
    %3356 = vmatpush.msra.mxu0 0.0
    %3357 = vmatpush.msra.mxu0 0.0
    %3358 = vmatpush.msra.mxu0 0.0
    %3359 = vmatpush.msra.mxu0 0.0
    %3360 = vmatpush.msra.mxu0 0.0
    %3361 = vmatpush.msra.mxu0 %v3134
    %3362 = vmatpush.msra.mxu0 %v3133
    %3363 = vmatmul.f32.gmra.mxu0 %v3345
    %v3364 = vpop.f32.mrf.mxu0
    %v3365 = vadd.f32 0.0, %v3364
    %3366 = vdwg.mxu0
    %v3367 = vpack.c.bf16 %v3365, %v3365
    %s3368 = scalar_lea.vmem [#allocation2], 1088
    %v3369 = vld [vmem:[%s3368] sm:$0xf]
    %v3370 = vld [vmem:[%s3368 + $0x4] sm:$0xf]
    %v3371 = vld [vmem:[%s3368 + $0x8] sm:$0xf]
    %v3372 = vld [vmem:[%s3368 + $0xc] sm:$0xf]
    %v3373 = vld [vmem:[%s3368 + $0x10] sm:$0xf]
    %v3374 = vld [vmem:[%s3368 + $0x14] sm:$0xf]
    %v3375 = vld [vmem:[%s3368 + $0x18] sm:$0xf]
    %v3376 = vld [vmem:[%s3368 + $0x1c] sm:$0xf]
    %v3377 = vld [vmem:[%s3368 + $0x20] sm:$0xf]
    %v3378 = vld [vmem:[%s3368 + $0x24] sm:$0xf]
    %v3379 = vld [vmem:[%s3368 + $0x28] sm:$0xf]
    %v3380 = vld [vmem:[%s3368 + $0x2c] sm:$0xf]
    %v3381 = vld [vmem:[%s3368 + $0x30] sm:$0xf]
    %v3382 = vld [vmem:[%s3368 + $0x34] sm:$0xf]
    %v3383 = vld [vmem:[%s3368 + $0x38] sm:$0xf]
    %v3384 = vld [vmem:[%s3368 + $0x3c] sm:$0xf]
    %v3401 = vunpack.c.l.b16 %v3369
    %v3402 = vunpack.c.l.b16 %v3370
    %v3403 = vunpack.c.l.b16 %v3371
    %v3404 = vunpack.c.l.b16 %v3372
    %v3405 = vunpack.c.l.b16 %v3373
    %v3406 = vunpack.c.l.b16 %v3374
    %v3407 = vunpack.c.l.b16 %v3375
    %v3408 = vunpack.c.l.b16 %v3376
    %v3409 = vunpack.c.l.b16 %v3377
    %v3410 = vunpack.c.l.b16 %v3378
    %v3411 = vunpack.c.l.b16 %v3379
    %v3412 = vunpack.c.l.b16 %v3380
    %v3413 = vunpack.c.l.b16 %v3381
    %v3414 = vunpack.c.l.b16 %v3382
    %v3415 = vunpack.c.l.b16 %v3383
    %v3416 = vunpack.c.l.b16 %v3384
    %v3417 = vpack.c.b16 %v3402, %v3401
    %v3418 = vpack.c.b16 %v3404, %v3403
    %v3419 = vpack.c.b16 %v3406, %v3405
    %v3420 = vpack.c.b16 %v3408, %v3407
    %v3421 = vpack.c.b16 %v3410, %v3409
    %v3422 = vpack.c.b16 %v3412, %v3411
    %v3423 = vpack.c.b16 %v3414, %v3413
    %v3424 = vpack.c.b16 %v3416, %v3415
    %3433 = vmatpush.bf16.msra.mxu0 %v3424
    %3434 = vmatpush.bf16.msra.mxu0 %v3423
    %3435 = vmatpush.bf16.msra.mxu0 %v3422
    %3436 = vmatpush.bf16.msra.mxu0 %v3421
    %3437 = vmatpush.bf16.msra.mxu0 %v3420
    %3438 = vmatpush.bf16.msra.mxu0 %v3419
    %3439 = vmatpush.bf16.msra.mxu0 %v3418
    %3440 = vmatpush.bf16.msra.mxu0 %v3417
    %3441 = vmatmul.bf16.gmra.mxu0 %v3367
    %v3442 = vpop.f32.mrf.mxu0
    %v3443 = vadd.f32 0.0, %v3442
    %v3444 = vpop.f32.mrf.mxu0
    %3445 = vdwg.mxu0
    %v3446 = vadd.f32 %v3339, %v3443
    %s3447 = scalar_lea.vmem [#allocation19], 12
    %v3448 = vld [vmem:[%s3447] sm:$0x3]
    %v3449 = vld [vmem:[#allocation16] sm:$0xff]
    %v3450 = vld [vmem:[#allocation16 + $0x8] sm:$0xff]
    %v3451 = vld [vmem:[#allocation16 + $0x10] sm:$0xff]
    %v3452 = vld [vmem:[#allocation16 + $0x18] sm:$0xff]
    %v3453 = vld [vmem:[#allocation16 + $0x20] sm:$0xff]
    %v3454 = vld [vmem:[#allocation16 + $0x28] sm:$0xff]
    %v3455 = vld [vmem:[#allocation16 + $0x30] sm:$0xff]
    %v3456 = vld [vmem:[#allocation16 + $0x38] sm:$0xff]
    %v3457 = vld [vmem:[#allocation16 + $0x40] sm:$0xff]
    %v3458 = vld [vmem:[#allocation16 + $0x48] sm:$0xff]
    %v3459 = vld [vmem:[#allocation16 + $0x50] sm:$0xff]
    %v3460 = vld [vmem:[#allocation16 + $0x58] sm:$0xff]
    %v3461 = vld [vmem:[#allocation16 + $0x60] sm:$0xff]
    %v3462 = vld [vmem:[#allocation16 + $0x68] sm:$0xff]
    %v3463 = vld [vmem:[#allocation16 + $0x70] sm:$0xff]
    %v3464 = vld [vmem:[#allocation16 + $0x78] sm:$0xff]
    %v3465 = vld [vmem:[#allocation17] sm:$0xff]
    %v3466 = vld [vmem:[#allocation17 + $0x8] sm:$0xff]
    %v3467 = vld [vmem:[#allocation17 + $0x10] sm:$0xff]
    %v3468 = vld [vmem:[#allocation17 + $0x18] sm:$0xff]
    %v3469 = vrot.slane %v3446, 4
    %v3470 = vadd.f32 %v3446, %v3469
    %v3471 = vrot.slane %v3470, 2
    %v3472 = vadd.f32 %v3470, %v3471
    %v3473 = vrot.slane %v3472, 1
    %v3474 = vadd.f32 %v3472, %v3473
    %3475 = vmatpush.msra.mxu0 %v3464
    %3476 = vmatpush.msra.mxu0 %v3463
    %3477 = vmatpush.msra.mxu0 %v3462
    %3478 = vmatpush.msra.mxu0 %v3461
    %3479 = vmatpush.msra.mxu0 %v3460
    %3480 = vmatpush.msra.mxu0 %v3459
    %3481 = vmatpush.msra.mxu0 %v3458
    %3482 = vmatpush.msra.mxu0 %v3457
    %3483 = vmatpush.msra.mxu0 %v3456
    %3484 = vmatpush.msra.mxu0 %v3455
    %3485 = vmatpush.msra.mxu0 %v3454
    %3486 = vmatpush.msra.mxu0 %v3453
    %3487 = vmatpush.msra.mxu0 %v3452
    %3488 = vmatpush.msra.mxu0 %v3451
    %3489 = vmatpush.msra.mxu0 %v3450
    %3490 = vmatpush.msra.mxu0 %v3449
    %3491 = vmatmul.f32.gmra.mxu0 %v3474
    %v3492 = vpop.f32.mrf.mxu0
    %v3493 = vadd.f32 0.0, %v3492
    %3494 = vdwg.mxu0
    %v3495 = vmul.f32 %v3493, 0.03125
    %v3497 = vsel %vm259, %v3495, 0
    %3499 = vmatpush.msra.mxu0 0.0
    %3500 = vmatpush.msra.mxu0 0.0
    %3501 = vmatpush.msra.mxu0 0.0
    %3502 = vmatpush.msra.mxu0 0.0
    %3503 = vmatpush.msra.mxu0 0.0
    %3504 = vmatpush.msra.mxu0 0.0
    %3505 = vmatpush.msra.mxu0 0.0
    %3506 = vmatpush.msra.mxu0 0.0
    %3507 = vmatpush.msra.mxu0 0.0
    %3508 = vmatpush.msra.mxu0 0.0
    %3509 = vmatpush.msra.mxu0 0.0
    %3510 = vmatpush.msra.mxu0 0.0
    %3511 = vmatpush.msra.mxu0 %v3468
    %3512 = vmatpush.msra.mxu0 %v3467
    %3513 = vmatpush.msra.mxu0 %v3466
    %3514 = vmatpush.msra.mxu0 %v3465
    %3515 = vmatmul.f32.gmra.mxu0 %v3497
    %v3516 = vpop.f32.mrf.mxu0
    %v3517 = vadd.f32 0.0, %v3516
    %3518 = vdwg.mxu0
    %v3519 = vperm.slane %v3517, 0
    %v3520 = vsub.f32 %v3446, %v3519
    %v3521 = vmul.f32 %v3520, %v3520
    %v3522 = vrot.slane %v3521, 4
    %v3523 = vadd.f32 %v3521, %v3522
    %v3524 = vrot.slane %v3523, 2
    %v3525 = vadd.f32 %v3523, %v3524
    %v3526 = vrot.slane %v3525, 1
    %v3527 = vadd.f32 %v3525, %v3526
    %3528 = vmatpush.msra.mxu0 %v3464
    %3529 = vmatpush.msra.mxu0 %v3463
    %3530 = vmatpush.msra.mxu0 %v3462
    %3531 = vmatpush.msra.mxu0 %v3461
    %3532 = vmatpush.msra.mxu0 %v3460
    %3533 = vmatpush.msra.mxu0 %v3459
    %3534 = vmatpush.msra.mxu0 %v3458
    %3535 = vmatpush.msra.mxu0 %v3457
    %3536 = vmatpush.msra.mxu0 %v3456
    %3537 = vmatpush.msra.mxu0 %v3455
    %3538 = vmatpush.msra.mxu0 %v3454
    %3539 = vmatpush.msra.mxu0 %v3453
    %3540 = vmatpush.msra.mxu0 %v3452
    %3541 = vmatpush.msra.mxu0 %v3451
    %3542 = vmatpush.msra.mxu0 %v3450
    %3543 = vmatpush.msra.mxu0 %v3449
    %3544 = vmatmul.f32.gmra.mxu0 %v3527
    %v3545 = vpop.f32.mrf.mxu0
    %v3546 = vadd.f32 0.0, %v3545
    %3547 = vdwg.mxu0
    %v3548 = vmul.f32 %v3546, 0.03125
    %v3549 = vadd.f32 %v3548, 1e-05
    %v3550 = vrsqrt.pop %v3549
    %v3551 = vmul.f32 %v3550, %v3549
    %v3552 = vmul.f32 %v3551, %v3550
    %v3553 = vmul.f32 0.5, %v3552
    %v3554 = vsub.f32 1.5, %v3553
    %v3555 = vmul.f32 %v3550, %v3554
    %vm3556 = vweird.f32 %v3549
    %vm3557 = vweird.f32 %v3550
    %vm3558 = vmor %vm3556, %vm3557
    %v3559 = vsel %vm3558, %v3550, %v3555
    %v3560 = vmul.f32 %v3448, %v3559
    %v3561 = vmul.f32 %v3495, %v3560
    %v3563 = vrot.slane %v3561, 7
    %v3565 = vsub.f32 %v3448, %v3563
    %v3567 = vsel %vm259, %v3560, 0
    %3569 = vmatpush.msra.mxu0 0.0
    %3570 = vmatpush.msra.mxu0 0.0
    %3571 = vmatpush.msra.mxu0 0.0
    %3572 = vmatpush.msra.mxu0 0.0
    %3573 = vmatpush.msra.mxu0 0.0
    %3574 = vmatpush.msra.mxu0 0.0
    %3575 = vmatpush.msra.mxu0 0.0
    %3576 = vmatpush.msra.mxu0 0.0
    %3577 = vmatpush.msra.mxu0 0.0
    %3578 = vmatpush.msra.mxu0 0.0
    %3579 = vmatpush.msra.mxu0 0.0
    %3580 = vmatpush.msra.mxu0 0.0
    %3581 = vmatpush.msra.mxu0 %v3468
    %3582 = vmatpush.msra.mxu0 %v3467
    %3583 = vmatpush.msra.mxu0 %v3466
    %3584 = vmatpush.msra.mxu0 %v3465
    %3585 = vmatmul.f32.gmra.mxu0 %v3567
    %v3586 = vpop.f32.mrf.mxu0
    %v3587 = vadd.f32 0.0, %v3586
    %3588 = vdwg.mxu0
    %v3589 = vperm.slane %v3587, 0
    %v3590 = vmul.f32 %v3446, %v3589
    %v3592 = vrot.slane %v3565, 1
    %v3593 = vsel %vm259, %v3592, 0
    %3595 = vmatpush.msra.mxu0 0.0
    %3596 = vmatpush.msra.mxu0 0.0
    %3597 = vmatpush.msra.mxu0 0.0
    %3598 = vmatpush.msra.mxu0 0.0
    %3599 = vmatpush.msra.mxu0 0.0
    %3600 = vmatpush.msra.mxu0 0.0
    %3601 = vmatpush.msra.mxu0 0.0
    %3602 = vmatpush.msra.mxu0 0.0
    %3603 = vmatpush.msra.mxu0 0.0
    %3604 = vmatpush.msra.mxu0 0.0
    %3605 = vmatpush.msra.mxu0 0.0
    %3606 = vmatpush.msra.mxu0 0.0
    %3607 = vmatpush.msra.mxu0 %v3468
    %3608 = vmatpush.msra.mxu0 %v3467
    %3609 = vmatpush.msra.mxu0 %v3466
    %3610 = vmatpush.msra.mxu0 %v3465
    %3611 = vmatmul.f32.gmra.mxu0 %v3593
    %v3612 = vpop.f32.mrf.mxu0
    %v3613 = vadd.f32 0.0, %v3612
    %3614 = vdwg.mxu0
    %v3615 = vperm.slane %v3613, 0
    %v3616 = vadd.f32 %v3590, %v3615
    %v3617 = vmax.f32 %v3616, 0.0
    %v3618 = vld [vmem:[#allocation10] sm:$0xff]
    %v3620 = vsel %vm702, %v3618, 0
    %3622 = vmatpush.msra.mxu0 0.0
    %3623 = vmatpush.msra.mxu0 0.0
    %3624 = vmatpush.msra.mxu0 0.0
    %3625 = vmatpush.msra.mxu0 0.0
    %3626 = vmatpush.msra.mxu0 0.0
    %3627 = vmatpush.msra.mxu0 0.0
    %3628 = vmatpush.msra.mxu0 0.0
    %3629 = vmatpush.msra.mxu0 0.0
    %3630 = vmatpush.msra.mxu0 0.0
    %3631 = vmatpush.msra.mxu0 0.0
    %3632 = vmatpush.msra.mxu0 0.0
    %3633 = vmatpush.msra.mxu0 0.0
    %3634 = vmatpush.msra.mxu0 0.0
    %3635 = vmatpush.msra.mxu0 0.0
    %3636 = vmatpush.msra.mxu0 0.0
    %3637 = vmatpush.msra.mxu0 %v3617
    %3638 = vmatmul.f32.gmra.mxu0 %v3620
    %v3639 = vpop.f32.mrf.mxu0
    %v3640 = vadd.f32 0.0, %v3639
    %3641 = vdwg.mxu0
    %v3642 = vpack.c.bf16 %v3640, %v3640
    %s3643 = scalar_lea.vmem [#allocation2], 1152
    %v3644 = vld [vmem:[%s3643] sm:$0xf]
    %v3645 = vld [vmem:[%s3643 + $0x4] sm:$0xf]
    %v3646 = vld [vmem:[%s3643 + $0x8] sm:$0xf]
    %v3647 = vld [vmem:[%s3643 + $0xc] sm:$0xf]
    %v3648 = vld [vmem:[%s3643 + $0x10] sm:$0xf]
    %v3649 = vld [vmem:[%s3643 + $0x14] sm:$0xf]
    %v3650 = vld [vmem:[%s3643 + $0x18] sm:$0xf]
    %v3651 = vld [vmem:[%s3643 + $0x1c] sm:$0xf]
    %v3652 = vld [vmem:[%s3643 + $0x20] sm:$0xf]
    %v3653 = vld [vmem:[%s3643 + $0x24] sm:$0xf]
    %v3654 = vld [vmem:[%s3643 + $0x28] sm:$0xf]
    %v3655 = vld [vmem:[%s3643 + $0x2c] sm:$0xf]
    %v3656 = vld [vmem:[%s3643 + $0x30] sm:$0xf]
    %v3657 = vld [vmem:[%s3643 + $0x34] sm:$0xf]
    %v3658 = vld [vmem:[%s3643 + $0x38] sm:$0xf]
    %v3659 = vld [vmem:[%s3643 + $0x3c] sm:$0xf]
    %s3660 = scalar_lea.vmem [#allocation10], 8
    %v3661 = vld [vmem:[%s3660] sm:$0xff]
    %v3663 = vsel %vm702, %v3661, 0
    %3665 = vmatpush.msra.mxu0 0.0
    %3666 = vmatpush.msra.mxu0 0.0
    %3667 = vmatpush.msra.mxu0 0.0
    %3668 = vmatpush.msra.mxu0 0.0
    %3669 = vmatpush.msra.mxu0 0.0
    %3670 = vmatpush.msra.mxu0 0.0
    %3671 = vmatpush.msra.mxu0 0.0
    %3672 = vmatpush.msra.mxu0 0.0
    %3673 = vmatpush.msra.mxu0 0.0
    %3674 = vmatpush.msra.mxu0 0.0
    %3675 = vmatpush.msra.mxu0 0.0
    %3676 = vmatpush.msra.mxu0 0.0
    %3677 = vmatpush.msra.mxu0 0.0
    %3678 = vmatpush.msra.mxu0 0.0
    %3679 = vmatpush.msra.mxu0 0.0
    %3680 = vmatpush.msra.mxu0 %v3617
    %3681 = vmatmul.f32.gmra.mxu0 %v3663
    %v3682 = vpop.f32.mrf.mxu0
    %v3683 = vadd.f32 0.0, %v3682
    %3684 = vdwg.mxu0
    %v3685 = vpack.c.bf16 %v3683, %v3683
    %s3686 = scalar_lea.vmem [#allocation2], 1216
    %v3687 = vld [vmem:[%s3686] sm:$0xf]
    %v3688 = vld [vmem:[%s3686 + $0x4] sm:$0xf]
    %v3689 = vld [vmem:[%s3686 + $0x8] sm:$0xf]
    %v3690 = vld [vmem:[%s3686 + $0xc] sm:$0xf]
    %v3691 = vld [vmem:[%s3686 + $0x10] sm:$0xf]
    %v3692 = vld [vmem:[%s3686 + $0x14] sm:$0xf]
    %v3693 = vld [vmem:[%s3686 + $0x18] sm:$0xf]
    %v3694 = vld [vmem:[%s3686 + $0x1c] sm:$0xf]
    %v3695 = vld [vmem:[%s3686 + $0x20] sm:$0xf]
    %v3696 = vld [vmem:[%s3686 + $0x24] sm:$0xf]
    %v3697 = vld [vmem:[%s3686 + $0x28] sm:$0xf]
    %v3698 = vld [vmem:[%s3686 + $0x2c] sm:$0xf]
    %v3699 = vld [vmem:[%s3686 + $0x30] sm:$0xf]
    %v3700 = vld [vmem:[%s3686 + $0x34] sm:$0xf]
    %v3701 = vld [vmem:[%s3686 + $0x38] sm:$0xf]
    %v3702 = vld [vmem:[%s3686 + $0x3c] sm:$0xf]
    %v3719 = vunpack.c.l.b16 %v3687
    %v3720 = vunpack.c.l.b16 %v3688
    %v3721 = vunpack.c.l.b16 %v3689
    %v3722 = vunpack.c.l.b16 %v3690
    %v3723 = vunpack.c.l.b16 %v3691
    %v3724 = vunpack.c.l.b16 %v3692
    %v3725 = vunpack.c.l.b16 %v3693
    %v3726 = vunpack.c.l.b16 %v3694
    %v3727 = vunpack.c.l.b16 %v3695
    %v3728 = vunpack.c.l.b16 %v3696
    %v3729 = vunpack.c.l.b16 %v3697
    %v3730 = vunpack.c.l.b16 %v3698
    %v3731 = vunpack.c.l.b16 %v3699
    %v3732 = vunpack.c.l.b16 %v3700
    %v3733 = vunpack.c.l.b16 %v3701
    %v3734 = vunpack.c.l.b16 %v3702
    %v3735 = vpack.c.b16 %v3720, %v3719
    %v3736 = vpack.c.b16 %v3722, %v3721
    %v3737 = vpack.c.b16 %v3724, %v3723
    %v3738 = vpack.c.b16 %v3726, %v3725
    %v3739 = vpack.c.b16 %v3728, %v3727
    %v3740 = vpack.c.b16 %v3730, %v3729
    %v3741 = vpack.c.b16 %v3732, %v3731
    %v3742 = vpack.c.b16 %v3734, %v3733
    %3751 = vmatpush.bf16.msra.mxu0 %v3742
    %3752 = vmatpush.bf16.msra.mxu0 %v3741
    %3753 = vmatpush.bf16.msra.mxu0 %v3740
    %3754 = vmatpush.bf16.msra.mxu0 %v3739
    %3755 = vmatpush.bf16.msra.mxu0 %v3738
    %3756 = vmatpush.bf16.msra.mxu0 %v3737
    %3757 = vmatpush.bf16.msra.mxu0 %v3736
    %3758 = vmatpush.bf16.msra.mxu0 %v3735
    %3759 = vmatmul.bf16.gmra.mxu0 %v3685
    %v3760 = vpop.f32.mrf.mxu0
    %v3761 = vadd.f32 0.0, %v3760
    %v3762 = vpop.f32.mrf.mxu0
    %3763 = vdwg.mxu0
    %v3780 = vunpack.c.l.b16 %v3644
    %v3781 = vunpack.c.l.b16 %v3645
    %v3782 = vunpack.c.l.b16 %v3646
    %v3783 = vunpack.c.l.b16 %v3647
    %v3784 = vunpack.c.l.b16 %v3648
    %v3785 = vunpack.c.l.b16 %v3649
    %v3786 = vunpack.c.l.b16 %v3650
    %v3787 = vunpack.c.l.b16 %v3651
    %v3788 = vunpack.c.l.b16 %v3652
    %v3789 = vunpack.c.l.b16 %v3653
    %v3790 = vunpack.c.l.b16 %v3654
    %v3791 = vunpack.c.l.b16 %v3655
    %v3792 = vunpack.c.l.b16 %v3656
    %v3793 = vunpack.c.l.b16 %v3657
    %v3794 = vunpack.c.l.b16 %v3658
    %v3795 = vunpack.c.l.b16 %v3659
    %v3796 = vpack.c.b16 %v3781, %v3780
    %v3797 = vpack.c.b16 %v3783, %v3782
    %v3798 = vpack.c.b16 %v3785, %v3784
    %v3799 = vpack.c.b16 %v3787, %v3786
    %v3800 = vpack.c.b16 %v3789, %v3788
    %v3801 = vpack.c.b16 %v3791, %v3790
    %v3802 = vpack.c.b16 %v3793, %v3792
    %v3803 = vpack.c.b16 %v3795, %v3794
    %3812 = vmatpush.bf16.msra.mxu0 %v3803
    %3813 = vmatpush.bf16.msra.mxu0 %v3802
    %3814 = vmatpush.bf16.msra.mxu0 %v3801
    %3815 = vmatpush.bf16.msra.mxu0 %v3800
    %3816 = vmatpush.bf16.msra.mxu0 %v3799
    %3817 = vmatpush.bf16.msra.mxu0 %v3798
    %3818 = vmatpush.bf16.msra.mxu0 %v3797
    %3819 = vmatpush.bf16.msra.mxu0 %v3796
    %3820 = vmatmul.bf16.gmra.mxu0 %v3642
    %v3821 = vpop.f32.mrf.mxu0
    %v3822 = vadd.f32 %v3761, %v3821
    %v3823 = vpop.f32.mrf.mxu0
    %3824 = vdwg.mxu0
    %s3825 = scalar_lea.vmem [#allocation10], 16
    %v3826 = vld [vmem:[%s3825] sm:$0xff]
    %v3828 = vsel %vm702, %v3826, 0
    %3830 = vmatpush.msra.mxu0 0.0
    %3831 = vmatpush.msra.mxu0 0.0
    %3832 = vmatpush.msra.mxu0 0.0
    %3833 = vmatpush.msra.mxu0 0.0
    %3834 = vmatpush.msra.mxu0 0.0
    %3835 = vmatpush.msra.mxu0 0.0
    %3836 = vmatpush.msra.mxu0 0.0
    %3837 = vmatpush.msra.mxu0 0.0
    %3838 = vmatpush.msra.mxu0 0.0
    %3839 = vmatpush.msra.mxu0 0.0
    %3840 = vmatpush.msra.mxu0 0.0
    %3841 = vmatpush.msra.mxu0 0.0
    %3842 = vmatpush.msra.mxu0 0.0
    %3843 = vmatpush.msra.mxu0 0.0
    %3844 = vmatpush.msra.mxu0 0.0
    %3845 = vmatpush.msra.mxu0 %v3617
    %3846 = vmatmul.f32.gmra.mxu0 %v3828
    %v3847 = vpop.f32.mrf.mxu0
    %v3848 = vadd.f32 0.0, %v3847
    %3849 = vdwg.mxu0
    %v3850 = vpack.c.bf16 %v3848, %v3848
    %s3851 = scalar_lea.vmem [#allocation2], 1280
    %v3852 = vld [vmem:[%s3851] sm:$0xf]
    %v3853 = vld [vmem:[%s3851 + $0x4] sm:$0xf]
    %v3854 = vld [vmem:[%s3851 + $0x8] sm:$0xf]
    %v3855 = vld [vmem:[%s3851 + $0xc] sm:$0xf]
    %v3856 = vld [vmem:[%s3851 + $0x10] sm:$0xf]
    %v3857 = vld [vmem:[%s3851 + $0x14] sm:$0xf]
    %v3858 = vld [vmem:[%s3851 + $0x18] sm:$0xf]
    %v3859 = vld [vmem:[%s3851 + $0x1c] sm:$0xf]
    %v3860 = vld [vmem:[%s3851 + $0x20] sm:$0xf]
    %v3861 = vld [vmem:[%s3851 + $0x24] sm:$0xf]
    %v3862 = vld [vmem:[%s3851 + $0x28] sm:$0xf]
    %v3863 = vld [vmem:[%s3851 + $0x2c] sm:$0xf]
    %v3864 = vld [vmem:[%s3851 + $0x30] sm:$0xf]
    %v3865 = vld [vmem:[%s3851 + $0x34] sm:$0xf]
    %v3866 = vld [vmem:[%s3851 + $0x38] sm:$0xf]
    %v3867 = vld [vmem:[%s3851 + $0x3c] sm:$0xf]
    %v3884 = vunpack.c.l.b16 %v3852
    %v3885 = vunpack.c.l.b16 %v3853
    %v3886 = vunpack.c.l.b16 %v3854
    %v3887 = vunpack.c.l.b16 %v3855
    %v3888 = vunpack.c.l.b16 %v3856
    %v3889 = vunpack.c.l.b16 %v3857
    %v3890 = vunpack.c.l.b16 %v3858
    %v3891 = vunpack.c.l.b16 %v3859
    %v3892 = vunpack.c.l.b16 %v3860
    %v3893 = vunpack.c.l.b16 %v3861
    %v3894 = vunpack.c.l.b16 %v3862
    %v3895 = vunpack.c.l.b16 %v3863
    %v3896 = vunpack.c.l.b16 %v3864
    %v3897 = vunpack.c.l.b16 %v3865
    %v3898 = vunpack.c.l.b16 %v3866
    %v3899 = vunpack.c.l.b16 %v3867
    %v3900 = vpack.c.b16 %v3885, %v3884
    %v3901 = vpack.c.b16 %v3887, %v3886
    %v3902 = vpack.c.b16 %v3889, %v3888
    %v3903 = vpack.c.b16 %v3891, %v3890
    %v3904 = vpack.c.b16 %v3893, %v3892
    %v3905 = vpack.c.b16 %v3895, %v3894
    %v3906 = vpack.c.b16 %v3897, %v3896
    %v3907 = vpack.c.b16 %v3899, %v3898
    %3916 = vmatpush.bf16.msra.mxu0 %v3907
    %3917 = vmatpush.bf16.msra.mxu0 %v3906
    %3918 = vmatpush.bf16.msra.mxu0 %v3905
    %3919 = vmatpush.bf16.msra.mxu0 %v3904
    %3920 = vmatpush.bf16.msra.mxu0 %v3903
    %3921 = vmatpush.bf16.msra.mxu0 %v3902
    %3922 = vmatpush.bf16.msra.mxu0 %v3901
    %3923 = vmatpush.bf16.msra.mxu0 %v3900
    %3924 = vmatmul.bf16.gmra.mxu0 %v3850
    %v3925 = vpop.f32.mrf.mxu0
    %v3926 = vadd.f32 0.0, %v3925
    %v3927 = vpop.f32.mrf.mxu0
    %3928 = vdwg.mxu0
    %v3929 = vadd.f32 %v3822, %v3926
    %s3930 = scalar_lea.vmem [#allocation19], 14
    %v3931 = vld [vmem:[%s3930] sm:$0x3]
    %v3932 = vrot.slane %v3929, 4
    %v3933 = vadd.f32 %v3929, %v3932
    %v3934 = vrot.slane %v3933, 2
    %v3935 = vadd.f32 %v3933, %v3934
    %v3936 = vrot.slane %v3935, 1
    %v3937 = vadd.f32 %v3935, %v3936
    %3938 = vmatpush.msra.mxu0 %v3464
    %3939 = vmatpush.msra.mxu0 %v3463
    %3940 = vmatpush.msra.mxu0 %v3462
    %3941 = vmatpush.msra.mxu0 %v3461
    %3942 = vmatpush.msra.mxu0 %v3460
    %3943 = vmatpush.msra.mxu0 %v3459
    %3944 = vmatpush.msra.mxu0 %v3458
    %3945 = vmatpush.msra.mxu0 %v3457
    %3946 = vmatpush.msra.mxu0 %v3456
    %3947 = vmatpush.msra.mxu0 %v3455
    %3948 = vmatpush.msra.mxu0 %v3454
    %3949 = vmatpush.msra.mxu0 %v3453
    %3950 = vmatpush.msra.mxu0 %v3452
    %3951 = vmatpush.msra.mxu0 %v3451
    %3952 = vmatpush.msra.mxu0 %v3450
    %3953 = vmatpush.msra.mxu0 %v3449
    %3954 = vmatmul.f32.gmra.mxu0 %v3937
    %v3955 = vpop.f32.mrf.mxu0
    %v3956 = vadd.f32 0.0, %v3955
    %3957 = vdwg.mxu0
    %v3958 = vmul.f32 %v3956, 0.03125
    %v3960 = vsel %vm259, %v3958, 0
    %3962 = vmatpush.msra.mxu0 0.0
    %3963 = vmatpush.msra.mxu0 0.0
    %3964 = vmatpush.msra.mxu0 0.0
    %3965 = vmatpush.msra.mxu0 0.0
    %3966 = vmatpush.msra.mxu0 0.0
    %3967 = vmatpush.msra.mxu0 0.0
    %3968 = vmatpush.msra.mxu0 0.0
    %3969 = vmatpush.msra.mxu0 0.0
    %3970 = vmatpush.msra.mxu0 0.0
    %3971 = vmatpush.msra.mxu0 0.0
    %3972 = vmatpush.msra.mxu0 0.0
    %3973 = vmatpush.msra.mxu0 0.0
    %3974 = vmatpush.msra.mxu0 %v3468
    %3975 = vmatpush.msra.mxu0 %v3467
    %3976 = vmatpush.msra.mxu0 %v3466
    %3977 = vmatpush.msra.mxu0 %v3465
    %3978 = vmatmul.f32.gmra.mxu0 %v3960
    %v3979 = vpop.f32.mrf.mxu0
    %v3980 = vadd.f32 0.0, %v3979
    %3981 = vdwg.mxu0
    %v3982 = vperm.slane %v3980, 0
    %v3983 = vsub.f32 %v3929, %v3982
    %v3984 = vmul.f32 %v3983, %v3983
    %v3985 = vrot.slane %v3984, 4
    %v3986 = vadd.f32 %v3984, %v3985
    %v3987 = vrot.slane %v3986, 2
    %v3988 = vadd.f32 %v3986, %v3987
    %v3989 = vrot.slane %v3988, 1
    %v3990 = vadd.f32 %v3988, %v3989
    %3991 = vmatpush.msra.mxu0 %v3464
    %3992 = vmatpush.msra.mxu0 %v3463
    %3993 = vmatpush.msra.mxu0 %v3462
    %3994 = vmatpush.msra.mxu0 %v3461
    %3995 = vmatpush.msra.mxu0 %v3460
    %3996 = vmatpush.msra.mxu0 %v3459
    %3997 = vmatpush.msra.mxu0 %v3458
    %3998 = vmatpush.msra.mxu0 %v3457
    %3999 = vmatpush.msra.mxu0 %v3456
    %4000 = vmatpush.msra.mxu0 %v3455
    %4001 = vmatpush.msra.mxu0 %v3454
    %4002 = vmatpush.msra.mxu0 %v3453
    %4003 = vmatpush.msra.mxu0 %v3452
    %4004 = vmatpush.msra.mxu0 %v3451
    %4005 = vmatpush.msra.mxu0 %v3450
    %4006 = vmatpush.msra.mxu0 %v3449
    %4007 = vmatmul.f32.gmra.mxu0 %v3990
    %v4008 = vpop.f32.mrf.mxu0
    %v4009 = vadd.f32 0.0, %v4008
    %4010 = vdwg.mxu0
    %v4011 = vmul.f32 %v4009, 0.03125
    %v4012 = vadd.f32 %v4011, 1e-05
    %v4013 = vrsqrt.pop %v4012
    %v4014 = vmul.f32 %v4013, %v4012
    %v4015 = vmul.f32 %v4014, %v4013
    %v4016 = vmul.f32 0.5, %v4015
    %v4017 = vsub.f32 1.5, %v4016
    %v4018 = vmul.f32 %v4013, %v4017
    %vm4019 = vweird.f32 %v4012
    %vm4020 = vweird.f32 %v4013
    %vm4021 = vmor %vm4019, %vm4020
    %v4022 = vsel %vm4021, %v4013, %v4018
    %v4023 = vmul.f32 %v3931, %v4022
    %v4024 = vmul.f32 %v3958, %v4023
    %v4026 = vrot.slane %v4024, 7
    %v4028 = vsub.f32 %v3931, %v4026
    %v4030 = vsel %vm259, %v4023, 0
    %4032 = vmatpush.msra.mxu0 0.0
    %4033 = vmatpush.msra.mxu0 0.0
    %4034 = vmatpush.msra.mxu0 0.0
    %4035 = vmatpush.msra.mxu0 0.0
    %4036 = vmatpush.msra.mxu0 0.0
    %4037 = vmatpush.msra.mxu0 0.0
    %4038 = vmatpush.msra.mxu0 0.0
    %4039 = vmatpush.msra.mxu0 0.0
    %4040 = vmatpush.msra.mxu0 0.0
    %4041 = vmatpush.msra.mxu0 0.0
    %4042 = vmatpush.msra.mxu0 0.0
    %4043 = vmatpush.msra.mxu0 0.0
    %4044 = vmatpush.msra.mxu0 %v3468
    %4045 = vmatpush.msra.mxu0 %v3467
    %4046 = vmatpush.msra.mxu0 %v3466
    %4047 = vmatpush.msra.mxu0 %v3465
    %4048 = vmatmul.f32.gmra.mxu0 %v4030
    %v4049 = vpop.f32.mrf.mxu0
    %v4050 = vadd.f32 0.0, %v4049
    %4051 = vdwg.mxu0
    %v4052 = vperm.slane %v4050, 0
    %v4053 = vmul.f32 %v3929, %v4052
    %v4055 = vrot.slane %v4028, 1
    %v4056 = vsel %vm259, %v4055, 0
    %4058 = vmatpush.msra.mxu0 0.0
    %4059 = vmatpush.msra.mxu0 0.0
    %4060 = vmatpush.msra.mxu0 0.0
    %4061 = vmatpush.msra.mxu0 0.0
    %4062 = vmatpush.msra.mxu0 0.0
    %4063 = vmatpush.msra.mxu0 0.0
    %4064 = vmatpush.msra.mxu0 0.0
    %4065 = vmatpush.msra.mxu0 0.0
    %4066 = vmatpush.msra.mxu0 0.0
    %4067 = vmatpush.msra.mxu0 0.0
    %4068 = vmatpush.msra.mxu0 0.0
    %4069 = vmatpush.msra.mxu0 0.0
    %4070 = vmatpush.msra.mxu0 %v3468
    %4071 = vmatpush.msra.mxu0 %v3467
    %4072 = vmatpush.msra.mxu0 %v3466
    %4073 = vmatpush.msra.mxu0 %v3465
    %4074 = vmatmul.f32.gmra.mxu0 %v4056
    %v4075 = vpop.f32.mrf.mxu0
    %v4076 = vadd.f32 0.0, %v4075
    %4077 = vdwg.mxu0
    %v4078 = vperm.slane %v4076, 0
    %v4079 = vadd.f32 %v4053, %v4078
    %s4080 = scalar_lea.vmem [#allocation2], 1408
    %v4081 = vld [vmem:[%s4080] sm:$0xf]
    %v4082 = vld [vmem:[%s4080 + $0x4] sm:$0xf]
    %v4083 = vld [vmem:[%s4080 + $0x8] sm:$0xf]
    %v4084 = vld [vmem:[%s4080 + $0xc] sm:$0xf]
    %v4085 = vld [vmem:[%s4080 + $0x10] sm:$0xf]
    %v4086 = vld [vmem:[%s4080 + $0x14] sm:$0xf]
    %v4087 = vld [vmem:[%s4080 + $0x18] sm:$0xf]
    %v4088 = vld [vmem:[%s4080 + $0x1c] sm:$0xf]
    %v4089 = vld [vmem:[%s4080 + $0x20] sm:$0xf]
    %v4090 = vld [vmem:[%s4080 + $0x24] sm:$0xf]
    %v4091 = vld [vmem:[%s4080 + $0x28] sm:$0xf]
    %v4092 = vld [vmem:[%s4080 + $0x2c] sm:$0xf]
    %v4093 = vld [vmem:[%s4080 + $0x30] sm:$0xf]
    %v4094 = vld [vmem:[%s4080 + $0x34] sm:$0xf]
    %v4095 = vld [vmem:[%s4080 + $0x38] sm:$0xf]
    %v4096 = vld [vmem:[%s4080 + $0x3c] sm:$0xf]
    %v4113 = vunpack.c.l.b16 %v4081
    %v4114 = vunpack.c.l.b16 %v4082
    %v4115 = vunpack.c.l.b16 %v4083
    %v4116 = vunpack.c.l.b16 %v4084
    %v4117 = vunpack.c.l.b16 %v4085
    %v4118 = vunpack.c.l.b16 %v4086
    %v4119 = vunpack.c.l.b16 %v4087
    %v4120 = vunpack.c.l.b16 %v4088
    %v4121 = vunpack.c.l.b16 %v4089
    %v4122 = vunpack.c.l.b16 %v4090
    %v4123 = vunpack.c.l.b16 %v4091
    %v4124 = vunpack.c.l.b16 %v4092
    %v4125 = vunpack.c.l.b16 %v4093
    %v4126 = vunpack.c.l.b16 %v4094
    %v4127 = vunpack.c.l.b16 %v4095
    %v4128 = vunpack.c.l.b16 %v4096
    %v4129 = vpack.c.b16 %v4114, %v4113
    %v4130 = vpack.c.b16 %v4116, %v4115
    %v4131 = vpack.c.b16 %v4118, %v4117
    %v4132 = vpack.c.b16 %v4120, %v4119
    %v4133 = vpack.c.b16 %v4122, %v4121
    %v4134 = vpack.c.b16 %v4124, %v4123
    %v4135 = vpack.c.b16 %v4126, %v4125
    %v4136 = vpack.c.b16 %v4128, %v4127
    %4145 = vmatpush.bf16.msra.mxu0 %v4136
    %4146 = vmatpush.bf16.msra.mxu0 %v4135
    %4147 = vmatpush.bf16.msra.mxu0 %v4134
    %4148 = vmatpush.bf16.msra.mxu0 %v4133
    %4149 = vmatpush.bf16.msra.mxu0 %v4132
    %4150 = vmatpush.bf16.msra.mxu0 %v4131
    %4151 = vmatpush.bf16.msra.mxu0 %v4130
    %4152 = vmatpush.bf16.msra.mxu0 %v4129
    %4153 = vmatmul.bf16.gmra.mxu0 %v3202
    %v4154 = vpop.f32.mrf.mxu0
    %v4155 = vadd.f32 0.0, %v4154
    %v4156 = vpop.f32.mrf.mxu0
    %4157 = vdwg.mxu0
    %s4158 = scalar_lea.vmem [#allocation19], 16
    %v4159 = vld [vmem:[%s4158] sm:$0x3]
    %v4160 = vrot.slane %v4155, 4
    %v4161 = vadd.f32 %v4155, %v4160
    %v4162 = vrot.slane %v4161, 2
    %v4163 = vadd.f32 %v4161, %v4162
    %v4164 = vrot.slane %v4163, 1
    %v4165 = vadd.f32 %v4163, %v4164
    %4166 = vmatpush.msra.mxu0 %v3464
    %4167 = vmatpush.msra.mxu0 %v3463
    %4168 = vmatpush.msra.mxu0 %v3462
    %4169 = vmatpush.msra.mxu0 %v3461
    %4170 = vmatpush.msra.mxu0 %v3460
    %4171 = vmatpush.msra.mxu0 %v3459
    %4172 = vmatpush.msra.mxu0 %v3458
    %4173 = vmatpush.msra.mxu0 %v3457
    %4174 = vmatpush.msra.mxu0 %v3456
    %4175 = vmatpush.msra.mxu0 %v3455
    %4176 = vmatpush.msra.mxu0 %v3454
    %4177 = vmatpush.msra.mxu0 %v3453
    %4178 = vmatpush.msra.mxu0 %v3452
    %4179 = vmatpush.msra.mxu0 %v3451
    %4180 = vmatpush.msra.mxu0 %v3450
    %4181 = vmatpush.msra.mxu0 %v3449
    %4182 = vmatmul.f32.gmra.mxu0 %v4165
    %v4183 = vpop.f32.mrf.mxu0
    %v4184 = vadd.f32 0.0, %v4183
    %4185 = vdwg.mxu0
    %v4186 = vmul.f32 %v4184, 0.03125
    %v4188 = vsel %vm259, %v4186, 0
    %4190 = vmatpush.msra.mxu0 0.0
    %4191 = vmatpush.msra.mxu0 0.0
    %4192 = vmatpush.msra.mxu0 0.0
    %4193 = vmatpush.msra.mxu0 0.0
    %4194 = vmatpush.msra.mxu0 0.0
    %4195 = vmatpush.msra.mxu0 0.0
    %4196 = vmatpush.msra.mxu0 0.0
    %4197 = vmatpush.msra.mxu0 0.0
    %4198 = vmatpush.msra.mxu0 0.0
    %4199 = vmatpush.msra.mxu0 0.0
    %4200 = vmatpush.msra.mxu0 0.0
    %4201 = vmatpush.msra.mxu0 0.0
    %4202 = vmatpush.msra.mxu0 %v3468
    %4203 = vmatpush.msra.mxu0 %v3467
    %4204 = vmatpush.msra.mxu0 %v3466
    %4205 = vmatpush.msra.mxu0 %v3465
    %4206 = vmatmul.f32.gmra.mxu0 %v4188
    %v4207 = vpop.f32.mrf.mxu0
    %v4208 = vadd.f32 0.0, %v4207
    %4209 = vdwg.mxu0
    %v4210 = vperm.slane %v4208, 0
    %v4211 = vsub.f32 %v4155, %v4210
    %v4212 = vmul.f32 %v4211, %v4211
    %v4213 = vrot.slane %v4212, 4
    %v4214 = vadd.f32 %v4212, %v4213
    %v4215 = vrot.slane %v4214, 2
    %v4216 = vadd.f32 %v4214, %v4215
    %v4217 = vrot.slane %v4216, 1
    %v4218 = vadd.f32 %v4216, %v4217
    %4219 = vmatpush.msra.mxu0 %v3464
    %4220 = vmatpush.msra.mxu0 %v3463
    %4221 = vmatpush.msra.mxu0 %v3462
    %4222 = vmatpush.msra.mxu0 %v3461
    %4223 = vmatpush.msra.mxu0 %v3460
    %4224 = vmatpush.msra.mxu0 %v3459
    %4225 = vmatpush.msra.mxu0 %v3458
    %4226 = vmatpush.msra.mxu0 %v3457
    %4227 = vmatpush.msra.mxu0 %v3456
    %4228 = vmatpush.msra.mxu0 %v3455
    %4229 = vmatpush.msra.mxu0 %v3454
    %4230 = vmatpush.msra.mxu0 %v3453
    %4231 = vmatpush.msra.mxu0 %v3452
    %4232 = vmatpush.msra.mxu0 %v3451
    %4233 = vmatpush.msra.mxu0 %v3450
    %4234 = vmatpush.msra.mxu0 %v3449
    %4235 = vmatmul.f32.gmra.mxu0 %v4218
    %v4236 = vpop.f32.mrf.mxu0
    %v4237 = vadd.f32 0.0, %v4236
    %4238 = vdwg.mxu0
    %v4239 = vmul.f32 %v4237, 0.03125
    %v4240 = vadd.f32 %v4239, 1e-05
    %v4241 = vrsqrt.pop %v4240
    %v4242 = vmul.f32 %v4241, %v4240
    %v4243 = vmul.f32 %v4242, %v4241
    %v4244 = vmul.f32 0.5, %v4243
    %v4245 = vsub.f32 1.5, %v4244
    %v4246 = vmul.f32 %v4241, %v4245
    %vm4247 = vweird.f32 %v4240
    %vm4248 = vweird.f32 %v4241
    %vm4249 = vmor %vm4247, %vm4248
    %v4250 = vsel %vm4249, %v4241, %v4246
    %v4251 = vmul.f32 %v4159, %v4250
    %v4252 = vmul.f32 %v4186, %v4251
    %v4254 = vrot.slane %v4252, 7
    %v4256 = vsub.f32 %v4159, %v4254
    %v4258 = vsel %vm259, %v4251, 0
    %4260 = vmatpush.msra.mxu0 0.0
    %4261 = vmatpush.msra.mxu0 0.0
    %4262 = vmatpush.msra.mxu0 0.0
    %4263 = vmatpush.msra.mxu0 0.0
    %4264 = vmatpush.msra.mxu0 0.0
    %4265 = vmatpush.msra.mxu0 0.0
    %4266 = vmatpush.msra.mxu0 0.0
    %4267 = vmatpush.msra.mxu0 0.0
    %4268 = vmatpush.msra.mxu0 0.0
    %4269 = vmatpush.msra.mxu0 0.0
    %4270 = vmatpush.msra.mxu0 0.0
    %4271 = vmatpush.msra.mxu0 0.0
    %4272 = vmatpush.msra.mxu0 %v3468
    %4273 = vmatpush.msra.mxu0 %v3467
    %4274 = vmatpush.msra.mxu0 %v3466
    %4275 = vmatpush.msra.mxu0 %v3465
    %4276 = vmatmul.f32.gmra.mxu0 %v4258
    %v4277 = vpop.f32.mrf.mxu0
    %v4278 = vadd.f32 0.0, %v4277
    %4279 = vdwg.mxu0
    %v4280 = vperm.slane %v4278, 0
    %v4281 = vmul.f32 %v4155, %v4280
    %v4283 = vrot.slane %v4256, 1
    %v4284 = vsel %vm259, %v4283, 0
    %4286 = vmatpush.msra.mxu0 0.0
    %4287 = vmatpush.msra.mxu0 0.0
    %4288 = vmatpush.msra.mxu0 0.0
    %4289 = vmatpush.msra.mxu0 0.0
    %4290 = vmatpush.msra.mxu0 0.0
    %4291 = vmatpush.msra.mxu0 0.0
    %4292 = vmatpush.msra.mxu0 0.0
    %4293 = vmatpush.msra.mxu0 0.0
    %4294 = vmatpush.msra.mxu0 0.0
    %4295 = vmatpush.msra.mxu0 0.0
    %4296 = vmatpush.msra.mxu0 0.0
    %4297 = vmatpush.msra.mxu0 0.0
    %4298 = vmatpush.msra.mxu0 %v3468
    %4299 = vmatpush.msra.mxu0 %v3467
    %4300 = vmatpush.msra.mxu0 %v3466
    %4301 = vmatpush.msra.mxu0 %v3465
    %4302 = vmatmul.f32.gmra.mxu0 %v4284
    %v4303 = vpop.f32.mrf.mxu0
    %v4304 = vadd.f32 0.0, %v4303
    %4305 = vdwg.mxu0
    %v4306 = vperm.slane %v4304, 0
    %v4307 = vadd.f32 %v4281, %v4306
    %v4308 = vadd.f32 %v4079, %v4307
    %v4309 = vmax.f32 %v4308, 0.0
    %v4310 = vld [vmem:[%s14] sm:$0x3]
    %v4312 = vsel %vm702, %v4310, 0
    %4314 = vmatpush.msra.mxu0 0.0
    %4315 = vmatpush.msra.mxu0 0.0
    %4316 = vmatpush.msra.mxu0 0.0
    %4317 = vmatpush.msra.mxu0 0.0
    %4318 = vmatpush.msra.mxu0 0.0
    %4319 = vmatpush.msra.mxu0 0.0
    %4320 = vmatpush.msra.mxu0 0.0
    %4321 = vmatpush.msra.mxu0 0.0
    %4322 = vmatpush.msra.mxu0 0.0
    %4323 = vmatpush.msra.mxu0 0.0
    %4324 = vmatpush.msra.mxu0 0.0
    %4325 = vmatpush.msra.mxu0 0.0
    %4326 = vmatpush.msra.mxu0 0.0
    %4327 = vmatpush.msra.mxu0 0.0
    %4328 = vmatpush.msra.mxu0 0.0
    %4329 = vmatpush.msra.mxu0 %v4309
    %4330 = vmatmul.f32.gmra.mxu0 %v4312
    %v4331 = vpop.f32.mrf.mxu0
    %v4332 = vadd.f32 0.0, %v4331
    %4333 = vdwg.mxu0
    %4334 = vmatpush.msra.mxu0 %v3464
    %4335 = vmatpush.msra.mxu0 %v3463
    %4336 = vmatpush.msra.mxu0 %v3462
    %4337 = vmatpush.msra.mxu0 %v3461
    %4338 = vmatpush.msra.mxu0 %v3460
    %4339 = vmatpush.msra.mxu0 %v3459
    %4340 = vmatpush.msra.mxu0 %v3458
    %4341 = vmatpush.msra.mxu0 %v3457
    %4342 = vmatpush.msra.mxu0 %v3456
    %4343 = vmatpush.msra.mxu0 %v3455
    %4344 = vmatpush.msra.mxu0 %v3454
    %4345 = vmatpush.msra.mxu0 %v3453
    %4346 = vmatpush.msra.mxu0 %v3452
    %4347 = vmatpush.msra.mxu0 %v3451
    %4348 = vmatpush.msra.mxu0 %v3450
    %4349 = vmatpush.msra.mxu0 %v3449
    %4350 = vmatmul.f32.gmra.mxu0 %v4332
    %v4351 = vpop.f32.mrf.mxu0
    %v4352 = vadd.f32 0.0, %v4351
    %4353 = vdwg.mxu0
    %v4354 = vmul.f32 %v4352, 0.0625
    %v4355 = vpack.c.bf16 %v4354, %v4354
    %v4356 = vld [vmem:[#allocation20] sm:$0xff]
    %v4357 = vld [vmem:[#allocation20 + $0x8] sm:$0xff]
    %v4358 = vld [vmem:[#allocation20 + $0x10] sm:$0xff]
    %v4359 = vld [vmem:[#allocation20 + $0x18] sm:$0xff]
    %v4360 = vld [vmem:[#allocation20 + $0x20] sm:$0xff]
    %v4361 = vld [vmem:[#allocation20 + $0x28] sm:$0xff]
    %v4362 = vld [vmem:[#allocation20 + $0x30] sm:$0xff]
    %v4363 = vld [vmem:[#allocation20 + $0x38] sm:$0xff]
    %v4364 = vld [vmem:[%s16] sm:$0xf]
    %v4366 = vperm.slane %v4364, 0
    %v4367 = vperm.slane %v4364, 1
    %v4368 = vperm.slane %v4364, 2
    %v4369 = vperm.slane %v4364, 3
    %v4382 = vunpack.c.l.b16 %v4356
    %v4383 = vunpack.c.h.b16 %v4356
    %v4384 = vunpack.c.l.b16 %v4357
    %v4385 = vunpack.c.h.b16 %v4357
    %v4386 = vunpack.c.l.b16 %v4358
    %v4387 = vunpack.c.h.b16 %v4358
    %v4388 = vunpack.c.l.b16 %v4359
    %v4389 = vunpack.c.h.b16 %v4359
    %v4390 = vunpack.c.l.b16 %v4360
    %v4391 = vunpack.c.h.b16 %v4360
    %v4392 = vunpack.c.l.b16 %v4361
    %v4393 = vunpack.c.h.b16 %v4361
    %v4394 = vunpack.c.l.b16 %v4362
    %v4395 = vunpack.c.h.b16 %v4362
    %v4396 = vunpack.c.l.b16 %v4363
    %v4397 = vunpack.c.h.b16 %v4363
    %v4398 = vpack.c.b16 %v4386, %v4382
    %v4399 = vpack.c.b16 %v4387, %v4383
    %v4400 = vpack.c.b16 %v4388, %v4384
    %v4401 = vpack.c.b16 %v4389, %v4385
    %v4402 = vpack.c.b16 %v4394, %v4390
    %v4403 = vpack.c.b16 %v4395, %v4391
    %v4404 = vpack.c.b16 %v4396, %v4392
    %v4405 = vpack.c.b16 %v4397, %v4393
    %v4415 = vsel %vm259, %v4355, 0
    %4417 = vmatpush.bf16.msra.mxu0 0
    %4418 = vmatpush.bf16.msra.mxu0 0
    %4419 = vmatpush.bf16.msra.mxu0 0
    %4420 = vmatpush.bf16.msra.mxu0 0
    %4421 = vmatpush.bf16.msra.mxu0 0
    %4422 = vmatpush.bf16.msra.mxu0 0
    %4423 = vmatpush.bf16.msra.mxu0 %v4402
    %4424 = vmatpush.bf16.msra.mxu0 %v4398
    %4425 = vmatmul.bf16.gmra.mxu0 %v4415
    %v4426 = vpop.f32.mrf.mxu0
    %v4427 = vadd.f32 %v4366, %v4426
    %v4428 = vpop.f32.mrf.mxu0
    %4429 = vdwg.mxu0
    %4430 = vmatpush.bf16.msra.mxu0 0
    %4431 = vmatpush.bf16.msra.mxu0 0
    %4432 = vmatpush.bf16.msra.mxu0 0
    %4433 = vmatpush.bf16.msra.mxu0 0
    %4434 = vmatpush.bf16.msra.mxu0 0
    %4435 = vmatpush.bf16.msra.mxu0 0
    %4436 = vmatpush.bf16.msra.mxu0 %v4403
    %4437 = vmatpush.bf16.msra.mxu0 %v4399
    %4438 = vmatmul.bf16.gmra.mxu0 %v4415
    %v4439 = vpop.f32.mrf.mxu0
    %v4440 = vadd.f32 %v4367, %v4439
    %v4441 = vpop.f32.mrf.mxu0
    %4442 = vdwg.mxu0
    %4443 = vmatpush.bf16.msra.mxu0 0
    %4444 = vmatpush.bf16.msra.mxu0 0
    %4445 = vmatpush.bf16.msra.mxu0 0
    %4446 = vmatpush.bf16.msra.mxu0 0
    %4447 = vmatpush.bf16.msra.mxu0 0
    %4448 = vmatpush.bf16.msra.mxu0 0
    %4449 = vmatpush.bf16.msra.mxu0 %v4404
    %4450 = vmatpush.bf16.msra.mxu0 %v4400
    %4451 = vmatmul.bf16.gmra.mxu0 %v4415
    %v4452 = vpop.f32.mrf.mxu0
    %v4453 = vadd.f32 %v4368, %v4452
    %v4454 = vpop.f32.mrf.mxu0
    %4455 = vdwg.mxu0
    %4456 = vmatpush.bf16.msra.mxu0 0
    %4457 = vmatpush.bf16.msra.mxu0 0
    %4458 = vmatpush.bf16.msra.mxu0 0
    %4459 = vmatpush.bf16.msra.mxu0 0
    %4460 = vmatpush.bf16.msra.mxu0 0
    %4461 = vmatpush.bf16.msra.mxu0 0
    %4462 = vmatpush.bf16.msra.mxu0 %v4405
    %4463 = vmatpush.bf16.msra.mxu0 %v4401
    %4464 = vmatmul.bf16.gmra.mxu0 %v4415
    %v4465 = vpop.f32.mrf.mxu0
    %v4466 = vadd.f32 %v4369, %v4465
    %v4467 = vpop.f32.mrf.mxu0
    %4468 = vdwg.mxu0
    %v4469 = vmax.f32 %v4427, 0.0
    %v4470 = vmax.f32 %v4440, 0.0
    %v4471 = vmax.f32 %v4453, 0.0
    %v4472 = vmax.f32 %v4466, 0.0
    %v4473 = vpack.c.bf16 %v4469, %v4469
    %v4474 = vpack.c.bf16 %v4470, %v4470
    %v4475 = vpack.c.bf16 %v4471, %v4471
    %v4476 = vpack.c.bf16 %v4472, %v4472
    %v4477 = vld [vmem:[%s17] sm:$0xff]
    %v4478 = vld [vmem:[%s17 + $0x8] sm:$0xff]
    %v4479 = vld [vmem:[%s17 + $0x10] sm:$0xff]
    %v4480 = vld [vmem:[%s17 + $0x18] sm:$0xff]
    %v4481 = vld [vmem:[%s17 + $0x20] sm:$0xff]
    %v4482 = vld [vmem:[%s17 + $0x28] sm:$0xff]
    %v4483 = vld [vmem:[%s17 + $0x30] sm:$0xff]
    %v4484 = vld [vmem:[%s17 + $0x38] sm:$0xff]
    %v4485 = vld [vmem:[%s17 + $0x40] sm:$0xff]
    %v4486 = vld [vmem:[%s17 + $0x48] sm:$0xff]
    %v4487 = vld [vmem:[%s17 + $0x50] sm:$0xff]
    %v4488 = vld [vmem:[%s17 + $0x58] sm:$0xff]
    %v4489 = vld [vmem:[%s17 + $0x60] sm:$0xff]
    %v4490 = vld [vmem:[%s17 + $0x68] sm:$0xff]
    %v4491 = vld [vmem:[%s17 + $0x70] sm:$0xff]
    %v4492 = vld [vmem:[%s17 + $0x78] sm:$0xff]
    %v4493 = vld [vmem:[%s17 + $0x80] sm:$0xff]
    %v4494 = vld [vmem:[%s17 + $0x88] sm:$0xff]
    %v4495 = vld [vmem:[%s17 + $0x90] sm:$0xff]
    %v4496 = vld [vmem:[%s17 + $0x98] sm:$0xff]
    %v4497 = vld [vmem:[%s17 + $0xa0] sm:$0xff]
    %v4498 = vld [vmem:[%s17 + $0xa8] sm:$0xff]
    %v4499 = vld [vmem:[%s17 + $0xb0] sm:$0xff]
    %v4500 = vld [vmem:[%s17 + $0xb8] sm:$0xff]
    %v4501 = vld [vmem:[%s17 + $0xc0] sm:$0xff]
    %v4502 = vld [vmem:[%s17 + $0xc8] sm:$0xff]
    %v4503 = vld [vmem:[%s17 + $0xd0] sm:$0xff]
    %v4504 = vld [vmem:[%s17 + $0xd8] sm:$0xff]
    %v4505 = vld [vmem:[%s17 + $0xe0] sm:$0xff]
    %v4506 = vld [vmem:[%s17 + $0xe8] sm:$0xff]
    %v4507 = vld [vmem:[%s17 + $0xf0] sm:$0xff]
    %v4508 = vld [vmem:[%s17 + $0xf8] sm:$0xff]
    %v4509 = vld [vmem:[%s17 + $0x100] sm:$0xff]
    %v4510 = vld [vmem:[%s17 + $0x108] sm:$0xff]
    %v4511 = vld [vmem:[%s17 + $0x110] sm:$0xff]
    %v4512 = vld [vmem:[%s17 + $0x118] sm:$0xff]
    %v4513 = vld [vmem:[%s17 + $0x120] sm:$0xff]
    %v4514 = vld [vmem:[%s17 + $0x128] sm:$0xff]
    %v4515 = vld [vmem:[%s17 + $0x130] sm:$0xff]
    %v4516 = vld [vmem:[%s17 + $0x138] sm:$0xff]
    %v4517 = vld [vmem:[%s17 + $0x140] sm:$0xff]
    %v4518 = vld [vmem:[%s17 + $0x148] sm:$0xff]
    %v4519 = vld [vmem:[%s17 + $0x150] sm:$0xff]
    %v4520 = vld [vmem:[%s17 + $0x158] sm:$0xff]
    %v4521 = vld [vmem:[%s17 + $0x160] sm:$0xff]
    %v4522 = vld [vmem:[%s17 + $0x168] sm:$0xff]
    %v4523 = vld [vmem:[%s17 + $0x170] sm:$0xff]
    %v4524 = vld [vmem:[%s17 + $0x178] sm:$0xff]
    %v4525 = vld [vmem:[%s17 + $0x180] sm:$0xff]
    %v4526 = vld [vmem:[%s17 + $0x188] sm:$0xff]
    %v4527 = vld [vmem:[%s17 + $0x190] sm:$0xff]
    %v4528 = vld [vmem:[%s17 + $0x198] sm:$0xff]
    %v4529 = vld [vmem:[%s17 + $0x1a0] sm:$0xff]
    %v4530 = vld [vmem:[%s17 + $0x1a8] sm:$0xff]
    %v4531 = vld [vmem:[%s17 + $0x1b0] sm:$0xff]
    %v4532 = vld [vmem:[%s17 + $0x1b8] sm:$0xff]
    %v4533 = vld [vmem:[%s17 + $0x1c0] sm:$0xff]
    %v4534 = vld [vmem:[%s17 + $0x1c8] sm:$0xff]
    %v4535 = vld [vmem:[%s17 + $0x1d0] sm:$0xff]
    %v4536 = vld [vmem:[%s17 + $0x1d8] sm:$0xff]
    %v4537 = vld [vmem:[%s17 + $0x1e0] sm:$0xff]
    %v4538 = vld [vmem:[%s17 + $0x1e8] sm:$0xff]
    %v4539 = vld [vmem:[%s17 + $0x1f0] sm:$0xff]
    %v4540 = vld [vmem:[%s17 + $0x1f8] sm:$0xff]
    %v4541 = vld [vmem:[%s18] sm:$0x3]
    %v4543 = vperm.slane %v4541, 0
    %v4544 = vperm.slane %v4541, 1
    %v4611 = vunpack.c.l.b16 %v4477
    %v4612 = vunpack.c.h.b16 %v4477
    %v4613 = vunpack.c.l.b16 %v4478
    %v4614 = vunpack.c.h.b16 %v4478
    %v4615 = vunpack.c.l.b16 %v4479
    %v4616 = vunpack.c.h.b16 %v4479
    %v4617 = vunpack.c.l.b16 %v4480
    %v4618 = vunpack.c.h.b16 %v4480
    %v4619 = vunpack.c.l.b16 %v4481
    %v4620 = vunpack.c.h.b16 %v4481
    %v4621 = vunpack.c.l.b16 %v4482
    %v4622 = vunpack.c.h.b16 %v4482
    %v4623 = vunpack.c.l.b16 %v4483
    %v4624 = vunpack.c.h.b16 %v4483
    %v4625 = vunpack.c.l.b16 %v4484
    %v4626 = vunpack.c.h.b16 %v4484
    %v4627 = vunpack.c.l.b16 %v4485
    %v4628 = vunpack.c.h.b16 %v4485
    %v4629 = vunpack.c.l.b16 %v4486
    %v4630 = vunpack.c.h.b16 %v4486
    %v4631 = vunpack.c.l.b16 %v4487
    %v4632 = vunpack.c.h.b16 %v4487
    %v4633 = vunpack.c.l.b16 %v4488
    %v4634 = vunpack.c.h.b16 %v4488
    %v4635 = vunpack.c.l.b16 %v4489
    %v4636 = vunpack.c.h.b16 %v4489
    %v4637 = vunpack.c.l.b16 %v4490
    %v4638 = vunpack.c.h.b16 %v4490
    %v4639 = vunpack.c.l.b16 %v4491
    %v4640 = vunpack.c.h.b16 %v4491
    %v4641 = vunpack.c.l.b16 %v4492
    %v4642 = vunpack.c.h.b16 %v4492
    %v4643 = vunpack.c.l.b16 %v4493
    %v4644 = vunpack.c.h.b16 %v4493
    %v4645 = vunpack.c.l.b16 %v4494
    %v4646 = vunpack.c.h.b16 %v4494
    %v4647 = vunpack.c.l.b16 %v4495
    %v4648 = vunpack.c.h.b16 %v4495
    %v4649 = vunpack.c.l.b16 %v4496
    %v4650 = vunpack.c.h.b16 %v4496
    %v4651 = vunpack.c.l.b16 %v4497
    %v4652 = vunpack.c.h.b16 %v4497
    %v4653 = vunpack.c.l.b16 %v4498
    %v4654 = vunpack.c.h.b16 %v4498
    %v4655 = vunpack.c.l.b16 %v4499
    %v4656 = vunpack.c.h.b16 %v4499
    %v4657 = vunpack.c.l.b16 %v4500
    %v4658 = vunpack.c.h.b16 %v4500
    %v4659 = vunpack.c.l.b16 %v4501
    %v4660 = vunpack.c.h.b16 %v4501
    %v4661 = vunpack.c.l.b16 %v4502
    %v4662 = vunpack.c.h.b16 %v4502
    %v4663 = vunpack.c.l.b16 %v4503
    %v4664 = vunpack.c.h.b16 %v4503
    %v4665 = vunpack.c.l.b16 %v4504
    %v4666 = vunpack.c.h.b16 %v4504
    %v4667 = vunpack.c.l.b16 %v4505
    %v4668 = vunpack.c.h.b16 %v4505
    %v4669 = vunpack.c.l.b16 %v4506
    %v4670 = vunpack.c.h.b16 %v4506
    %v4671 = vunpack.c.l.b16 %v4507
    %v4672 = vunpack.c.h.b16 %v4507
    %v4673 = vunpack.c.l.b16 %v4508
    %v4674 = vunpack.c.h.b16 %v4508
    %v4675 = vunpack.c.l.b16 %v4509
    %v4676 = vunpack.c.h.b16 %v4509
    %v4677 = vunpack.c.l.b16 %v4510
    %v4678 = vunpack.c.h.b16 %v4510
    %v4679 = vunpack.c.l.b16 %v4511
    %v4680 = vunpack.c.h.b16 %v4511
    %v4681 = vunpack.c.l.b16 %v4512
    %v4682 = vunpack.c.h.b16 %v4512
    %v4683 = vunpack.c.l.b16 %v4513
    %v4684 = vunpack.c.h.b16 %v4513
    %v4685 = vunpack.c.l.b16 %v4514
    %v4686 = vunpack.c.h.b16 %v4514
    %v4687 = vunpack.c.l.b16 %v4515
    %v4688 = vunpack.c.h.b16 %v4515
    %v4689 = vunpack.c.l.b16 %v4516
    %v4690 = vunpack.c.h.b16 %v4516
    %v4691 = vunpack.c.l.b16 %v4517
    %v4692 = vunpack.c.h.b16 %v4517
    %v4693 = vunpack.c.l.b16 %v4518
    %v4694 = vunpack.c.h.b16 %v4518
    %v4695 = vunpack.c.l.b16 %v4519
    %v4696 = vunpack.c.h.b16 %v4519
    %v4697 = vunpack.c.l.b16 %v4520
    %v4698 = vunpack.c.h.b16 %v4520
    %v4699 = vunpack.c.l.b16 %v4521
    %v4700 = vunpack.c.h.b16 %v4521
    %v4701 = vunpack.c.l.b16 %v4522
    %v4702 = vunpack.c.h.b16 %v4522
    %v4703 = vunpack.c.l.b16 %v4523
    %v4704 = vunpack.c.h.b16 %v4523
    %v4705 = vunpack.c.l.b16 %v4524
    %v4706 = vunpack.c.h.b16 %v4524
    %v4707 = vunpack.c.l.b16 %v4525
    %v4708 = vunpack.c.h.b16 %v4525
    %v4709 = vunpack.c.l.b16 %v4526
    %v4710 = vunpack.c.h.b16 %v4526
    %v4711 = vunpack.c.l.b16 %v4527
    %v4712 = vunpack.c.h.b16 %v4527
    %v4713 = vunpack.c.l.b16 %v4528
    %v4714 = vunpack.c.h.b16 %v4528
    %v4715 = vunpack.c.l.b16 %v4529
    %v4716 = vunpack.c.h.b16 %v4529
    %v4717 = vunpack.c.l.b16 %v4530
    %v4718 = vunpack.c.h.b16 %v4530
    %v4719 = vunpack.c.l.b16 %v4531
    %v4720 = vunpack.c.h.b16 %v4531
    %v4721 = vunpack.c.l.b16 %v4532
    %v4722 = vunpack.c.h.b16 %v4532
    %v4723 = vunpack.c.l.b16 %v4533
    %v4724 = vunpack.c.h.b16 %v4533
    %v4725 = vunpack.c.l.b16 %v4534
    %v4726 = vunpack.c.h.b16 %v4534
    %v4727 = vunpack.c.l.b16 %v4535
    %v4728 = vunpack.c.h.b16 %v4535
    %v4729 = vunpack.c.l.b16 %v4536
    %v4730 = vunpack.c.h.b16 %v4536
    %v4731 = vunpack.c.l.b16 %v4537
    %v4732 = vunpack.c.h.b16 %v4537
    %v4733 = vunpack.c.l.b16 %v4538
    %v4734 = vunpack.c.h.b16 %v4538
    %v4735 = vunpack.c.l.b16 %v4539
    %v4736 = vunpack.c.h.b16 %v4539
    %v4737 = vunpack.c.l.b16 %v4540
    %v4738 = vunpack.c.h.b16 %v4540
    %v4739 = vpack.c.b16 %v4613, %v4611
    %v4740 = vpack.c.b16 %v4614, %v4612
    %v4741 = vpack.c.b16 %v4617, %v4615
    %v4742 = vpack.c.b16 %v4618, %v4616
    %v4743 = vpack.c.b16 %v4621, %v4619
    %v4744 = vpack.c.b16 %v4622, %v4620
    %v4745 = vpack.c.b16 %v4625, %v4623
    %v4746 = vpack.c.b16 %v4626, %v4624
    %v4747 = vpack.c.b16 %v4629, %v4627
    %v4748 = vpack.c.b16 %v4630, %v4628
    %v4749 = vpack.c.b16 %v4633, %v4631
    %v4750 = vpack.c.b16 %v4634, %v4632
    %v4751 = vpack.c.b16 %v4637, %v4635
    %v4752 = vpack.c.b16 %v4638, %v4636
    %v4753 = vpack.c.b16 %v4641, %v4639
    %v4754 = vpack.c.b16 %v4642, %v4640
    %v4755 = vpack.c.b16 %v4645, %v4643
    %v4756 = vpack.c.b16 %v4646, %v4644
    %v4757 = vpack.c.b16 %v4649, %v4647
    %v4758 = vpack.c.b16 %v4650, %v4648
    %v4759 = vpack.c.b16 %v4653, %v4651
    %v4760 = vpack.c.b16 %v4654, %v4652
    %v4761 = vpack.c.b16 %v4657, %v4655
    %v4762 = vpack.c.b16 %v4658, %v4656
    %v4763 = vpack.c.b16 %v4661, %v4659
    %v4764 = vpack.c.b16 %v4662, %v4660
    %v4765 = vpack.c.b16 %v4665, %v4663
    %v4766 = vpack.c.b16 %v4666, %v4664
    %v4767 = vpack.c.b16 %v4669, %v4667
    %v4768 = vpack.c.b16 %v4670, %v4668
    %v4769 = vpack.c.b16 %v4673, %v4671
    %v4770 = vpack.c.b16 %v4674, %v4672
    %v4771 = vpack.c.b16 %v4677, %v4675
    %v4772 = vpack.c.b16 %v4678, %v4676
    %v4773 = vpack.c.b16 %v4681, %v4679
    %v4774 = vpack.c.b16 %v4682, %v4680
    %v4775 = vpack.c.b16 %v4685, %v4683
    %v4776 = vpack.c.b16 %v4686, %v4684
    %v4777 = vpack.c.b16 %v4689, %v4687
    %v4778 = vpack.c.b16 %v4690, %v4688
    %v4779 = vpack.c.b16 %v4693, %v4691
    %v4780 = vpack.c.b16 %v4694, %v4692
    %v4781 = vpack.c.b16 %v4697, %v4695
    %v4782 = vpack.c.b16 %v4698, %v4696
    %v4783 = vpack.c.b16 %v4701, %v4699
    %v4784 = vpack.c.b16 %v4702, %v4700
    %v4785 = vpack.c.b16 %v4705, %v4703
    %v4786 = vpack.c.b16 %v4706, %v4704
    %v4787 = vpack.c.b16 %v4709, %v4707
    %v4788 = vpack.c.b16 %v4710, %v4708
    %v4789 = vpack.c.b16 %v4713, %v4711
    %v4790 = vpack.c.b16 %v4714, %v4712
    %v4791 = vpack.c.b16 %v4717, %v4715
    %v4792 = vpack.c.b16 %v4718, %v4716
    %v4793 = vpack.c.b16 %v4721, %v4719
    %v4794 = vpack.c.b16 %v4722, %v4720
    %v4795 = vpack.c.b16 %v4725, %v4723
    %v4796 = vpack.c.b16 %v4726, %v4724
    %v4797 = vpack.c.b16 %v4729, %v4727
    %v4798 = vpack.c.b16 %v4730, %v4728
    %v4799 = vpack.c.b16 %v4733, %v4731
    %v4800 = vpack.c.b16 %v4734, %v4732
    %v4801 = vpack.c.b16 %v4737, %v4735
    %v4802 = vpack.c.b16 %v4738, %v4736
    %4867 = vmatpush.bf16.msra.mxu0 %v4753
    %4868 = vmatpush.bf16.msra.mxu0 %v4751
    %4869 = vmatpush.bf16.msra.mxu0 %v4749
    %4870 = vmatpush.bf16.msra.mxu0 %v4747
    %4871 = vmatpush.bf16.msra.mxu0 %v4745
    %4872 = vmatpush.bf16.msra.mxu0 %v4743
    %4873 = vmatpush.bf16.msra.mxu0 %v4741
    %4874 = vmatpush.bf16.msra.mxu0 %v4739
    %4875 = vmatmul.bf16.gmra.mxu0 %v4473
    %v4876 = vpop.f32.mrf.mxu0
    %v4877 = vadd.f32 %v4543, %v4876
    %v4878 = vpop.f32.mrf.mxu0
    %4879 = vdwg.mxu0
    %4880 = vmatpush.bf16.msra.mxu0 %v4769
    %4881 = vmatpush.bf16.msra.mxu0 %v4767
    %4882 = vmatpush.bf16.msra.mxu0 %v4765
    %4883 = vmatpush.bf16.msra.mxu0 %v4763
    %4884 = vmatpush.bf16.msra.mxu0 %v4761
    %4885 = vmatpush.bf16.msra.mxu0 %v4759
    %4886 = vmatpush.bf16.msra.mxu0 %v4757
    %4887 = vmatpush.bf16.msra.mxu0 %v4755
    %4888 = vmatmul.bf16.gmra.mxu0 %v4474
    %v4889 = vpop.f32.mrf.mxu0
    %v4890 = vadd.f32 %v4877, %v4889
    %v4891 = vpop.f32.mrf.mxu0
    %4892 = vdwg.mxu0
    %4893 = vmatpush.bf16.msra.mxu0 %v4785
    %4894 = vmatpush.bf16.msra.mxu0 %v4783
    %4895 = vmatpush.bf16.msra.mxu0 %v4781
    %4896 = vmatpush.bf16.msra.mxu0 %v4779
    %4897 = vmatpush.bf16.msra.mxu0 %v4777
    %4898 = vmatpush.bf16.msra.mxu0 %v4775
    %4899 = vmatpush.bf16.msra.mxu0 %v4773
    %4900 = vmatpush.bf16.msra.mxu0 %v4771
    %4901 = vmatmul.bf16.gmra.mxu0 %v4475
    %v4902 = vpop.f32.mrf.mxu0
    %v4903 = vadd.f32 %v4890, %v4902
    %v4904 = vpop.f32.mrf.mxu0
    %4905 = vdwg.mxu0
    %4906 = vmatpush.bf16.msra.mxu0 %v4801
    %4907 = vmatpush.bf16.msra.mxu0 %v4799
    %4908 = vmatpush.bf16.msra.mxu0 %v4797
    %4909 = vmatpush.bf16.msra.mxu0 %v4795
    %4910 = vmatpush.bf16.msra.mxu0 %v4793
    %4911 = vmatpush.bf16.msra.mxu0 %v4791
    %4912 = vmatpush.bf16.msra.mxu0 %v4789
    %4913 = vmatpush.bf16.msra.mxu0 %v4787
    %4914 = vmatmul.bf16.gmra.mxu0 %v4476
    %v4915 = vpop.f32.mrf.mxu0
    %v4916 = vadd.f32 %v4903, %v4915
    %v4917 = vpop.f32.mrf.mxu0
    %4918 = vdwg.mxu0
    %4919 = vmatpush.bf16.msra.mxu0 %v4754
    %4920 = vmatpush.bf16.msra.mxu0 %v4752
    %4921 = vmatpush.bf16.msra.mxu0 %v4750
    %4922 = vmatpush.bf16.msra.mxu0 %v4748
    %4923 = vmatpush.bf16.msra.mxu0 %v4746
    %4924 = vmatpush.bf16.msra.mxu0 %v4744
    %4925 = vmatpush.bf16.msra.mxu0 %v4742
    %4926 = vmatpush.bf16.msra.mxu0 %v4740
    %4927 = vmatmul.bf16.gmra.mxu0 %v4473
    %v4928 = vpop.f32.mrf.mxu0
    %v4929 = vadd.f32 %v4544, %v4928
    %v4930 = vpop.f32.mrf.mxu0
    %4931 = vdwg.mxu0
    %4932 = vmatpush.bf16.msra.mxu0 %v4770
    %4933 = vmatpush.bf16.msra.mxu0 %v4768
    %4934 = vmatpush.bf16.msra.mxu0 %v4766
    %4935 = vmatpush.bf16.msra.mxu0 %v4764
    %4936 = vmatpush.bf16.msra.mxu0 %v4762
    %4937 = vmatpush.bf16.msra.mxu0 %v4760
    %4938 = vmatpush.bf16.msra.mxu0 %v4758
    %4939 = vmatpush.bf16.msra.mxu0 %v4756
    %4940 = vmatmul.bf16.gmra.mxu0 %v4474
    %v4941 = vpop.f32.mrf.mxu0
    %v4942 = vadd.f32 %v4929, %v4941
    %v4943 = vpop.f32.mrf.mxu0
    %4944 = vdwg.mxu0
    %4945 = vmatpush.bf16.msra.mxu0 %v4786
    %4946 = vmatpush.bf16.msra.mxu0 %v4784
    %4947 = vmatpush.bf16.msra.mxu0 %v4782
    %4948 = vmatpush.bf16.msra.mxu0 %v4780
    %4949 = vmatpush.bf16.msra.mxu0 %v4778
    %4950 = vmatpush.bf16.msra.mxu0 %v4776
    %4951 = vmatpush.bf16.msra.mxu0 %v4774
    %4952 = vmatpush.bf16.msra.mxu0 %v4772
    %4953 = vmatmul.bf16.gmra.mxu0 %v4475
    %v4954 = vpop.f32.mrf.mxu0
    %v4955 = vadd.f32 %v4942, %v4954
    %v4956 = vpop.f32.mrf.mxu0
    %4957 = vdwg.mxu0
    %4958 = vmatpush.bf16.msra.mxu0 %v4802
    %4959 = vmatpush.bf16.msra.mxu0 %v4800
    %4960 = vmatpush.bf16.msra.mxu0 %v4798
    %4961 = vmatpush.bf16.msra.mxu0 %v4796
    %4962 = vmatpush.bf16.msra.mxu0 %v4794
    %4963 = vmatpush.bf16.msra.mxu0 %v4792
    %4964 = vmatpush.bf16.msra.mxu0 %v4790
    %4965 = vmatpush.bf16.msra.mxu0 %v4788
    %4966 = vmatmul.bf16.gmra.mxu0 %v4476
    %v4967 = vpop.f32.mrf.mxu0
    %v4968 = vadd.f32 %v4955, %v4967
    %v4969 = vpop.f32.mrf.mxu0
    %4970 = vdwg.mxu0
    %v4971 = vxor.u32 %v4916, 2147483648
    %v4972 = vxor.u32 %v4968, 2147483648
    %v4973 = vmul.f32 %v4971, 1.442695
    %v4974 = vpow.pop %v4973
    %v4975 = vmul.f32 %v4972, 1.442695
    %v4976 = vpow.pop %v4975
    %v4977 = vadd.f32 %v4974, 1.0
    %v4978 = vadd.f32 %v4976, 1.0
    %v4979 = vrcp.pop %v4977
    %v4980 = vmul.f32 %v4977, %v4979
    %v4981 = vsub.f32 1.0, %v4980
    %v4982 = vmul.f32 %v4979, %v4981
    %v4983 = vadd.f32 %v4979, %v4982
    %vm4984 = vweird.f32 %v4977
    %vm4985 = vweird.f32 %v4979
    %vm4986 = vmor %vm4984, %vm4985
    %v4987 = vsel %vm4986, %v4979, %v4983
    %v4988 = vand.u32 2147483647, %v4977
    %vm4989 = vcmp.eq.f32.partialorder %v4988, 8.507059e+37
    %v4990 = vand.u32 %v4977, 2147483648
    %v4991 = vor.u32 1.1754944e-38, %v4990
    %v4992 = vsel %vm4989, %v4991, %v4987
    %v4993 = vmul.f32 1.0, %v4992
    %v4994 = vrcp.pop %v4978
    %v4995 = vmul.f32 %v4978, %v4994
    %v4996 = vsub.f32 1.0, %v4995
    %v4997 = vmul.f32 %v4994, %v4996
    %v4998 = vadd.f32 %v4994, %v4997
    %vm4999 = vweird.f32 %v4978
    %vm5000 = vweird.f32 %v4994
    %vm5001 = vmor %vm4999, %vm5000
    %v5002 = vsel %vm5001, %v4994, %v4998
    %v5003 = vand.u32 2147483647, %v4978
    %vm5004 = vcmp.eq.f32.partialorder %v5003, 8.507059e+37
    %v5005 = vand.u32 %v4978, 2147483648
    %v5006 = vor.u32 1.1754944e-38, %v5005
    %v5007 = vsel %vm5004, %v5006, %v5002
    %v5008 = vmul.f32 1.0, %v5007
    %v5011 = vrot.slane %v5008, 6
    %vm5012 = vcmask 1041408
    %v5013 = vsel %vm5012, %v4993, %v5011
    %5015 = vst [vmem:[#allocation22] sm:$0xf] %v5013
    // Predicated region
    $region126: #{_lambda_.1} parent=1 // pred_check
      _
    $region127: #{_lambda_.1} parent=1 // pred_check_branch
      %5017 = sbr.rel (0) target = $region129
    $region128: #{_lambda_.1} parent=1 // pred_region
      %5019 = vsyncadd [#allocation4], 0
      %s5021 = sshll.u32 [#allocation22], 4
      %s5022 = int_to_ptr.vmem [resolvable:$true] %s5021
      %s5023 = sshll.u32 %s19, 4
      %s5024 = int_to_ptr.hbm [resolvable:$true] %s5023
      %5026 = dma.vmem_to_hbm [thread:$0]  %s5022, 64, %s5024, [#allocation4]
    $region129: #{_lambda_.1} parent=1 // pred_fallthru
      _
    // Predicated region
    $region130: #{_lambda_.1} parent=1 // pred_check
      _
    $region131: #{_lambda_.1} parent=1 // pred_check_branch
      %5028 = sbr.rel (0) target = $region133
    $region132: #{_lambda_.1} parent=1 // pred_region
      %5030 = dma.done [#allocation4], 64
    $region133: #{_lambda_.1} parent=1 // pred_fallthru
      _
    %5031 = vsyncpa [#allocation3], 1
    %5032 = vsyncpa [#allocation6], 1
    %5033 = vsyncpa [#allocation9], 1
    %5034 = vsyncpa [#allocation12], 1
    %5035 = vsyncpa [#allocation15], 1
    %5036 = vsyncpa [#allocation18], 1
    %5037 = vsyncpa [#allocation21], 1
    %5038 = vsyncpa [#allocation4], 1

</llo_original>
